<compile_context>
chip_gen: v7x
topology: tpu7x:2x2x1
jax: 0.10.0
libtpu: 0.0.40
codegen_flags: <defaults>
</compile_context>

<pallas_src>
import jax
import jax.numpy as jnp
from jax.experimental import pallas as pl
from jax.experimental.pallas import tpu as pltpu


F_IN = 93
F_OUT = 9
F_OUT_PAD = 128   # 9 -> 128: lane-dense (unmasked) output stores


def mlp_kernel(x_ref,
               w1_ref, b1_ref,
               w2_ref, b2_ref,
               w3_ref, b3_ref,
               w4_ref, b4_ref,
               w5_ref, b5_ref,
               o_ref):
    # Whole hot path (5 matmuls + bias adds + 4 ReLUs) fused in one kernel.
    # Matmul inputs are bf16 (MXU fast path on v5e/v6e/v7x); accumulation,
    # bias add and ReLU stay in f32 (safe on v5e's f32-only VPU). The
    # f32 -> bf16 casts are VPU filler hidden under the MXU.
    h = jnp.dot(x_ref[...].astype(jnp.bfloat16), w1_ref[...],
                preferred_element_type=jnp.float32) + b1_ref[...]
    h = jnp.maximum(h, 0.0)

    h = jnp.dot(h.astype(jnp.bfloat16), w2_ref[...],
                preferred_element_type=jnp.float32) + b2_ref[...]
    h = jnp.maximum(h, 0.0)

    h = jnp.dot(h.astype(jnp.bfloat16), w3_ref[...],
                preferred_element_type=jnp.float32) + b3_ref[...]
    h = jnp.maximum(h, 0.0)

    h = jnp.dot(h.astype(jnp.bfloat16), w4_ref[...],
                preferred_element_type=jnp.float32) + b4_ref[...]
    h = jnp.maximum(h, 0.0)

    out = jnp.dot(h.astype(jnp.bfloat16), w5_ref[...],
                  preferred_element_type=jnp.float32) + b5_ref[...]
    o_ref[...] = out.astype(o_ref.dtype)


def _round_up(x, m):
    return ((x + m - 1) // m) * m


def _tensorcores_per_chip():
    """2 TensorCores on v7x (megacore sharding via dimension_semantics); 1 on v5e/v6e."""
    try:
        kind = jax.devices()[0].device_kind.lower()
    except Exception:
        return 1
    return 2 if ("v7" in kind or "7x" in kind) else 1


def _choose_batch_tile(B, tb_max, num_cores):
    """Batch tile as large as possible (MXU fill, step-overhead amortization);
    2-way split / even-grid balancing only when there are 2 TensorCores."""
    b8 = _round_up(max(B, 8), 8)
    tb = min(_round_up(tb_max, 8), b8)
    if num_cores >= 2:
        grid = pl.cdiv(b8, tb)
        if grid == 1 and b8 >= 16:
            # Split so both TCs get work.
            tb = _round_up(pl.cdiv(b8, 2), 8)
        elif grid > 1 and grid % 2 == 1:
            # Shrink the tile so the grid length is even (balanced megacore).
            tb = _round_up(pl.cdiv(b8, grid + 1), 8)
    grid = pl.cdiv(B, tb)
    return tb, grid


def prepare_params(params):
    """Weights -> bf16 in (in, out) layout; biases -> f32 (1, out) rows.
    Only the last layer is padded 9 -> 128 output columns."""
    n = len(params)
    prepared = []
    for idx, (w, b) in enumerate(params):
        w = jnp.asarray(w, jnp.float32)
        b = jnp.asarray(b, jnp.float32).reshape(1, -1)
        if idx == n - 1:
            w = jnp.pad(w, ((0, 0), (0, F_OUT_PAD - w.shape[1])))
            b = jnp.pad(b, ((0, 0), (0, F_OUT_PAD - b.shape[1])))
        prepared.append((w.astype(jnp.bfloat16), b))
    return prepared


def net_forward(x, params, *, tb=1024):
    """x: (B, 93) float32. params: list of (W, b) with W=(in,out) f32, b=(out,) f32."""
    B = x.shape[0]
    assert x.shape[1] == F_IN
    prepared = prepare_params(params)

    num_cores = _tensorcores_per_chip()
    tb, grid_b = _choose_batch_tile(B, tb, num_cores)

    weight_specs = []
    flat_params = []
    for (w, b) in prepared:
        # Full-array blocks with constant index_maps: the ~1.7 MiB bf16 weight
        # set stays resident in VMEM across the whole batch grid (no re-DMA).
        weight_specs.append(pl.BlockSpec(w.shape, lambda i: (0, 0)))
        weight_specs.append(pl.BlockSpec(b.shape, lambda i: (0, 0)))
        flat_params.extend([w, b])

    # x is consumed as-is (f32, 93 features == full last dim): no wrapper-side
    # pad/cast HBM round-trip. A final partial batch tile (B % tb != 0) uses
    # Pallas' block-boundary padding/clipping; the MLP has no cross-row
    # reduction, so padded rows compute garbage that is never stored.
    in_specs = [pl.BlockSpec((tb, F_IN), lambda i: (i, 0))] + weight_specs
    out_spec = pl.BlockSpec((tb, F_OUT_PAD), lambda i: (i, 0))

    out = pl.pallas_call(
        mlp_kernel,
        out_shape=jax.ShapeDtypeStruct((B, F_OUT_PAD), jnp.bfloat16),
        grid_spec=pltpu.PrefetchScalarGridSpec(
            num_scalar_prefetch=0,
            grid=(grid_b,),
            in_specs=in_specs,
            out_specs=out_spec,
        ),
        compiler_params=pltpu.CompilerParams(
            dimension_semantics=("parallel",),
            vmem_limit_bytes=48 * 1024 * 1024,
        ),
    )(x.astype(jnp.float32), *flat_params)

    return out[:B, :F_OUT].astype(jnp.float32)


def init_params(key):
    """Deterministic init mimicking torch.nn.Linear's U(-1/sqrt(fan_in), 1/sqrt(fan_in))."""
    dims = [(93, 512), (512, 512), (512, 512), (512, 512), (512, 9)]
    params = []
    for (fan_in, fan_out) in dims:
        key, kw, kb = jax.random.split(key, 3)
        bound = 1.0 / jnp.sqrt(jnp.float32(fan_in))
        w = jax.random.uniform(kw, (fan_in, fan_out), jnp.float32, -bound, bound)
        b = jax.random.uniform(kb, (fan_out,), jnp.float32, -bound, bound)
        params.append((w, b))
    return params


def reference_forward_f32(x, params):
    h = x
    for i, (w, b) in enumerate(params):
        h = h @ w + b[None, :]
        if i < len(params) - 1:
            h = jnp.maximum(h, 0.0)
    return h


def reference_forward_bf16(x, params):
    """Emulates the kernel numerics: bf16 matmul inputs, f32 accum/bias/ReLU, bf16 output."""
    h = x.astype(jnp.bfloat16)
    out = None
    for i, (w, b) in enumerate(params):
        acc = jnp.dot(h, w.astype(jnp.bfloat16), preferred_element_type=jnp.float32)
        acc = acc + b[None, :].astype(jnp.float32)
        if i < len(params) - 1:
            acc = jnp.maximum(acc, 0.0)
            h = acc.astype(jnp.bfloat16)
        else:
            out = acc.astype(jnp.bfloat16).astype(jnp.float32)
    return out


if __name__ == "__main__":
    key = jax.random.PRNGKey(0)
    key, kx = jax.random.split(key)

    B = 64                      # small demo batch (kernel scales to large B / tb=1024+)
    x = jax.random.normal(kx, (B, F_IN), jnp.float32)

    params = init_params(jax.random.PRNGKey(42))

    out = net_forward(x, params)
    out = jax.block_until_ready(out)
    assert out.shape == (B, F_OUT), out.shape

    # Tight check vs. a reference that emulates the kernel's bf16/f32 numerics.
    ref_bf16 = reference_forward_bf16(x, params)
    assert jnp.allclose(out, ref_bf16, atol=3e-2, rtol=3e-2), "mismatch vs bf16-emulating reference"

    # Loose sanity check vs. the pure-f32 PyTorch-equivalent forward.
    ref_f32 = reference_forward_f32(x, params)
    assert jnp.allclose(out, ref_f32, atol=1.5e-1, rtol=1.5e-1), "mismatch vs f32 reference"

    print("KERNEL_OK")
</pallas_src>

<mosaic_0001>
module attributes {stable_mosaic.version = 11 : i64} {
  func.func @mlp_kernel(%arg0: i32, %arg1: memref<64x93xf32, #tpu.memory_space<vmem>>, %arg2: memref<93x512xbf16, #tpu.memory_space<vmem>>, %arg3: memref<1x512xf32, #tpu.memory_space<vmem>>, %arg4: memref<512x512xbf16, #tpu.memory_space<vmem>>, %arg5: memref<1x512xf32, #tpu.memory_space<vmem>>, %arg6: memref<512x512xbf16, #tpu.memory_space<vmem>>, %arg7: memref<1x512xf32, #tpu.memory_space<vmem>>, %arg8: memref<512x512xbf16, #tpu.memory_space<vmem>>, %arg9: memref<1x512xf32, #tpu.memory_space<vmem>>, %arg10: memref<512x128xbf16, #tpu.memory_space<vmem>>, %arg11: memref<1x128xf32, #tpu.memory_space<vmem>>, %arg12: memref<64x128xbf16, #tpu.memory_space<vmem>>) attributes {dimension_semantics = [#tpu.dimension_semantics<parallel>], iteration_bounds = array<i64: 1>, scalar_prefetch = 0 : i64, scratch_operands = 0 : i64, tpu.core_type = #tpu.core_type<tc>, window_params = [{transform_indices = @transform_0, window_bounds = array<i64: 64, 93>}, {pipeline_mode = #tpu.pipeline_mode<synchronous>, transform_indices = @transform_1, window_bounds = array<i64: 93, 512>}, {pipeline_mode = #tpu.pipeline_mode<synchronous>, transform_indices = @transform_2, window_bounds = array<i64: 1, 512>}, {pipeline_mode = #tpu.pipeline_mode<synchronous>, transform_indices = @transform_3, window_bounds = array<i64: 512, 512>}, {pipeline_mode = #tpu.pipeline_mode<synchronous>, transform_indices = @transform_4, window_bounds = array<i64: 1, 512>}, {pipeline_mode = #tpu.pipeline_mode<synchronous>, transform_indices = @transform_5, window_bounds = array<i64: 512, 512>}, {pipeline_mode = #tpu.pipeline_mode<synchronous>, transform_indices = @transform_6, window_bounds = array<i64: 1, 512>}, {pipeline_mode = #tpu.pipeline_mode<synchronous>, transform_indices = @transform_7, window_bounds = array<i64: 512, 512>}, {pipeline_mode = #tpu.pipeline_mode<synchronous>, transform_indices = @transform_8, window_bounds = array<i64: 1, 512>}, {pipeline_mode = #tpu.pipeline_mode<synchronous>, transform_indices = @transform_9, window_bounds = array<i64: 512, 128>}, {pipeline_mode = #tpu.pipeline_mode<synchronous>, transform_indices = @transform_10, window_bounds = array<i64: 1, 128>}, {transform_indices = @transform_11, window_bounds = array<i64: 64, 128>}]} {
    %c0 = arith.constant 0 : index
    %c0_0 = arith.constant 0 : index
    %0 = vector.load %arg1[%c0, %c0_0] : memref<64x93xf32, #tpu.memory_space<vmem>>, vector<64x93xf32>
    %1 = arith.truncf %0 : vector<64x93xf32> to vector<64x93xbf16>
    %c0_1 = arith.constant 0 : index
    %c0_2 = arith.constant 0 : index
    %2 = vector.load %arg2[%c0_1, %c0_2] : memref<93x512xbf16, #tpu.memory_space<vmem>>, vector<93x512xbf16>
    %cst = arith.constant dense<0.000000e+00> : vector<64x512xf32>
    %3 = tpu.matmul %1, %2, %cst {dimension_numbers = #tpu.dot_dimension_numbers<[1], [0], [0], [1], [0, 0, 1, 1], [], []>} : vector<64x93xbf16>, vector<93x512xbf16>, vector<64x512xf32> -> vector<64x512xf32>
    %c0_3 = arith.constant 0 : index
    %c0_4 = arith.constant 0 : index
    %4 = vector.load %arg3[%c0_3, %c0_4] : memref<1x512xf32, #tpu.memory_space<vmem>>, vector<1x512xf32>
    %5 = vector.broadcast %4 : vector<1x512xf32> to vector<64x512xf32>
    %6 = arith.addf %3, %5 : vector<64x512xf32>
    %cst_5 = arith.constant 0.000000e+00 : f32
    %7 = vector.broadcast %cst_5 : f32 to vector<64x512xf32>
    %8 = arith.maximumf %6, %7 : vector<64x512xf32>
    %9 = arith.truncf %8 : vector<64x512xf32> to vector<64x512xbf16>
    %c0_6 = arith.constant 0 : index
    %c0_7 = arith.constant 0 : index
    %10 = vector.load %arg4[%c0_6, %c0_7] : memref<512x512xbf16, #tpu.memory_space<vmem>>, vector<512x512xbf16>
    %cst_8 = arith.constant dense<0.000000e+00> : vector<64x512xf32>
    %11 = tpu.matmul %9, %10, %cst_8 {dimension_numbers = #tpu.dot_dimension_numbers<[1], [0], [0], [1], [0, 0, 1, 1], [], []>} : vector<64x512xbf16>, vector<512x512xbf16>, vector<64x512xf32> -> vector<64x512xf32>
    %c0_9 = arith.constant 0 : index
    %c0_10 = arith.constant 0 : index
    %12 = vector.load %arg5[%c0_9, %c0_10] : memref<1x512xf32, #tpu.memory_space<vmem>>, vector<1x512xf32>
    %13 = vector.broadcast %12 : vector<1x512xf32> to vector<64x512xf32>
    %14 = arith.addf %11, %13 : vector<64x512xf32>
    %cst_11 = arith.constant 0.000000e+00 : f32
    %15 = vector.broadcast %cst_11 : f32 to vector<64x512xf32>
    %16 = arith.maximumf %14, %15 : vector<64x512xf32>
    %17 = arith.truncf %16 : vector<64x512xf32> to vector<64x512xbf16>
    %c0_12 = arith.constant 0 : index
    %c0_13 = arith.constant 0 : index
    %18 = vector.load %arg6[%c0_12, %c0_13] : memref<512x512xbf16, #tpu.memory_space<vmem>>, vector<512x512xbf16>
    %cst_14 = arith.constant dense<0.000000e+00> : vector<64x512xf32>
    %19 = tpu.matmul %17, %18, %cst_14 {dimension_numbers = #tpu.dot_dimension_numbers<[1], [0], [0], [1], [0, 0, 1, 1], [], []>} : vector<64x512xbf16>, vector<512x512xbf16>, vector<64x512xf32> -> vector<64x512xf32>
    %c0_15 = arith.constant 0 : index
    %c0_16 = arith.constant 0 : index
    %20 = vector.load %arg7[%c0_15, %c0_16] : memref<1x512xf32, #tpu.memory_space<vmem>>, vector<1x512xf32>
    %21 = vector.broadcast %20 : vector<1x512xf32> to vector<64x512xf32>
    %22 = arith.addf %19, %21 : vector<64x512xf32>
    %cst_17 = arith.constant 0.000000e+00 : f32
    %23 = vector.broadcast %cst_17 : f32 to vector<64x512xf32>
    %24 = arith.maximumf %22, %23 : vector<64x512xf32>
    %25 = arith.truncf %24 : vector<64x512xf32> to vector<64x512xbf16>
    %c0_18 = arith.constant 0 : index
    %c0_19 = arith.constant 0 : index
    %26 = vector.load %arg8[%c0_18, %c0_19] : memref<512x512xbf16, #tpu.memory_space<vmem>>, vector<512x512xbf16>
    %cst_20 = arith.constant dense<0.000000e+00> : vector<64x512xf32>
    %27 = tpu.matmul %25, %26, %cst_20 {dimension_numbers = #tpu.dot_dimension_numbers<[1], [0], [0], [1], [0, 0, 1, 1], [], []>} : vector<64x512xbf16>, vector<512x512xbf16>, vector<64x512xf32> -> vector<64x512xf32>
    %c0_21 = arith.constant 0 : index
    %c0_22 = arith.constant 0 : index
    %28 = vector.load %arg9[%c0_21, %c0_22] : memref<1x512xf32, #tpu.memory_space<vmem>>, vector<1x512xf32>
    %29 = vector.broadcast %28 : vector<1x512xf32> to vector<64x512xf32>
    %30 = arith.addf %27, %29 : vector<64x512xf32>
    %cst_23 = arith.constant 0.000000e+00 : f32
    %31 = vector.broadcast %cst_23 : f32 to vector<64x512xf32>
    %32 = arith.maximumf %30, %31 : vector<64x512xf32>
    %33 = arith.truncf %32 : vector<64x512xf32> to vector<64x512xbf16>
    %c0_24 = arith.constant 0 : index
    %c0_25 = arith.constant 0 : index
    %34 = vector.load %arg10[%c0_24, %c0_25] : memref<512x128xbf16, #tpu.memory_space<vmem>>, vector<512x128xbf16>
    %cst_26 = arith.constant dense<0.000000e+00> : vector<64x128xf32>
    %35 = tpu.matmul %33, %34, %cst_26 {dimension_numbers = #tpu.dot_dimension_numbers<[1], [0], [0], [1], [0, 0, 1, 1], [], []>} : vector<64x512xbf16>, vector<512x128xbf16>, vector<64x128xf32> -> vector<64x128xf32>
    %c0_27 = arith.constant 0 : index
    %c0_28 = arith.constant 0 : index
    %36 = vector.load %arg11[%c0_27, %c0_28] : memref<1x128xf32, #tpu.memory_space<vmem>>, vector<1x128xf32>
    %37 = vector.broadcast %36 : vector<1x128xf32> to vector<64x128xf32>
    %38 = arith.addf %35, %37 : vector<64x128xf32>
    %39 = arith.truncf %38 : vector<64x128xf32> to vector<64x128xbf16>
    %c0_29 = arith.constant 0 : index
    %c0_30 = arith.constant 0 : index
    %40 = vector.load %arg12[%c0_29, %c0_30] : memref<64x128xbf16, #tpu.memory_space<vmem>>, vector<64x128xbf16>
    tpu.vector_store %arg12[%c0_29, %c0_30], %39 {strides = array<i32>} : memref<64x128xbf16, #tpu.memory_space<vmem>>, vector<64x128xbf16>,
    return
  }
  func.func @transform_0(%arg0: i32) -> (i32, i32) {
    %c0_i32 = arith.constant 0 : i32
    %c0_i32_0 = arith.constant 0 : i32
    return %arg0, %c0_i32 : i32, i32
  }
  func.func @transform_1(%arg0: i32) -> (i32, i32) {
    %c0_i32 = arith.constant 0 : i32
    %c0_i32_0 = arith.constant 0 : i32
    %c0_i32_1 = arith.constant 0 : i32
    return %c0_i32, %c0_i32_0 : i32, i32
  }
  func.func @transform_2(%arg0: i32) -> (i32, i32) {
    %c0_i32 = arith.constant 0 : i32
    %c0_i32_0 = arith.constant 0 : i32
    %c0_i32_1 = arith.constant 0 : i32
    return %c0_i32, %c0_i32_0 : i32, i32
  }
  func.func @transform_3(%arg0: i32) -> (i32, i32) {
    %c0_i32 = arith.constant 0 : i32
    %c0_i32_0 = arith.constant 0 : i32
    %c0_i32_1 = arith.constant 0 : i32
    return %c0_i32, %c0_i32_0 : i32, i32
  }
  func.func @transform_4(%arg0: i32) -> (i32, i32) {
    %c0_i32 = arith.constant 0 : i32
    %c0_i32_0 = arith.constant 0 : i32
    %c0_i32_1 = arith.constant 0 : i32
    return %c0_i32, %c0_i32_0 : i32, i32
  }
  func.func @transform_5(%arg0: i32) -> (i32, i32) {
    %c0_i32 = arith.constant 0 : i32
    %c0_i32_0 = arith.constant 0 : i32
    %c0_i32_1 = arith.constant 0 : i32
    return %c0_i32, %c0_i32_0 : i32, i32
  }
  func.func @transform_6(%arg0: i32) -> (i32, i32) {
    %c0_i32 = arith.constant 0 : i32
    %c0_i32_0 = arith.constant 0 : i32
    %c0_i32_1 = arith.constant 0 : i32
    return %c0_i32, %c0_i32_0 : i32, i32
  }
  func.func @transform_7(%arg0: i32) -> (i32, i32) {
    %c0_i32 = arith.constant 0 : i32
    %c0_i32_0 = arith.constant 0 : i32
    %c0_i32_1 = arith.constant 0 : i32
    return %c0_i32, %c0_i32_0 : i32, i32
  }
  func.func @transform_8(%arg0: i32) -> (i32, i32) {
    %c0_i32 = arith.constant 0 : i32
    %c0_i32_0 = arith.constant 0 : i32
    %c0_i32_1 = arith.constant 0 : i32
    return %c0_i32, %c0_i32_0 : i32, i32
  }
  func.func @transform_9(%arg0: i32) -> (i32, i32) {
    %c0_i32 = arith.constant 0 : i32
    %c0_i32_0 = arith.constant 0 : i32
    %c0_i32_1 = arith.constant 0 : i32
    return %c0_i32, %c0_i32_0 : i32, i32
  }
  func.func @transform_10(%arg0: i32) -> (i32, i32) {
    %c0_i32 = arith.constant 0 : i32
    %c0_i32_0 = arith.constant 0 : i32
    %c0_i32_1 = arith.constant 0 : i32
    return %c0_i32, %c0_i32_0 : i32, i32
  }
  func.func @transform_11(%arg0: i32) -> (i32, i32) {
    %c0_i32 = arith.constant 0 : i32
    %c0_i32_0 = arith.constant 0 : i32
    return %arg0, %c0_i32 : i32, i32
  }
}

</mosaic_0001>

<llo_original>
// kernel: tpu_custom_call.1
$region0: #{tpu_custom_call.1}
  #allocation0 [shape = 'u32[]', space=smem, size = 0x4, offset = 0x4, fixed_abs, tag = 'smem constant byte address 0x4 - core index']
  #allocation1 [shape = 'u32[144,128]{1,0:T(1,128)}', space=vmem, size = 0x12000, scoped, tag = 'internal scratch']
  %s0 = inlined_call_operand.hbm [shape: f32[64,93], index: 0, kind: input, shape index: {}]
  %s1 = inlined_call_operand.hbm [shape: bf16[93,512], index: 1, kind: input, shape index: {}]
  %s2 = inlined_call_operand.vmem [shape: f32[1,512], index: 2, kind: input, shape index: {}]
  %s3 = inlined_call_operand.hbm [shape: bf16[512,512], index: 3, kind: input, shape index: {}]
  %s4 = inlined_call_operand.vmem [shape: f32[1,512], index: 4, kind: input, shape index: {}]
  %s5 = inlined_call_operand.hbm [shape: bf16[512,512], index: 5, kind: input, shape index: {}]
  %s6 = inlined_call_operand.vmem [shape: f32[1,512], index: 6, kind: input, shape index: {}]
  %s7 = inlined_call_operand.hbm [shape: bf16[512,512], index: 7, kind: input, shape index: {}]
  %s8 = inlined_call_operand.vmem [shape: f32[1,512], index: 8, kind: input, shape index: {}]
  %s9 = inlined_call_operand.hbm [shape: bf16[512,128], index: 9, kind: input, shape index: {}]
  %s10 = inlined_call_operand.vmem [shape: f32[1,128], index: 10, kind: input, shape index: {}]
  %s11 = inlined_call_operand.hbm [shape: bf16[64,128], index: 11, kind: output, shape index: {}]
  %s12 = sld [smem:[#allocation0]]
  $region78: #{tpu_custom_call.1} parent=0
    _
  %s14 = ssub.s32 1, %s12
  %s15 = scalar_select 0, %s14, %s12
  $region1: #{tpu_custom_call.1} parent=0
    #allocation2 [shape = 'u8[32768]{0}', space=vmem, size = 0x8000, scoped, tag = 'input window, operand 0, single buffered']
    #allocation3 [shape = 's32[1]{0}', space=sflag, size = 0x4, scoped, tag = 'scoped memory for tpu_custom_call.1']
    #allocation4 [shape = 's32[1]{0}', space=sflag, size = 0x4, scoped, tag = 'scoped memory for tpu_custom_call.1']
    #allocation5 [shape = 'u8[98304]{0}', space=vmem, size = 0x18000, scoped, tag = 'input window, operand 1, single buffered']
    #allocation6 [shape = 's32[1]{0}', space=sflag, size = 0x4, scoped, tag = 'scoped memory for tpu_custom_call.1']
    #allocation7 [shape = 'u8[524288]{0}', space=vmem, size = 0x80000, scoped, tag = 'input window, operand 3, single buffered']
    #allocation8 [shape = 'u8[524288]{0}', space=vmem, size = 0x80000, scoped, tag = 'input window, operand 5, single buffered']
    #allocation9 [shape = 's32[1]{0}', space=sflag, size = 0x4, scoped, tag = 'scoped memory for tpu_custom_call.1']
    #allocation10 [shape = 'u8[524288]{0}', space=vmem, size = 0x80000, scoped, tag = 'input window, operand 7, single buffered']
    #allocation11 [shape = 'u8[131072]{0}', space=vmem, size = 0x20000, scoped, tag = 'input window, operand 9, single buffered']
    #allocation12 [shape = 's32[1]{0}', space=sflag, size = 0x4, scoped, tag = 'scoped memory for tpu_custom_call.1']
    #allocation13 [shape = 'u8[16384]{0}', space=vmem, size = 0x4000, scoped, tag = 'output window, operand 0, single buffered']
    %16 = vsyncpa [#allocation3], 0
    %17 = vsyncpa [#allocation6], 0
    %18 = vsyncpa [#allocation9], 0
    %19 = vsyncpa [#allocation12], 0
    %20 = vsyncpa [#allocation4], 0
    // Predicated region
    $region2: #{tpu_custom_call.1} parent=1 // pred_check
      _
    $region3: #{tpu_custom_call.1} parent=1 // pred_check_branch
      %22 = sbr.rel (0) target = $region5
    $region4: #{tpu_custom_call.1} parent=1 // pred_region
      %s24 = ssub.s32 1024, 1024
      %25 = vsyncadd [#allocation3], %s24
      %s26 = sshll.u32 [#allocation2], 4
      %s27 = int_to_ptr.vmem [resolvable:$true] %s26
      %32 = dma.hbm_to_vmem [thread:$0]  %s0, 1024, %s27, [#allocation3], 128, 128, 8
    $region5: #{tpu_custom_call.1} parent=1 // pred_fallthru
      _
    // Predicated region
    $region6: #{tpu_custom_call.1} parent=1 // pred_check
      _
    $region7: #{tpu_custom_call.1} parent=1 // pred_check_branch
      %34 = sbr.rel (0) target = $region9
    $region8: #{tpu_custom_call.1} parent=1 // pred_region
      %s36 = ssub.s32 3072, 3072
      %37 = vsyncadd [#allocation6], %s36
      %s38 = sshll.u32 [#allocation5], 4
      %s39 = int_to_ptr.vmem [resolvable:$true] %s38
      %44 = dma.hbm_to_vmem [thread:$0]  %s1, 3072, %s39, [#allocation6], 256, 256, 16
    $region9: #{tpu_custom_call.1} parent=1 // pred_fallthru
      _
    // Predicated region
    $region10: #{tpu_custom_call.1} parent=1 // pred_check
      _
    $region11: #{tpu_custom_call.1} parent=1 // pred_check_branch
      %46 = sbr.rel (0) target = $region13
    $region12: #{tpu_custom_call.1} parent=1 // pred_region
      _
    $region13: #{tpu_custom_call.1} parent=1 // pred_fallthru
      _
    // Predicated region
    $region14: #{tpu_custom_call.1} parent=1 // pred_check
      _
    $region15: #{tpu_custom_call.1} parent=1 // pred_check_branch
      %48 = sbr.rel (0) target = $region17
    $region16: #{tpu_custom_call.1} parent=1 // pred_region
      %s50 = ssub.s32 16384, 16384
      %51 = vsyncadd [#allocation6], %s50
      %s52 = sshll.u32 [#allocation7], 4
      %s53 = int_to_ptr.vmem [resolvable:$true] %s52
      %58 = dma.hbm_to_vmem [thread:$0]  %s3, 16384, %s53, [#allocation6], 256, 256, 16
    $region17: #{tpu_custom_call.1} parent=1 // pred_fallthru
      _
    // Predicated region
    $region18: #{tpu_custom_call.1} parent=1 // pred_check
      _
    $region19: #{tpu_custom_call.1} parent=1 // pred_check_branch
      %60 = sbr.rel (0) target = $region21
    $region20: #{tpu_custom_call.1} parent=1 // pred_region
      _
    $region21: #{tpu_custom_call.1} parent=1 // pred_fallthru
      _
    // Predicated region
    $region22: #{tpu_custom_call.1} parent=1 // pred_check
      _
    $region23: #{tpu_custom_call.1} parent=1 // pred_check_branch
      %62 = sbr.rel (0) target = $region25
    $region24: #{tpu_custom_call.1} parent=1 // pred_region
      %s64 = ssub.s32 16384, 16384
      %65 = vsyncadd [#allocation9], %s64
      %s66 = sshll.u32 [#allocation8], 4
      %s67 = int_to_ptr.vmem [resolvable:$true] %s66
      %72 = dma.hbm_to_vmem [thread:$0]  %s5, 16384, %s67, [#allocation9], 256, 256, 16
    $region25: #{tpu_custom_call.1} parent=1 // pred_fallthru
      _
    // Predicated region
    $region26: #{tpu_custom_call.1} parent=1 // pred_check
      _
    $region27: #{tpu_custom_call.1} parent=1 // pred_check_branch
      %74 = sbr.rel (0) target = $region29
    $region28: #{tpu_custom_call.1} parent=1 // pred_region
      _
    $region29: #{tpu_custom_call.1} parent=1 // pred_fallthru
      _
    // Predicated region
    $region30: #{tpu_custom_call.1} parent=1 // pred_check
      _
    $region31: #{tpu_custom_call.1} parent=1 // pred_check_branch
      %76 = sbr.rel (0) target = $region33
    $region32: #{tpu_custom_call.1} parent=1 // pred_region
      %s78 = ssub.s32 16384, 16384
      %79 = vsyncadd [#allocation9], %s78
      %s80 = sshll.u32 [#allocation10], 4
      %s81 = int_to_ptr.vmem [resolvable:$true] %s80
      %86 = dma.hbm_to_vmem [thread:$0]  %s7, 16384, %s81, [#allocation9], 256, 256, 16
    $region33: #{tpu_custom_call.1} parent=1 // pred_fallthru
      _
    // Predicated region
    $region34: #{tpu_custom_call.1} parent=1 // pred_check
      _
    $region35: #{tpu_custom_call.1} parent=1 // pred_check_branch
      %88 = sbr.rel (0) target = $region37
    $region36: #{tpu_custom_call.1} parent=1 // pred_region
      _
    $region37: #{tpu_custom_call.1} parent=1 // pred_fallthru
      _
    // Predicated region
    $region38: #{tpu_custom_call.1} parent=1 // pred_check
      _
    $region39: #{tpu_custom_call.1} parent=1 // pred_check_branch
      %90 = sbr.rel (0) target = $region41
    $region40: #{tpu_custom_call.1} parent=1 // pred_region
      %s92 = ssub.s32 4096, 4096
      %93 = vsyncadd [#allocation12], %s92
      %s94 = sshll.u32 [#allocation11], 4
      %s95 = int_to_ptr.vmem [resolvable:$true] %s94
      %100 = dma.hbm_to_vmem [thread:$0]  %s9, 4096, %s95, [#allocation12], 64, 64, 4
    $region41: #{tpu_custom_call.1} parent=1 // pred_fallthru
      _
    // Predicated region
    $region42: #{tpu_custom_call.1} parent=1 // pred_check
      _
    $region43: #{tpu_custom_call.1} parent=1 // pred_check_branch
      %102 = sbr.rel (0) target = $region45
    $region44: #{tpu_custom_call.1} parent=1 // pred_region
      _
    $region45: #{tpu_custom_call.1} parent=1 // pred_fallthru
      _
    // Predicated region
    $region46: #{tpu_custom_call.1} parent=1 // pred_check
      _
    $region47: #{tpu_custom_call.1} parent=1 // pred_check_branch
      %104 = sbr.rel (0) target = $region49
    $region48: #{tpu_custom_call.1} parent=1 // pred_region
      %105 = dma.done [#allocation3], 1024
    $region49: #{tpu_custom_call.1} parent=1 // pred_fallthru
      _
    // Predicated region
    $region50: #{tpu_custom_call.1} parent=1 // pred_check
      _
    $region51: #{tpu_custom_call.1} parent=1 // pred_check_branch
      %107 = sbr.rel (0) target = $region53
    $region52: #{tpu_custom_call.1} parent=1 // pred_region
      %108 = dma.done [#allocation6], 3072
    $region53: #{tpu_custom_call.1} parent=1 // pred_fallthru
      _
    // Predicated region
    $region54: #{tpu_custom_call.1} parent=1 // pred_check
      _
    $region55: #{tpu_custom_call.1} parent=1 // pred_check_branch
      %110 = sbr.rel (0) target = $region57
    $region56: #{tpu_custom_call.1} parent=1 // pred_region
      %111 = dma.done [#allocation6], 16384
    $region57: #{tpu_custom_call.1} parent=1 // pred_fallthru
      _
    // Predicated region
    $region58: #{tpu_custom_call.1} parent=1 // pred_check
      _
    $region59: #{tpu_custom_call.1} parent=1 // pred_check_branch
      %113 = sbr.rel (0) target = $region61
    $region60: #{tpu_custom_call.1} parent=1 // pred_region
      %114 = dma.done [#allocation9], 16384
    $region61: #{tpu_custom_call.1} parent=1 // pred_fallthru
      _
    // Predicated region
    $region62: #{tpu_custom_call.1} parent=1 // pred_check
      _
    $region63: #{tpu_custom_call.1} parent=1 // pred_check_branch
      %116 = sbr.rel (0) target = $region65
    $region64: #{tpu_custom_call.1} parent=1 // pred_region
      %117 = dma.done [#allocation9], 16384
    $region65: #{tpu_custom_call.1} parent=1 // pred_fallthru
      _
    // Predicated region
    $region66: #{tpu_custom_call.1} parent=1 // pred_check
      _
    $region67: #{tpu_custom_call.1} parent=1 // pred_check_branch
      %119 = sbr.rel (0) target = $region69
    $region68: #{tpu_custom_call.1} parent=1 // pred_region
      %120 = dma.done [#allocation12], 4096
    $region69: #{tpu_custom_call.1} parent=1 // pred_fallthru
      _
    %v122 = vld [vmem:[#allocation2] sm:$0xff]
    %v123 = vld [vmem:[#allocation2 + $0x8] sm:$0xff]
    %v124 = vld [vmem:[#allocation2 + $0x10] sm:$0xff]
    %v125 = vld [vmem:[#allocation2 + $0x18] sm:$0xff]
    %v126 = vld [vmem:[#allocation2 + $0x20] sm:$0xff]
    %v127 = vld [vmem:[#allocation2 + $0x28] sm:$0xff]
    %v128 = vld [vmem:[#allocation2 + $0x30] sm:$0xff]
    %v129 = vld [vmem:[#allocation2 + $0x38] sm:$0xff]
    %v130 = vpack.c.bf16 %v123, %v122
    %v131 = vpack.c.bf16 %v125, %v124
    %v132 = vpack.c.bf16 %v127, %v126
    %v133 = vpack.c.bf16 %v129, %v128
    %v134 = vld [vmem:[#allocation5] sm:$0xff]
    %v135 = vld [vmem:[#allocation5 + $0x8] sm:$0xff]
    %v136 = vld [vmem:[#allocation5 + $0x10] sm:$0xff]
    %v137 = vld [vmem:[#allocation5 + $0x18] sm:$0xff]
    %v138 = vld [vmem:[#allocation5 + $0x20] sm:$0xff]
    %v139 = vld [vmem:[#allocation5 + $0x28] sm:$0xff]
    %v140 = vld [vmem:[#allocation5 + $0x30] sm:$0xff]
    %v141 = vld [vmem:[#allocation5 + $0x38] sm:$0xff]
    %v142 = vld [vmem:[#allocation5 + $0x40] sm:$0xff]
    %v143 = vld [vmem:[#allocation5 + $0x48] sm:$0xff]
    %v144 = vld [vmem:[#allocation5 + $0x50] sm:$0xff]
    %v145 = vld [vmem:[#allocation5 + $0x58] sm:$0xff]
    %v146 = vld [vmem:[#allocation5 + $0x60] sm:$0xff]
    %v147 = vld [vmem:[#allocation5 + $0x68] sm:$0xff]
    %v148 = vld [vmem:[#allocation5 + $0x70] sm:$0xff]
    %v149 = vld [vmem:[#allocation5 + $0x78] sm:$0xff]
    %v150 = vld [vmem:[#allocation5 + $0x80] sm:$0xff]
    %v151 = vld [vmem:[#allocation5 + $0x88] sm:$0xff]
    %v152 = vld [vmem:[#allocation5 + $0x90] sm:$0xff]
    %v153 = vld [vmem:[#allocation5 + $0x98] sm:$0xff]
    %v154 = vld [vmem:[#allocation5 + $0xa0] sm:$0xff]
    %v155 = vld [vmem:[#allocation5 + $0xa8] sm:$0xff]
    %v156 = vld [vmem:[#allocation5 + $0xb0] sm:$0x77]
    %v157 = vld [vmem:[#allocation5 + $0xb8] sm:$0x77]
    %v158 = vld [vmem:[%s2] sm:$0xf]
    %v160 = vlaneseq
    %v161 = vshrl.u32 %v160, 7
    %v162 = vsub.s32 0, %v161
    %v163 = vrot.slane %v158, %v162
    %v164 = vlaneseq
    %v165 = vshrl.u32 %v164, 7
    %v166 = vsub.s32 1, %v165
    %v167 = vrot.slane %v158, %v166
    %v168 = vlaneseq
    %v169 = vshrl.u32 %v168, 7
    %v170 = vsub.s32 2, %v169
    %v171 = vrot.slane %v158, %v170
    %v172 = vlaneseq
    %v173 = vshrl.u32 %v172, 7
    %v174 = vsub.s32 3, %v173
    %v175 = vrot.slane %v158, %v174
    %v204 = vunpack.c.l.b16 %v134
    %v205 = vunpack.c.h.b16 %v134
    %v206 = vunpack.c.l.b16 %v135
    %v207 = vunpack.c.h.b16 %v135
    %v208 = vunpack.c.l.b16 %v136
    %v209 = vunpack.c.h.b16 %v136
    %v210 = vunpack.c.l.b16 %v137
    %v211 = vunpack.c.h.b16 %v137
    %v212 = vunpack.c.l.b16 %v138
    %v213 = vunpack.c.h.b16 %v138
    %v214 = vunpack.c.l.b16 %v139
    %v215 = vunpack.c.h.b16 %v139
    %v216 = vunpack.c.l.b16 %v140
    %v217 = vunpack.c.h.b16 %v140
    %v218 = vunpack.c.l.b16 %v141
    %v219 = vunpack.c.h.b16 %v141
    %v220 = vunpack.c.l.b16 %v142
    %v221 = vunpack.c.h.b16 %v142
    %v222 = vunpack.c.l.b16 %v143
    %v223 = vunpack.c.h.b16 %v143
    %v224 = vunpack.c.l.b16 %v144
    %v225 = vunpack.c.h.b16 %v144
    %v226 = vunpack.c.l.b16 %v145
    %v227 = vunpack.c.h.b16 %v145
    %v228 = vunpack.c.l.b16 %v146
    %v229 = vunpack.c.h.b16 %v146
    %v230 = vunpack.c.l.b16 %v147
    %v231 = vunpack.c.h.b16 %v147
    %v232 = vunpack.c.l.b16 %v148
    %v233 = vunpack.c.h.b16 %v148
    %v234 = vunpack.c.l.b16 %v149
    %v235 = vunpack.c.h.b16 %v149
    %v236 = vunpack.c.l.b16 %v150
    %v237 = vunpack.c.h.b16 %v150
    %v238 = vunpack.c.l.b16 %v151
    %v239 = vunpack.c.h.b16 %v151
    %v240 = vunpack.c.l.b16 %v152
    %v241 = vunpack.c.h.b16 %v152
    %v242 = vunpack.c.l.b16 %v153
    %v243 = vunpack.c.h.b16 %v153
    %v244 = vunpack.c.l.b16 %v154
    %v245 = vunpack.c.h.b16 %v154
    %v246 = vunpack.c.l.b16 %v155
    %v247 = vunpack.c.h.b16 %v155
    %v248 = vunpack.c.l.b16 %v156
    %v249 = vunpack.c.h.b16 %v156
    %v250 = vunpack.c.l.b16 %v157
    %v251 = vunpack.c.h.b16 %v157
    %v252 = vpack.c.b16 %v208, %v204
    %v253 = vpack.c.b16 %v209, %v205
    %v254 = vpack.c.b16 %v210, %v206
    %v255 = vpack.c.b16 %v211, %v207
    %v256 = vpack.c.b16 %v216, %v212
    %v257 = vpack.c.b16 %v217, %v213
    %v258 = vpack.c.b16 %v218, %v214
    %v259 = vpack.c.b16 %v219, %v215
    %v260 = vpack.c.b16 %v224, %v220
    %v261 = vpack.c.b16 %v225, %v221
    %v262 = vpack.c.b16 %v226, %v222
    %v263 = vpack.c.b16 %v227, %v223
    %v264 = vpack.c.b16 %v232, %v228
    %v265 = vpack.c.b16 %v233, %v229
    %v266 = vpack.c.b16 %v234, %v230
    %v267 = vpack.c.b16 %v235, %v231
    %v268 = vpack.c.b16 %v240, %v236
    %v269 = vpack.c.b16 %v241, %v237
    %v270 = vpack.c.b16 %v242, %v238
    %v271 = vpack.c.b16 %v243, %v239
    %v272 = vpack.c.b16 %v248, %v244
    %v273 = vpack.c.b16 %v249, %v245
    %v274 = vpack.c.b16 %v250, %v246
    %v275 = vpack.c.b16 %v251, %v247
    %vm296 = vcmask 760832
    %v298 = vsel %vm296, %v130, 0
    %v301 = vsel %vm296, %v131, 0
    %v304 = vsel %vm296, %v132, 0
    %v307 = vsel %vm296, %v133, 0
    %vm309 = vcmask 1045504
    %vm310 = vcmask 1046528
    %v311 = vsel %vm309, 4294967295, 65535
    %v312 = vsel %vm310, %v311, 0
    %v314 = vand.u32 %v272, %v312
    %v317 = vand.u32 %v273, %v312
    %v320 = vand.u32 %v274, %v312
    %v323 = vand.u32 %v275, %v312
    %325 = vmatprep.subr.bf16.mxu0 %v253
    %326 = vmatpush1.bf16.msra.mxu0 %v252
    %327 = vmatprep.subr.bf16.mxu0 %v257
    %328 = vmatpush1.bf16.msra.mxu0 %v256
    %329 = vmatprep.subr.bf16.mxu0 %v261
    %330 = vmatpush1.bf16.msra.mxu0 %v260
    %331 = vmatprep.subr.bf16.mxu0 %v265
    %332 = vmatpush1.bf16.msra.mxu0 %v264
    %333 = vmatprep.subr.bf16.mxu0 %v269
    %334 = vmatpush1.bf16.msra.mxu0 %v268
    %335 = vmatprep.subr.bf16.mxu0 %v317
    %336 = vmatpush1.bf16.msra.mxu0 %v314
    %337 = vmatprep.subr.bf16.mxu0 0
    %338 = vmatpush1.bf16.msra.mxu0 0
    %339 = vmatprep.subr.bf16.mxu0 0
    %340 = vmatpush1.bf16.msra.mxu0 0
    %341 = vmatprep.subr.bf16.mxu0 0
    %342 = vmatpush1.bf16.msra.mxu0 0
    %343 = vmatprep.subr.bf16.mxu0 0
    %344 = vmatpush1.bf16.msra.mxu0 0
    %345 = vmatprep.subr.bf16.mxu0 0
    %346 = vmatpush1.bf16.msra.mxu0 0
    %347 = vmatprep.subr.bf16.mxu0 0
    %348 = vmatpush1.bf16.msra.mxu0 0
    %349 = vmatprep.subr.bf16.mxu0 0
    %350 = vmatpush1.bf16.msra.mxu0 0
    %351 = vmatprep.subr.bf16.mxu0 0
    %352 = vmatpush1.bf16.msra.mxu0 0
    %353 = vmatprep.subr.bf16.mxu0 0
    %354 = vmatpush1.bf16.msra.mxu0 0
    %355 = vmatprep.subr.bf16.mxu0 0
    %356 = vmatpush1.bf16.msra.mxu0 0
    %357 = vmatprep.mubr.bf16.mxu0 0
    %358 = vmatmul.mubr.bf16.gmra.mrb[0].mxu0 %v298
    %v359 = vpop.f32.mrb[0].mxu0
    %v360 = vadd.f32 %v163, %v359
    %v361 = vpop.f32.mrb[0].mxu0
    %v362 = vadd.f32 %v167, %v361
    %v363 = vpop.f32.mrb[0].mxu0
    %v364 = vadd.f32 %v163, %v363
    %v365 = vpop.f32.mrb[0].mxu0
    %v366 = vadd.f32 %v167, %v365
    %367 = vmatprep.mubr.bf16.mxu0 0
    %368 = vmatmul.mubr.bf16.gmra.mrb[0].mxu0 %v301
    %v369 = vpop.f32.mrb[0].mxu0
    %v370 = vadd.f32 %v163, %v369
    %v371 = vpop.f32.mrb[0].mxu0
    %v372 = vadd.f32 %v167, %v371
    %v373 = vpop.f32.mrb[0].mxu0
    %v374 = vadd.f32 %v163, %v373
    %v375 = vpop.f32.mrb[0].mxu0
    %v376 = vadd.f32 %v167, %v375
    %377 = vmatprep.mubr.bf16.mxu0 0
    %378 = vmatmul.mubr.bf16.gmra.mrb[0].mxu0 %v304
    %v379 = vpop.f32.mrb[0].mxu0
    %v380 = vadd.f32 %v163, %v379
    %v381 = vpop.f32.mrb[0].mxu0
    %v382 = vadd.f32 %v167, %v381
    %v383 = vpop.f32.mrb[0].mxu0
    %v384 = vadd.f32 %v163, %v383
    %v385 = vpop.f32.mrb[0].mxu0
    %v386 = vadd.f32 %v167, %v385
    %387 = vmatprep.mubr.bf16.mxu0 0
    %388 = vmatmul.mubr.bf16.gmra.mrb[0].mxu0 %v307
    %v389 = vpop.f32.mrb[0].mxu0
    %v390 = vadd.f32 %v163, %v389
    %v391 = vpop.f32.mrb[0].mxu0
    %v392 = vadd.f32 %v167, %v391
    %v393 = vpop.f32.mrb[0].mxu0
    %v394 = vadd.f32 %v163, %v393
    %v395 = vpop.f32.mrb[0].mxu0
    %v396 = vadd.f32 %v167, %v395
    %397 = vdwg.mxu0
    %398 = vmatprep.subr.bf16.mxu0 %v255
    %399 = vmatpush1.bf16.msra.mxu0 %v254
    %400 = vmatprep.subr.bf16.mxu0 %v259
    %401 = vmatpush1.bf16.msra.mxu0 %v258
    %402 = vmatprep.subr.bf16.mxu0 %v263
    %403 = vmatpush1.bf16.msra.mxu0 %v262
    %404 = vmatprep.subr.bf16.mxu0 %v267
    %405 = vmatpush1.bf16.msra.mxu0 %v266
    %406 = vmatprep.subr.bf16.mxu0 %v271
    %407 = vmatpush1.bf16.msra.mxu0 %v270
    %408 = vmatprep.subr.bf16.mxu0 %v323
    %409 = vmatpush1.bf16.msra.mxu0 %v320
    %410 = vmatprep.subr.bf16.mxu0 0
    %411 = vmatpush1.bf16.msra.mxu0 0
    %412 = vmatprep.subr.bf16.mxu0 0
    %413 = vmatpush1.bf16.msra.mxu0 0
    %414 = vmatprep.subr.bf16.mxu0 0
    %415 = vmatpush1.bf16.msra.mxu0 0
    %416 = vmatprep.subr.bf16.mxu0 0
    %417 = vmatpush1.bf16.msra.mxu0 0
    %418 = vmatprep.subr.bf16.mxu0 0
    %419 = vmatpush1.bf16.msra.mxu0 0
    %420 = vmatprep.subr.bf16.mxu0 0
    %421 = vmatpush1.bf16.msra.mxu0 0
    %422 = vmatprep.subr.bf16.mxu0 0
    %423 = vmatpush1.bf16.msra.mxu0 0
    %424 = vmatprep.subr.bf16.mxu0 0
    %425 = vmatpush1.bf16.msra.mxu0 0
    %426 = vmatprep.subr.bf16.mxu0 0
    %427 = vmatpush1.bf16.msra.mxu0 0
    %428 = vmatprep.subr.bf16.mxu0 0
    %429 = vmatpush1.bf16.msra.mxu0 0
    %430 = vmatprep.mubr.bf16.mxu0 0
    %431 = vmatmul.mubr.bf16.gmra.mrb[0].mxu0 %v298
    %v432 = vpop.f32.mrb[0].mxu0
    %v433 = vadd.f32 %v171, %v432
    %v434 = vpop.f32.mrb[0].mxu0
    %v435 = vadd.f32 %v175, %v434
    %v436 = vpop.f32.mrb[0].mxu0
    %v437 = vadd.f32 %v171, %v436
    %v438 = vpop.f32.mrb[0].mxu0
    %v439 = vadd.f32 %v175, %v438
    %440 = vmatprep.mubr.bf16.mxu0 0
    %441 = vmatmul.mubr.bf16.gmra.mrb[0].mxu0 %v301
    %v442 = vpop.f32.mrb[0].mxu0
    %v443 = vadd.f32 %v171, %v442
    %v444 = vpop.f32.mrb[0].mxu0
    %v445 = vadd.f32 %v175, %v444
    %v446 = vpop.f32.mrb[0].mxu0
    %v447 = vadd.f32 %v171, %v446
    %v448 = vpop.f32.mrb[0].mxu0
    %v449 = vadd.f32 %v175, %v448
    %450 = vmatprep.mubr.bf16.mxu0 0
    %451 = vmatmul.mubr.bf16.gmra.mrb[0].mxu0 %v304
    %v452 = vpop.f32.mrb[0].mxu0
    %v453 = vadd.f32 %v171, %v452
    %v454 = vpop.f32.mrb[0].mxu0
    %v455 = vadd.f32 %v175, %v454
    %v456 = vpop.f32.mrb[0].mxu0
    %v457 = vadd.f32 %v171, %v456
    %v458 = vpop.f32.mrb[0].mxu0
    %v459 = vadd.f32 %v175, %v458
    %460 = vmatprep.mubr.bf16.mxu0 0
    %461 = vmatmul.mubr.bf16.gmra.mrb[0].mxu0 %v307
    %v462 = vpop.f32.mrb[0].mxu0
    %v463 = vadd.f32 %v171, %v462
    %v464 = vpop.f32.mrb[0].mxu0
    %v465 = vadd.f32 %v175, %v464
    %v466 = vpop.f32.mrb[0].mxu0
    %v467 = vadd.f32 %v171, %v466
    %v468 = vpop.f32.mrb[0].mxu0
    %v469 = vadd.f32 %v175, %v468
    %470 = vdwg.mxu0
    %v471 = vmax.f32 %v360, 0.0
    %v472 = vmax.f32 %v362, 0.0
    %v473 = vmax.f32 %v433, 0.0
    %v474 = vmax.f32 %v435, 0.0
    %v475 = vmax.f32 %v364, 0.0
    %v476 = vmax.f32 %v366, 0.0
    %v477 = vmax.f32 %v437, 0.0
    %v478 = vmax.f32 %v439, 0.0
    %v479 = vmax.f32 %v370, 0.0
    %v480 = vmax.f32 %v372, 0.0
    %v481 = vmax.f32 %v443, 0.0
    %v482 = vmax.f32 %v445, 0.0
    %v483 = vmax.f32 %v374, 0.0
    %v484 = vmax.f32 %v376, 0.0
    %v485 = vmax.f32 %v447, 0.0
    %v486 = vmax.f32 %v449, 0.0
    %v487 = vmax.f32 %v380, 0.0
    %v488 = vmax.f32 %v382, 0.0
    %v489 = vmax.f32 %v453, 0.0
    %v490 = vmax.f32 %v455, 0.0
    %v491 = vmax.f32 %v384, 0.0
    %v492 = vmax.f32 %v386, 0.0
    %v493 = vmax.f32 %v457, 0.0
    %v494 = vmax.f32 %v459, 0.0
    %v495 = vmax.f32 %v390, 0.0
    %v496 = vmax.f32 %v392, 0.0
    %v497 = vmax.f32 %v463, 0.0
    %v498 = vmax.f32 %v465, 0.0
    %v499 = vmax.f32 %v394, 0.0
    %v500 = vmax.f32 %v396, 0.0
    %v501 = vmax.f32 %v467, 0.0
    %v502 = vmax.f32 %v469, 0.0
    %v503 = vpack.c.bf16 %v475, %v471
    %v504 = vpack.c.bf16 %v476, %v472
    %v505 = vpack.c.bf16 %v477, %v473
    %v506 = vpack.c.bf16 %v478, %v474
    %v507 = vpack.c.bf16 %v483, %v479
    %v508 = vpack.c.bf16 %v484, %v480
    %v509 = vpack.c.bf16 %v485, %v481
    %v510 = vpack.c.bf16 %v486, %v482
    %v511 = vpack.c.bf16 %v491, %v487
    %v512 = vpack.c.bf16 %v492, %v488
    %v513 = vpack.c.bf16 %v493, %v489
    %v514 = vpack.c.bf16 %v494, %v490
    %v515 = vpack.c.bf16 %v499, %v495
    %v516 = vpack.c.bf16 %v500, %v496
    %v517 = vpack.c.bf16 %v501, %v497
    %v518 = vpack.c.bf16 %v502, %v498
    %v519 = vld [vmem:[#allocation7] sm:$0xff]
    %v520 = vld [vmem:[#allocation7 + $0x8] sm:$0xff]
    %v521 = vld [vmem:[#allocation7 + $0x10] sm:$0xff]
    %v522 = vld [vmem:[#allocation7 + $0x18] sm:$0xff]
    %v523 = vld [vmem:[#allocation7 + $0x20] sm:$0xff]
    %v524 = vld [vmem:[#allocation7 + $0x28] sm:$0xff]
    %v525 = vld [vmem:[#allocation7 + $0x30] sm:$0xff]
    %v526 = vld [vmem:[#allocation7 + $0x38] sm:$0xff]
    %v527 = vld [vmem:[#allocation7 + $0x40] sm:$0xff]
    %v528 = vld [vmem:[#allocation7 + $0x48] sm:$0xff]
    %v529 = vld [vmem:[#allocation7 + $0x50] sm:$0xff]
    %v530 = vld [vmem:[#allocation7 + $0x58] sm:$0xff]
    %v531 = vld [vmem:[#allocation7 + $0x60] sm:$0xff]
    %v532 = vld [vmem:[#allocation7 + $0x68] sm:$0xff]
    %v533 = vld [vmem:[#allocation7 + $0x70] sm:$0xff]
    %v534 = vld [vmem:[#allocation7 + $0x78] sm:$0xff]
    %v535 = vld [vmem:[#allocation7 + $0x80] sm:$0xff]
    %v536 = vld [vmem:[#allocation7 + $0x88] sm:$0xff]
    %v537 = vld [vmem:[#allocation7 + $0x90] sm:$0xff]
    %v538 = vld [vmem:[#allocation7 + $0x98] sm:$0xff]
    %v539 = vld [vmem:[#allocation7 + $0xa0] sm:$0xff]
    %v540 = vld [vmem:[#allocation7 + $0xa8] sm:$0xff]
    %v541 = vld [vmem:[#allocation7 + $0xb0] sm:$0xff]
    %v542 = vld [vmem:[#allocation7 + $0xb8] sm:$0xff]
    %v543 = vld [vmem:[#allocation7 + $0xc0] sm:$0xff]
    %v544 = vld [vmem:[#allocation7 + $0xc8] sm:$0xff]
    %v545 = vld [vmem:[#allocation7 + $0xd0] sm:$0xff]
    %v546 = vld [vmem:[#allocation7 + $0xd8] sm:$0xff]
    %v547 = vld [vmem:[#allocation7 + $0xe0] sm:$0xff]
    %v548 = vld [vmem:[#allocation7 + $0xe8] sm:$0xff]
    %v549 = vld [vmem:[#allocation7 + $0xf0] sm:$0xff]
    %v550 = vld [vmem:[#allocation7 + $0xf8] sm:$0xff]
    %v551 = vld [vmem:[#allocation7 + $0x100] sm:$0xff]
    %v552 = vld [vmem:[#allocation7 + $0x108] sm:$0xff]
    %v553 = vld [vmem:[#allocation7 + $0x110] sm:$0xff]
    %v554 = vld [vmem:[#allocation7 + $0x118] sm:$0xff]
    %v555 = vld [vmem:[#allocation7 + $0x120] sm:$0xff]
    %v556 = vld [vmem:[#allocation7 + $0x128] sm:$0xff]
    %v557 = vld [vmem:[#allocation7 + $0x130] sm:$0xff]
    %v558 = vld [vmem:[#allocation7 + $0x138] sm:$0xff]
    %v559 = vld [vmem:[#allocation7 + $0x140] sm:$0xff]
    %v560 = vld [vmem:[#allocation7 + $0x148] sm:$0xff]
    %v561 = vld [vmem:[#allocation7 + $0x150] sm:$0xff]
    %v562 = vld [vmem:[#allocation7 + $0x158] sm:$0xff]
    %v563 = vld [vmem:[#allocation7 + $0x160] sm:$0xff]
    %v564 = vld [vmem:[#allocation7 + $0x168] sm:$0xff]
    %v565 = vld [vmem:[#allocation7 + $0x170] sm:$0xff]
    %v566 = vld [vmem:[#allocation7 + $0x178] sm:$0xff]
    %v567 = vld [vmem:[#allocation7 + $0x180] sm:$0xff]
    %v568 = vld [vmem:[#allocation7 + $0x188] sm:$0xff]
    %v569 = vld [vmem:[#allocation7 + $0x190] sm:$0xff]
    %v570 = vld [vmem:[#allocation7 + $0x198] sm:$0xff]
    %v571 = vld [vmem:[#allocation7 + $0x1a0] sm:$0xff]
    %v572 = vld [vmem:[#allocation7 + $0x1a8] sm:$0xff]
    %v573 = vld [vmem:[#allocation7 + $0x1b0] sm:$0xff]
    %v574 = vld [vmem:[#allocation7 + $0x1b8] sm:$0xff]
    %v575 = vld [vmem:[#allocation7 + $0x1c0] sm:$0xff]
    %v576 = vld [vmem:[#allocation7 + $0x1c8] sm:$0xff]
    %v577 = vld [vmem:[#allocation7 + $0x1d0] sm:$0xff]
    %v578 = vld [vmem:[#allocation7 + $0x1d8] sm:$0xff]
    %v579 = vld [vmem:[#allocation7 + $0x1e0] sm:$0xff]
    %v580 = vld [vmem:[#allocation7 + $0x1e8] sm:$0xff]
    %v581 = vld [vmem:[#allocation7 + $0x1f0] sm:$0xff]
    %v582 = vld [vmem:[#allocation7 + $0x1f8] sm:$0xff]
    %v583 = vld [vmem:[#allocation7 + $0x200] sm:$0xff]
    %v584 = vld [vmem:[#allocation7 + $0x208] sm:$0xff]
    %v585 = vld [vmem:[#allocation7 + $0x210] sm:$0xff]
    %v586 = vld [vmem:[#allocation7 + $0x218] sm:$0xff]
    %v587 = vld [vmem:[#allocation7 + $0x220] sm:$0xff]
    %v588 = vld [vmem:[#allocation7 + $0x228] sm:$0xff]
    %v589 = vld [vmem:[#allocation7 + $0x230] sm:$0xff]
    %v590 = vld [vmem:[#allocation7 + $0x238] sm:$0xff]
    %v591 = vld [vmem:[#allocation7 + $0x240] sm:$0xff]
    %v592 = vld [vmem:[#allocation7 + $0x248] sm:$0xff]
    %v593 = vld [vmem:[#allocation7 + $0x250] sm:$0xff]
    %v594 = vld [vmem:[#allocation7 + $0x258] sm:$0xff]
    %v595 = vld [vmem:[#allocation7 + $0x260] sm:$0xff]
    %v596 = vld [vmem:[#allocation7 + $0x268] sm:$0xff]
    %v597 = vld [vmem:[#allocation7 + $0x270] sm:$0xff]
    %v598 = vld [vmem:[#allocation7 + $0x278] sm:$0xff]
    %v599 = vld [vmem:[#allocation7 + $0x280] sm:$0xff]
    %v600 = vld [vmem:[#allocation7 + $0x288] sm:$0xff]
    %v601 = vld [vmem:[#allocation7 + $0x290] sm:$0xff]
    %v602 = vld [vmem:[#allocation7 + $0x298] sm:$0xff]
    %v603 = vld [vmem:[#allocation7 + $0x2a0] sm:$0xff]
    %v604 = vld [vmem:[#allocation7 + $0x2a8] sm:$0xff]
    %v605 = vld [vmem:[#allocation7 + $0x2b0] sm:$0xff]
    %v606 = vld [vmem:[#allocation7 + $0x2b8] sm:$0xff]
    %v607 = vld [vmem:[#allocation7 + $0x2c0] sm:$0xff]
    %v608 = vld [vmem:[#allocation7 + $0x2c8] sm:$0xff]
    %v609 = vld [vmem:[#allocation7 + $0x2d0] sm:$0xff]
    %v610 = vld [vmem:[#allocation7 + $0x2d8] sm:$0xff]
    %v611 = vld [vmem:[#allocation7 + $0x2e0] sm:$0xff]
    %v612 = vld [vmem:[#allocation7 + $0x2e8] sm:$0xff]
    %v613 = vld [vmem:[#allocation7 + $0x2f0] sm:$0xff]
    %v614 = vld [vmem:[#allocation7 + $0x2f8] sm:$0xff]
    %v615 = vld [vmem:[#allocation7 + $0x300] sm:$0xff]
    %v616 = vld [vmem:[#allocation7 + $0x308] sm:$0xff]
    %v617 = vld [vmem:[#allocation7 + $0x310] sm:$0xff]
    %v618 = vld [vmem:[#allocation7 + $0x318] sm:$0xff]
    %v619 = vld [vmem:[#allocation7 + $0x320] sm:$0xff]
    %v620 = vld [vmem:[#allocation7 + $0x328] sm:$0xff]
    %v621 = vld [vmem:[#allocation7 + $0x330] sm:$0xff]
    %v622 = vld [vmem:[#allocation7 + $0x338] sm:$0xff]
    %v623 = vld [vmem:[#allocation7 + $0x340] sm:$0xff]
    %v624 = vld [vmem:[#allocation7 + $0x348] sm:$0xff]
    %v625 = vld [vmem:[#allocation7 + $0x350] sm:$0xff]
    %v626 = vld [vmem:[#allocation7 + $0x358] sm:$0xff]
    %v627 = vld [vmem:[#allocation7 + $0x360] sm:$0xff]
    %v628 = vld [vmem:[#allocation7 + $0x368] sm:$0xff]
    %v629 = vld [vmem:[#allocation7 + $0x370] sm:$0xff]
    %v630 = vld [vmem:[#allocation7 + $0x378] sm:$0xff]
    %v631 = vld [vmem:[#allocation7 + $0x380] sm:$0xff]
    %v632 = vld [vmem:[#allocation7 + $0x388] sm:$0xff]
    %v633 = vld [vmem:[#allocation7 + $0x390] sm:$0xff]
    %v634 = vld [vmem:[#allocation7 + $0x398] sm:$0xff]
    %v635 = vld [vmem:[#allocation7 + $0x3a0] sm:$0xff]
    %v636 = vld [vmem:[#allocation7 + $0x3a8] sm:$0xff]
    %v637 = vld [vmem:[#allocation7 + $0x3b0] sm:$0xff]
    %v638 = vld [vmem:[#allocation7 + $0x3b8] sm:$0xff]
    %v639 = vld [vmem:[#allocation7 + $0x3c0] sm:$0xff]
    %v640 = vld [vmem:[#allocation7 + $0x3c8] sm:$0xff]
    %v641 = vld [vmem:[#allocation7 + $0x3d0] sm:$0xff]
    %v642 = vld [vmem:[#allocation7 + $0x3d8] sm:$0xff]
    %v643 = vld [vmem:[#allocation7 + $0x3e0] sm:$0xff]
    %v644 = vld [vmem:[#allocation7 + $0x3e8] sm:$0xff]
    %v645 = vld [vmem:[#allocation7 + $0x3f0] sm:$0xff]
    %v646 = vld [vmem:[#allocation7 + $0x3f8] sm:$0xff]
    %v647 = vld [vmem:[%s4] sm:$0xf]
    %v649 = vlaneseq
    %v650 = vshrl.u32 %v649, 7
    %v651 = vsub.s32 0, %v650
    %v652 = vrot.slane %v647, %v651
    %v653 = vlaneseq
    %v654 = vshrl.u32 %v653, 7
    %v655 = vsub.s32 1, %v654
    %v656 = vrot.slane %v647, %v655
    %v657 = vlaneseq
    %v658 = vshrl.u32 %v657, 7
    %v659 = vsub.s32 2, %v658
    %v660 = vrot.slane %v647, %v659
    %v661 = vlaneseq
    %v662 = vshrl.u32 %v661, 7
    %v663 = vsub.s32 3, %v662
    %v664 = vrot.slane %v647, %v663
    %v797 = vunpack.c.l.b16 %v519
    %v798 = vunpack.c.h.b16 %v519
    %v799 = vunpack.c.l.b16 %v520
    %v800 = vunpack.c.h.b16 %v520
    %v801 = vunpack.c.l.b16 %v521
    %v802 = vunpack.c.h.b16 %v521
    %v803 = vunpack.c.l.b16 %v522
    %v804 = vunpack.c.h.b16 %v522
    %v805 = vunpack.c.l.b16 %v523
    %v806 = vunpack.c.h.b16 %v523
    %v807 = vunpack.c.l.b16 %v524
    %v808 = vunpack.c.h.b16 %v524
    %v809 = vunpack.c.l.b16 %v525
    %v810 = vunpack.c.h.b16 %v525
    %v811 = vunpack.c.l.b16 %v526
    %v812 = vunpack.c.h.b16 %v526
    %v813 = vunpack.c.l.b16 %v527
    %v814 = vunpack.c.h.b16 %v527
    %v815 = vunpack.c.l.b16 %v528
    %v816 = vunpack.c.h.b16 %v528
    %v817 = vunpack.c.l.b16 %v529
    %v818 = vunpack.c.h.b16 %v529
    %v819 = vunpack.c.l.b16 %v530
    %v820 = vunpack.c.h.b16 %v530
    %v821 = vunpack.c.l.b16 %v531
    %v822 = vunpack.c.h.b16 %v531
    %v823 = vunpack.c.l.b16 %v532
    %v824 = vunpack.c.h.b16 %v532
    %v825 = vunpack.c.l.b16 %v533
    %v826 = vunpack.c.h.b16 %v533
    %v827 = vunpack.c.l.b16 %v534
    %v828 = vunpack.c.h.b16 %v534
    %v829 = vunpack.c.l.b16 %v535
    %v830 = vunpack.c.h.b16 %v535
    %v831 = vunpack.c.l.b16 %v536
    %v832 = vunpack.c.h.b16 %v536
    %v833 = vunpack.c.l.b16 %v537
    %v834 = vunpack.c.h.b16 %v537
    %v835 = vunpack.c.l.b16 %v538
    %v836 = vunpack.c.h.b16 %v538
    %v837 = vunpack.c.l.b16 %v539
    %v838 = vunpack.c.h.b16 %v539
    %v839 = vunpack.c.l.b16 %v540
    %v840 = vunpack.c.h.b16 %v540
    %v841 = vunpack.c.l.b16 %v541
    %v842 = vunpack.c.h.b16 %v541
    %v843 = vunpack.c.l.b16 %v542
    %v844 = vunpack.c.h.b16 %v542
    %v845 = vunpack.c.l.b16 %v543
    %v846 = vunpack.c.h.b16 %v543
    %v847 = vunpack.c.l.b16 %v544
    %v848 = vunpack.c.h.b16 %v544
    %v849 = vunpack.c.l.b16 %v545
    %v850 = vunpack.c.h.b16 %v545
    %v851 = vunpack.c.l.b16 %v546
    %v852 = vunpack.c.h.b16 %v546
    %v853 = vunpack.c.l.b16 %v547
    %v854 = vunpack.c.h.b16 %v547
    %v855 = vunpack.c.l.b16 %v548
    %v856 = vunpack.c.h.b16 %v548
    %v857 = vunpack.c.l.b16 %v549
    %v858 = vunpack.c.h.b16 %v549
    %v859 = vunpack.c.l.b16 %v550
    %v860 = vunpack.c.h.b16 %v550
    %v861 = vunpack.c.l.b16 %v551
    %v862 = vunpack.c.h.b16 %v551
    %v863 = vunpack.c.l.b16 %v552
    %v864 = vunpack.c.h.b16 %v552
    %v865 = vunpack.c.l.b16 %v553
    %v866 = vunpack.c.h.b16 %v553
    %v867 = vunpack.c.l.b16 %v554
    %v868 = vunpack.c.h.b16 %v554
    %v869 = vunpack.c.l.b16 %v555
    %v870 = vunpack.c.h.b16 %v555
    %v871 = vunpack.c.l.b16 %v556
    %v872 = vunpack.c.h.b16 %v556
    %v873 = vunpack.c.l.b16 %v557
    %v874 = vunpack.c.h.b16 %v557
    %v875 = vunpack.c.l.b16 %v558
    %v876 = vunpack.c.h.b16 %v558
    %v877 = vunpack.c.l.b16 %v559
    %v878 = vunpack.c.h.b16 %v559
    %v879 = vunpack.c.l.b16 %v560
    %v880 = vunpack.c.h.b16 %v560
    %v881 = vunpack.c.l.b16 %v561
    %v882 = vunpack.c.h.b16 %v561
    %v883 = vunpack.c.l.b16 %v562
    %v884 = vunpack.c.h.b16 %v562
    %v885 = vunpack.c.l.b16 %v563
    %v886 = vunpack.c.h.b16 %v563
    %v887 = vunpack.c.l.b16 %v564
    %v888 = vunpack.c.h.b16 %v564
    %v889 = vunpack.c.l.b16 %v565
    %v890 = vunpack.c.h.b16 %v565
    %v891 = vunpack.c.l.b16 %v566
    %v892 = vunpack.c.h.b16 %v566
    %v893 = vunpack.c.l.b16 %v567
    %v894 = vunpack.c.h.b16 %v567
    %v895 = vunpack.c.l.b16 %v568
    %v896 = vunpack.c.h.b16 %v568
    %v897 = vunpack.c.l.b16 %v569
    %v898 = vunpack.c.h.b16 %v569
    %v899 = vunpack.c.l.b16 %v570
    %v900 = vunpack.c.h.b16 %v570
    %v901 = vunpack.c.l.b16 %v571
    %v902 = vunpack.c.h.b16 %v571
    %v903 = vunpack.c.l.b16 %v572
    %v904 = vunpack.c.h.b16 %v572
    %v905 = vunpack.c.l.b16 %v573
    %v906 = vunpack.c.h.b16 %v573
    %v907 = vunpack.c.l.b16 %v574
    %v908 = vunpack.c.h.b16 %v574
    %v909 = vunpack.c.l.b16 %v575
    %v910 = vunpack.c.h.b16 %v575
    %v911 = vunpack.c.l.b16 %v576
    %v912 = vunpack.c.h.b16 %v576
    %v913 = vunpack.c.l.b16 %v577
    %v914 = vunpack.c.h.b16 %v577
    %v915 = vunpack.c.l.b16 %v578
    %v916 = vunpack.c.h.b16 %v578
    %v917 = vunpack.c.l.b16 %v579
    %v918 = vunpack.c.h.b16 %v579
    %v919 = vunpack.c.l.b16 %v580
    %v920 = vunpack.c.h.b16 %v580
    %v921 = vunpack.c.l.b16 %v581
    %v922 = vunpack.c.h.b16 %v581
    %v923 = vunpack.c.l.b16 %v582
    %v924 = vunpack.c.h.b16 %v582
    %v925 = vunpack.c.l.b16 %v583
    %v926 = vunpack.c.h.b16 %v583
    %v927 = vunpack.c.l.b16 %v584
    %v928 = vunpack.c.h.b16 %v584
    %v929 = vunpack.c.l.b16 %v585
    %v930 = vunpack.c.h.b16 %v585
    %v931 = vunpack.c.l.b16 %v586
    %v932 = vunpack.c.h.b16 %v586
    %v933 = vunpack.c.l.b16 %v587
    %v934 = vunpack.c.h.b16 %v587
    %v935 = vunpack.c.l.b16 %v588
    %v936 = vunpack.c.h.b16 %v588
    %v937 = vunpack.c.l.b16 %v589
    %v938 = vunpack.c.h.b16 %v589
    %v939 = vunpack.c.l.b16 %v590
    %v940 = vunpack.c.h.b16 %v590
    %v941 = vunpack.c.l.b16 %v591
    %v942 = vunpack.c.h.b16 %v591
    %v943 = vunpack.c.l.b16 %v592
    %v944 = vunpack.c.h.b16 %v592
    %v945 = vunpack.c.l.b16 %v593
    %v946 = vunpack.c.h.b16 %v593
    %v947 = vunpack.c.l.b16 %v594
    %v948 = vunpack.c.h.b16 %v594
    %v949 = vunpack.c.l.b16 %v595
    %v950 = vunpack.c.h.b16 %v595
    %v951 = vunpack.c.l.b16 %v596
    %v952 = vunpack.c.h.b16 %v596
    %v953 = vunpack.c.l.b16 %v597
    %v954 = vunpack.c.h.b16 %v597
    %v955 = vunpack.c.l.b16 %v598
    %v956 = vunpack.c.h.b16 %v598
    %v957 = vunpack.c.l.b16 %v599
    %v958 = vunpack.c.h.b16 %v599
    %v959 = vunpack.c.l.b16 %v600
    %v960 = vunpack.c.h.b16 %v600
    %v961 = vunpack.c.l.b16 %v601
    %v962 = vunpack.c.h.b16 %v601
    %v963 = vunpack.c.l.b16 %v602
    %v964 = vunpack.c.h.b16 %v602
    %v965 = vunpack.c.l.b16 %v603
    %v966 = vunpack.c.h.b16 %v603
    %v967 = vunpack.c.l.b16 %v604
    %v968 = vunpack.c.h.b16 %v604
    %v969 = vunpack.c.l.b16 %v605
    %v970 = vunpack.c.h.b16 %v605
    %v971 = vunpack.c.l.b16 %v606
    %v972 = vunpack.c.h.b16 %v606
    %v973 = vunpack.c.l.b16 %v607
    %v974 = vunpack.c.h.b16 %v607
    %v975 = vunpack.c.l.b16 %v608
    %v976 = vunpack.c.h.b16 %v608
    %v977 = vunpack.c.l.b16 %v609
    %v978 = vunpack.c.h.b16 %v609
    %v979 = vunpack.c.l.b16 %v610
    %v980 = vunpack.c.h.b16 %v610
    %v981 = vunpack.c.l.b16 %v611
    %v982 = vunpack.c.h.b16 %v611
    %v983 = vunpack.c.l.b16 %v612
    %v984 = vunpack.c.h.b16 %v612
    %v985 = vunpack.c.l.b16 %v613
    %v986 = vunpack.c.h.b16 %v613
    %v987 = vunpack.c.l.b16 %v614
    %v988 = vunpack.c.h.b16 %v614
    %v989 = vunpack.c.l.b16 %v615
    %v990 = vunpack.c.h.b16 %v615
    %v991 = vunpack.c.l.b16 %v616
    %v992 = vunpack.c.h.b16 %v616
    %v993 = vunpack.c.l.b16 %v617
    %v994 = vunpack.c.h.b16 %v617
    %v995 = vunpack.c.l.b16 %v618
    %v996 = vunpack.c.h.b16 %v618
    %v997 = vunpack.c.l.b16 %v619
    %v998 = vunpack.c.h.b16 %v619
    %v999 = vunpack.c.l.b16 %v620
    %v1000 = vunpack.c.h.b16 %v620
    %v1001 = vunpack.c.l.b16 %v621
    %v1002 = vunpack.c.h.b16 %v621
    %v1003 = vunpack.c.l.b16 %v622
    %v1004 = vunpack.c.h.b16 %v622
    %v1005 = vunpack.c.l.b16 %v623
    %v1006 = vunpack.c.h.b16 %v623
    %v1007 = vunpack.c.l.b16 %v624
    %v1008 = vunpack.c.h.b16 %v624
    %v1009 = vunpack.c.l.b16 %v625
    %v1010 = vunpack.c.h.b16 %v625
    %v1011 = vunpack.c.l.b16 %v626
    %v1012 = vunpack.c.h.b16 %v626
    %v1013 = vunpack.c.l.b16 %v627
    %v1014 = vunpack.c.h.b16 %v627
    %v1015 = vunpack.c.l.b16 %v628
    %v1016 = vunpack.c.h.b16 %v628
    %v1017 = vunpack.c.l.b16 %v629
    %v1018 = vunpack.c.h.b16 %v629
    %v1019 = vunpack.c.l.b16 %v630
    %v1020 = vunpack.c.h.b16 %v630
    %v1021 = vunpack.c.l.b16 %v631
    %v1022 = vunpack.c.h.b16 %v631
    %v1023 = vunpack.c.l.b16 %v632
    %v1024 = vunpack.c.h.b16 %v632
    %v1025 = vunpack.c.l.b16 %v633
    %v1026 = vunpack.c.h.b16 %v633
    %v1027 = vunpack.c.l.b16 %v634
    %v1028 = vunpack.c.h.b16 %v634
    %v1029 = vunpack.c.l.b16 %v635
    %v1030 = vunpack.c.h.b16 %v635
    %v1031 = vunpack.c.l.b16 %v636
    %v1032 = vunpack.c.h.b16 %v636
    %v1033 = vunpack.c.l.b16 %v637
    %v1034 = vunpack.c.h.b16 %v637
    %v1035 = vunpack.c.l.b16 %v638
    %v1036 = vunpack.c.h.b16 %v638
    %v1037 = vunpack.c.l.b16 %v639
    %v1038 = vunpack.c.h.b16 %v639
    %v1039 = vunpack.c.l.b16 %v640
    %v1040 = vunpack.c.h.b16 %v640
    %v1041 = vunpack.c.l.b16 %v641
    %v1042 = vunpack.c.h.b16 %v641
    %v1043 = vunpack.c.l.b16 %v642
    %v1044 = vunpack.c.h.b16 %v642
    %v1045 = vunpack.c.l.b16 %v643
    %v1046 = vunpack.c.h.b16 %v643
    %v1047 = vunpack.c.l.b16 %v644
    %v1048 = vunpack.c.h.b16 %v644
    %v1049 = vunpack.c.l.b16 %v645
    %v1050 = vunpack.c.h.b16 %v645
    %v1051 = vunpack.c.l.b16 %v646
    %v1052 = vunpack.c.h.b16 %v646
    %v1053 = vpack.c.b16 %v801, %v797
    %v1054 = vpack.c.b16 %v802, %v798
    %v1055 = vpack.c.b16 %v803, %v799
    %v1056 = vpack.c.b16 %v804, %v800
    %v1057 = vpack.c.b16 %v809, %v805
    %v1058 = vpack.c.b16 %v810, %v806
    %v1059 = vpack.c.b16 %v811, %v807
    %v1060 = vpack.c.b16 %v812, %v808
    %v1061 = vpack.c.b16 %v817, %v813
    %v1062 = vpack.c.b16 %v818, %v814
    %v1063 = vpack.c.b16 %v819, %v815
    %v1064 = vpack.c.b16 %v820, %v816
    %v1065 = vpack.c.b16 %v825, %v821
    %v1066 = vpack.c.b16 %v826, %v822
    %v1067 = vpack.c.b16 %v827, %v823
    %v1068 = vpack.c.b16 %v828, %v824
    %v1069 = vpack.c.b16 %v833, %v829
    %v1070 = vpack.c.b16 %v834, %v830
    %v1071 = vpack.c.b16 %v835, %v831
    %v1072 = vpack.c.b16 %v836, %v832
    %v1073 = vpack.c.b16 %v841, %v837
    %v1074 = vpack.c.b16 %v842, %v838
    %v1075 = vpack.c.b16 %v843, %v839
    %v1076 = vpack.c.b16 %v844, %v840
    %v1077 = vpack.c.b16 %v849, %v845
    %v1078 = vpack.c.b16 %v850, %v846
    %v1079 = vpack.c.b16 %v851, %v847
    %v1080 = vpack.c.b16 %v852, %v848
    %v1081 = vpack.c.b16 %v857, %v853
    %v1082 = vpack.c.b16 %v858, %v854
    %v1083 = vpack.c.b16 %v859, %v855
    %v1084 = vpack.c.b16 %v860, %v856
    %v1085 = vpack.c.b16 %v865, %v861
    %v1086 = vpack.c.b16 %v866, %v862
    %v1087 = vpack.c.b16 %v867, %v863
    %v1088 = vpack.c.b16 %v868, %v864
    %v1089 = vpack.c.b16 %v873, %v869
    %v1090 = vpack.c.b16 %v874, %v870
    %v1091 = vpack.c.b16 %v875, %v871
    %v1092 = vpack.c.b16 %v876, %v872
    %v1093 = vpack.c.b16 %v881, %v877
    %v1094 = vpack.c.b16 %v882, %v878
    %v1095 = vpack.c.b16 %v883, %v879
    %v1096 = vpack.c.b16 %v884, %v880
    %v1097 = vpack.c.b16 %v889, %v885
    %v1098 = vpack.c.b16 %v890, %v886
    %v1099 = vpack.c.b16 %v891, %v887
    %v1100 = vpack.c.b16 %v892, %v888
    %v1101 = vpack.c.b16 %v897, %v893
    %v1102 = vpack.c.b16 %v898, %v894
    %v1103 = vpack.c.b16 %v899, %v895
    %v1104 = vpack.c.b16 %v900, %v896
    %v1105 = vpack.c.b16 %v905, %v901
    %v1106 = vpack.c.b16 %v906, %v902
    %v1107 = vpack.c.b16 %v907, %v903
    %v1108 = vpack.c.b16 %v908, %v904
    %v1109 = vpack.c.b16 %v913, %v909
    %v1110 = vpack.c.b16 %v914, %v910
    %v1111 = vpack.c.b16 %v915, %v911
    %v1112 = vpack.c.b16 %v916, %v912
    %v1113 = vpack.c.b16 %v921, %v917
    %v1114 = vpack.c.b16 %v922, %v918
    %v1115 = vpack.c.b16 %v923, %v919
    %v1116 = vpack.c.b16 %v924, %v920
    %v1117 = vpack.c.b16 %v929, %v925
    %v1118 = vpack.c.b16 %v930, %v926
    %v1119 = vpack.c.b16 %v931, %v927
    %v1120 = vpack.c.b16 %v932, %v928
    %v1121 = vpack.c.b16 %v937, %v933
    %v1122 = vpack.c.b16 %v938, %v934
    %v1123 = vpack.c.b16 %v939, %v935
    %v1124 = vpack.c.b16 %v940, %v936
    %v1125 = vpack.c.b16 %v945, %v941
    %v1126 = vpack.c.b16 %v946, %v942
    %v1127 = vpack.c.b16 %v947, %v943
    %v1128 = vpack.c.b16 %v948, %v944
    %v1129 = vpack.c.b16 %v953, %v949
    %v1130 = vpack.c.b16 %v954, %v950
    %v1131 = vpack.c.b16 %v955, %v951
    %v1132 = vpack.c.b16 %v956, %v952
    %v1133 = vpack.c.b16 %v961, %v957
    %v1134 = vpack.c.b16 %v962, %v958
    %v1135 = vpack.c.b16 %v963, %v959
    %v1136 = vpack.c.b16 %v964, %v960
    %v1137 = vpack.c.b16 %v969, %v965
    %v1138 = vpack.c.b16 %v970, %v966
    %v1139 = vpack.c.b16 %v971, %v967
    %v1140 = vpack.c.b16 %v972, %v968
    %v1141 = vpack.c.b16 %v977, %v973
    %v1142 = vpack.c.b16 %v978, %v974
    %v1143 = vpack.c.b16 %v979, %v975
    %v1144 = vpack.c.b16 %v980, %v976
    %v1145 = vpack.c.b16 %v985, %v981
    %v1146 = vpack.c.b16 %v986, %v982
    %v1147 = vpack.c.b16 %v987, %v983
    %v1148 = vpack.c.b16 %v988, %v984
    %v1149 = vpack.c.b16 %v993, %v989
    %v1150 = vpack.c.b16 %v994, %v990
    %v1151 = vpack.c.b16 %v995, %v991
    %v1152 = vpack.c.b16 %v996, %v992
    %v1153 = vpack.c.b16 %v1001, %v997
    %v1154 = vpack.c.b16 %v1002, %v998
    %v1155 = vpack.c.b16 %v1003, %v999
    %v1156 = vpack.c.b16 %v1004, %v1000
    %v1157 = vpack.c.b16 %v1009, %v1005
    %v1158 = vpack.c.b16 %v1010, %v1006
    %v1159 = vpack.c.b16 %v1011, %v1007
    %v1160 = vpack.c.b16 %v1012, %v1008
    %v1161 = vpack.c.b16 %v1017, %v1013
    %v1162 = vpack.c.b16 %v1018, %v1014
    %v1163 = vpack.c.b16 %v1019, %v1015
    %v1164 = vpack.c.b16 %v1020, %v1016
    %v1165 = vpack.c.b16 %v1025, %v1021
    %v1166 = vpack.c.b16 %v1026, %v1022
    %v1167 = vpack.c.b16 %v1027, %v1023
    %v1168 = vpack.c.b16 %v1028, %v1024
    %v1169 = vpack.c.b16 %v1033, %v1029
    %v1170 = vpack.c.b16 %v1034, %v1030
    %v1171 = vpack.c.b16 %v1035, %v1031
    %v1172 = vpack.c.b16 %v1036, %v1032
    %v1173 = vpack.c.b16 %v1041, %v1037
    %v1174 = vpack.c.b16 %v1042, %v1038
    %v1175 = vpack.c.b16 %v1043, %v1039
    %v1176 = vpack.c.b16 %v1044, %v1040
    %v1177 = vpack.c.b16 %v1049, %v1045
    %v1178 = vpack.c.b16 %v1050, %v1046
    %v1179 = vpack.c.b16 %v1051, %v1047
    %v1180 = vpack.c.b16 %v1052, %v1048
    %1309 = vmatprep.subr.bf16.mxu0 %v1054
    %1310 = vmatpush1.bf16.msra.mxu0 %v1053
    %1311 = vmatprep.subr.bf16.mxu0 %v1058
    %1312 = vmatpush1.bf16.msra.mxu0 %v1057
    %1313 = vmatprep.subr.bf16.mxu0 %v1062
    %1314 = vmatpush1.bf16.msra.mxu0 %v1061
    %1315 = vmatprep.subr.bf16.mxu0 %v1066
    %1316 = vmatpush1.bf16.msra.mxu0 %v1065
    %1317 = vmatprep.subr.bf16.mxu0 %v1070
    %1318 = vmatpush1.bf16.msra.mxu0 %v1069
    %1319 = vmatprep.subr.bf16.mxu0 %v1074
    %1320 = vmatpush1.bf16.msra.mxu0 %v1073
    %1321 = vmatprep.subr.bf16.mxu0 %v1078
    %1322 = vmatpush1.bf16.msra.mxu0 %v1077
    %1323 = vmatprep.subr.bf16.mxu0 %v1082
    %1324 = vmatpush1.bf16.msra.mxu0 %v1081
    %1325 = vmatprep.subr.bf16.mxu0 %v1086
    %1326 = vmatpush1.bf16.msra.mxu0 %v1085
    %1327 = vmatprep.subr.bf16.mxu0 %v1090
    %1328 = vmatpush1.bf16.msra.mxu0 %v1089
    %1329 = vmatprep.subr.bf16.mxu0 %v1094
    %1330 = vmatpush1.bf16.msra.mxu0 %v1093
    %1331 = vmatprep.subr.bf16.mxu0 %v1098
    %1332 = vmatpush1.bf16.msra.mxu0 %v1097
    %1333 = vmatprep.subr.bf16.mxu0 %v1102
    %1334 = vmatpush1.bf16.msra.mxu0 %v1101
    %1335 = vmatprep.subr.bf16.mxu0 %v1106
    %1336 = vmatpush1.bf16.msra.mxu0 %v1105
    %1337 = vmatprep.subr.bf16.mxu0 %v1110
    %1338 = vmatpush1.bf16.msra.mxu0 %v1109
    %1339 = vmatprep.subr.bf16.mxu0 %v1114
    %1340 = vmatpush1.bf16.msra.mxu0 %v1113
    %1341 = vmatprep.mubr.bf16.mxu0 %v504
    %1342 = vmatmul.mubr.bf16.gmra.mrb[0].mxu0 %v503
    %v1343 = vpop.f32.mrb[0].mxu0
    %v1344 = vadd.f32 %v652, %v1343
    %v1345 = vpop.f32.mrb[0].mxu0
    %v1346 = vadd.f32 %v656, %v1345
    %v1347 = vpop.f32.mrb[0].mxu0
    %v1348 = vadd.f32 %v652, %v1347
    %v1349 = vpop.f32.mrb[0].mxu0
    %v1350 = vadd.f32 %v656, %v1349
    %1351 = vmatprep.mubr.bf16.mxu0 %v508
    %1352 = vmatmul.mubr.bf16.gmra.mrb[0].mxu0 %v507
    %v1353 = vpop.f32.mrb[0].mxu0
    %v1354 = vadd.f32 %v652, %v1353
    %v1355 = vpop.f32.mrb[0].mxu0
    %v1356 = vadd.f32 %v656, %v1355
    %v1357 = vpop.f32.mrb[0].mxu0
    %v1358 = vadd.f32 %v652, %v1357
    %v1359 = vpop.f32.mrb[0].mxu0
    %v1360 = vadd.f32 %v656, %v1359
    %1361 = vmatprep.mubr.bf16.mxu0 %v512
    %1362 = vmatmul.mubr.bf16.gmra.mrb[0].mxu0 %v511
    %v1363 = vpop.f32.mrb[0].mxu0
    %v1364 = vadd.f32 %v652, %v1363
    %v1365 = vpop.f32.mrb[0].mxu0
    %v1366 = vadd.f32 %v656, %v1365
    %v1367 = vpop.f32.mrb[0].mxu0
    %v1368 = vadd.f32 %v652, %v1367
    %v1369 = vpop.f32.mrb[0].mxu0
    %v1370 = vadd.f32 %v656, %v1369
    %1371 = vmatprep.mubr.bf16.mxu0 %v516
    %1372 = vmatmul.mubr.bf16.gmra.mrb[0].mxu0 %v515
    %v1373 = vpop.f32.mrb[0].mxu0
    %v1374 = vadd.f32 %v652, %v1373
    %v1375 = vpop.f32.mrb[0].mxu0
    %v1376 = vadd.f32 %v656, %v1375
    %v1377 = vpop.f32.mrb[0].mxu0
    %v1378 = vadd.f32 %v652, %v1377
    %v1379 = vpop.f32.mrb[0].mxu0
    %v1380 = vadd.f32 %v656, %v1379
    %1381 = vdwg.mxu0
    %1382 = vmatprep.subr.bf16.mxu0 %v1118
    %1383 = vmatpush1.bf16.msra.mxu0 %v1117
    %1384 = vmatprep.subr.bf16.mxu0 %v1122
    %1385 = vmatpush1.bf16.msra.mxu0 %v1121
    %1386 = vmatprep.subr.bf16.mxu0 %v1126
    %1387 = vmatpush1.bf16.msra.mxu0 %v1125
    %1388 = vmatprep.subr.bf16.mxu0 %v1130
    %1389 = vmatpush1.bf16.msra.mxu0 %v1129
    %1390 = vmatprep.subr.bf16.mxu0 %v1134
    %1391 = vmatpush1.bf16.msra.mxu0 %v1133
    %1392 = vmatprep.subr.bf16.mxu0 %v1138
    %1393 = vmatpush1.bf16.msra.mxu0 %v1137
    %1394 = vmatprep.subr.bf16.mxu0 %v1142
    %1395 = vmatpush1.bf16.msra.mxu0 %v1141
    %1396 = vmatprep.subr.bf16.mxu0 %v1146
    %1397 = vmatpush1.bf16.msra.mxu0 %v1145
    %1398 = vmatprep.subr.bf16.mxu0 %v1150
    %1399 = vmatpush1.bf16.msra.mxu0 %v1149
    %1400 = vmatprep.subr.bf16.mxu0 %v1154
    %1401 = vmatpush1.bf16.msra.mxu0 %v1153
    %1402 = vmatprep.subr.bf16.mxu0 %v1158
    %1403 = vmatpush1.bf16.msra.mxu0 %v1157
    %1404 = vmatprep.subr.bf16.mxu0 %v1162
    %1405 = vmatpush1.bf16.msra.mxu0 %v1161
    %1406 = vmatprep.subr.bf16.mxu0 %v1166
    %1407 = vmatpush1.bf16.msra.mxu0 %v1165
    %1408 = vmatprep.subr.bf16.mxu0 %v1170
    %1409 = vmatpush1.bf16.msra.mxu0 %v1169
    %1410 = vmatprep.subr.bf16.mxu0 %v1174
    %1411 = vmatpush1.bf16.msra.mxu0 %v1173
    %1412 = vmatprep.subr.bf16.mxu0 %v1178
    %1413 = vmatpush1.bf16.msra.mxu0 %v1177
    %1414 = vmatprep.mubr.bf16.mxu0 %v506
    %1415 = vmatmul.mubr.bf16.gmra.mrb[0].mxu0 %v505
    %v1416 = vpop.f32.mrb[0].mxu0
    %v1417 = vadd.f32 %v1344, %v1416
    %v1418 = vpop.f32.mrb[0].mxu0
    %v1419 = vadd.f32 %v1346, %v1418
    %v1420 = vpop.f32.mrb[0].mxu0
    %v1421 = vadd.f32 %v1348, %v1420
    %v1422 = vpop.f32.mrb[0].mxu0
    %v1423 = vadd.f32 %v1350, %v1422
    %1424 = vmatprep.mubr.bf16.mxu0 %v510
    %1425 = vmatmul.mubr.bf16.gmra.mrb[0].mxu0 %v509
    %v1426 = vpop.f32.mrb[0].mxu0
    %v1427 = vadd.f32 %v1354, %v1426
    %v1428 = vpop.f32.mrb[0].mxu0
    %v1429 = vadd.f32 %v1356, %v1428
    %v1430 = vpop.f32.mrb[0].mxu0
    %v1431 = vadd.f32 %v1358, %v1430
    %v1432 = vpop.f32.mrb[0].mxu0
    %v1433 = vadd.f32 %v1360, %v1432
    %1434 = vmatprep.mubr.bf16.mxu0 %v514
    %1435 = vmatmul.mubr.bf16.gmra.mrb[0].mxu0 %v513
    %v1436 = vpop.f32.mrb[0].mxu0
    %v1437 = vadd.f32 %v1364, %v1436
    %v1438 = vpop.f32.mrb[0].mxu0
    %v1439 = vadd.f32 %v1366, %v1438
    %v1440 = vpop.f32.mrb[0].mxu0
    %v1441 = vadd.f32 %v1368, %v1440
    %v1442 = vpop.f32.mrb[0].mxu0
    %v1443 = vadd.f32 %v1370, %v1442
    %1444 = vmatprep.mubr.bf16.mxu0 %v518
    %1445 = vmatmul.mubr.bf16.gmra.mrb[0].mxu0 %v517
    %v1446 = vpop.f32.mrb[0].mxu0
    %v1447 = vadd.f32 %v1374, %v1446
    %v1448 = vpop.f32.mrb[0].mxu0
    %v1449 = vadd.f32 %v1376, %v1448
    %v1450 = vpop.f32.mrb[0].mxu0
    %v1451 = vadd.f32 %v1378, %v1450
    %v1452 = vpop.f32.mrb[0].mxu0
    %v1453 = vadd.f32 %v1380, %v1452
    %1454 = vdwg.mxu0
    %1455 = vmatprep.subr.bf16.mxu0 %v1056
    %1456 = vmatpush1.bf16.msra.mxu0 %v1055
    %1457 = vmatprep.subr.bf16.mxu0 %v1060
    %1458 = vmatpush1.bf16.msra.mxu0 %v1059
    %1459 = vmatprep.subr.bf16.mxu0 %v1064
    %1460 = vmatpush1.bf16.msra.mxu0 %v1063
    %1461 = vmatprep.subr.bf16.mxu0 %v1068
    %1462 = vmatpush1.bf16.msra.mxu0 %v1067
    %1463 = vmatprep.subr.bf16.mxu0 %v1072
    %1464 = vmatpush1.bf16.msra.mxu0 %v1071
    %1465 = vmatprep.subr.bf16.mxu0 %v1076
    %1466 = vmatpush1.bf16.msra.mxu0 %v1075
    %1467 = vmatprep.subr.bf16.mxu0 %v1080
    %1468 = vmatpush1.bf16.msra.mxu0 %v1079
    %1469 = vmatprep.subr.bf16.mxu0 %v1084
    %1470 = vmatpush1.bf16.msra.mxu0 %v1083
    %1471 = vmatprep.subr.bf16.mxu0 %v1088
    %1472 = vmatpush1.bf16.msra.mxu0 %v1087
    %1473 = vmatprep.subr.bf16.mxu0 %v1092
    %1474 = vmatpush1.bf16.msra.mxu0 %v1091
    %1475 = vmatprep.subr.bf16.mxu0 %v1096
    %1476 = vmatpush1.bf16.msra.mxu0 %v1095
    %1477 = vmatprep.subr.bf16.mxu0 %v1100
    %1478 = vmatpush1.bf16.msra.mxu0 %v1099
    %1479 = vmatprep.subr.bf16.mxu0 %v1104
    %1480 = vmatpush1.bf16.msra.mxu0 %v1103
    %1481 = vmatprep.subr.bf16.mxu0 %v1108
    %1482 = vmatpush1.bf16.msra.mxu0 %v1107
    %1483 = vmatprep.subr.bf16.mxu0 %v1112
    %1484 = vmatpush1.bf16.msra.mxu0 %v1111
    %1485 = vmatprep.subr.bf16.mxu0 %v1116
    %1486 = vmatpush1.bf16.msra.mxu0 %v1115
    %1487 = vmatprep.mubr.bf16.mxu0 %v504
    %1488 = vmatmul.mubr.bf16.gmra.mrb[0].mxu0 %v503
    %v1489 = vpop.f32.mrb[0].mxu0
    %v1490 = vadd.f32 %v660, %v1489
    %v1491 = vpop.f32.mrb[0].mxu0
    %v1492 = vadd.f32 %v664, %v1491
    %v1493 = vpop.f32.mrb[0].mxu0
    %v1494 = vadd.f32 %v660, %v1493
    %v1495 = vpop.f32.mrb[0].mxu0
    %v1496 = vadd.f32 %v664, %v1495
    %1497 = vmatprep.mubr.bf16.mxu0 %v508
    %1498 = vmatmul.mubr.bf16.gmra.mrb[0].mxu0 %v507
    %v1499 = vpop.f32.mrb[0].mxu0
    %v1500 = vadd.f32 %v660, %v1499
    %v1501 = vpop.f32.mrb[0].mxu0
    %v1502 = vadd.f32 %v664, %v1501
    %v1503 = vpop.f32.mrb[0].mxu0
    %v1504 = vadd.f32 %v660, %v1503
    %v1505 = vpop.f32.mrb[0].mxu0
    %v1506 = vadd.f32 %v664, %v1505
    %1507 = vmatprep.mubr.bf16.mxu0 %v512
    %1508 = vmatmul.mubr.bf16.gmra.mrb[0].mxu0 %v511
    %v1509 = vpop.f32.mrb[0].mxu0
    %v1510 = vadd.f32 %v660, %v1509
    %v1511 = vpop.f32.mrb[0].mxu0
    %v1512 = vadd.f32 %v664, %v1511
    %v1513 = vpop.f32.mrb[0].mxu0
    %v1514 = vadd.f32 %v660, %v1513
    %v1515 = vpop.f32.mrb[0].mxu0
    %v1516 = vadd.f32 %v664, %v1515
    %1517 = vmatprep.mubr.bf16.mxu0 %v516
    %1518 = vmatmul.mubr.bf16.gmra.mrb[0].mxu0 %v515
    %v1519 = vpop.f32.mrb[0].mxu0
    %v1520 = vadd.f32 %v660, %v1519
    %v1521 = vpop.f32.mrb[0].mxu0
    %v1522 = vadd.f32 %v664, %v1521
    %v1523 = vpop.f32.mrb[0].mxu0
    %v1524 = vadd.f32 %v660, %v1523
    %v1525 = vpop.f32.mrb[0].mxu0
    %v1526 = vadd.f32 %v664, %v1525
    %1527 = vdwg.mxu0
    %1528 = vmatprep.subr.bf16.mxu0 %v1120
    %1529 = vmatpush1.bf16.msra.mxu0 %v1119
    %1530 = vmatprep.subr.bf16.mxu0 %v1124
    %1531 = vmatpush1.bf16.msra.mxu0 %v1123
    %1532 = vmatprep.subr.bf16.mxu0 %v1128
    %1533 = vmatpush1.bf16.msra.mxu0 %v1127
    %1534 = vmatprep.subr.bf16.mxu0 %v1132
    %1535 = vmatpush1.bf16.msra.mxu0 %v1131
    %1536 = vmatprep.subr.bf16.mxu0 %v1136
    %1537 = vmatpush1.bf16.msra.mxu0 %v1135
    %1538 = vmatprep.subr.bf16.mxu0 %v1140
    %1539 = vmatpush1.bf16.msra.mxu0 %v1139
    %1540 = vmatprep.subr.bf16.mxu0 %v1144
    %1541 = vmatpush1.bf16.msra.mxu0 %v1143
    %1542 = vmatprep.subr.bf16.mxu0 %v1148
    %1543 = vmatpush1.bf16.msra.mxu0 %v1147
    %1544 = vmatprep.subr.bf16.mxu0 %v1152
    %1545 = vmatpush1.bf16.msra.mxu0 %v1151
    %1546 = vmatprep.subr.bf16.mxu0 %v1156
    %1547 = vmatpush1.bf16.msra.mxu0 %v1155
    %1548 = vmatprep.subr.bf16.mxu0 %v1160
    %1549 = vmatpush1.bf16.msra.mxu0 %v1159
    %1550 = vmatprep.subr.bf16.mxu0 %v1164
    %1551 = vmatpush1.bf16.msra.mxu0 %v1163
    %1552 = vmatprep.subr.bf16.mxu0 %v1168
    %1553 = vmatpush1.bf16.msra.mxu0 %v1167
    %1554 = vmatprep.subr.bf16.mxu0 %v1172
    %1555 = vmatpush1.bf16.msra.mxu0 %v1171
    %1556 = vmatprep.subr.bf16.mxu0 %v1176
    %1557 = vmatpush1.bf16.msra.mxu0 %v1175
    %1558 = vmatprep.subr.bf16.mxu0 %v1180
    %1559 = vmatpush1.bf16.msra.mxu0 %v1179
    %1560 = vmatprep.mubr.bf16.mxu0 %v506
    %1561 = vmatmul.mubr.bf16.gmra.mrb[0].mxu0 %v505
    %v1562 = vpop.f32.mrb[0].mxu0
    %v1563 = vadd.f32 %v1490, %v1562
    %v1564 = vpop.f32.mrb[0].mxu0
    %v1565 = vadd.f32 %v1492, %v1564
    %v1566 = vpop.f32.mrb[0].mxu0
    %v1567 = vadd.f32 %v1494, %v1566
    %v1568 = vpop.f32.mrb[0].mxu0
    %v1569 = vadd.f32 %v1496, %v1568
    %1570 = vmatprep.mubr.bf16.mxu0 %v510
    %1571 = vmatmul.mubr.bf16.gmra.mrb[0].mxu0 %v509
    %v1572 = vpop.f32.mrb[0].mxu0
    %v1573 = vadd.f32 %v1500, %v1572
    %v1574 = vpop.f32.mrb[0].mxu0
    %v1575 = vadd.f32 %v1502, %v1574
    %v1576 = vpop.f32.mrb[0].mxu0
    %v1577 = vadd.f32 %v1504, %v1576
    %v1578 = vpop.f32.mrb[0].mxu0
    %v1579 = vadd.f32 %v1506, %v1578
    %1580 = vmatprep.mubr.bf16.mxu0 %v514
    %1581 = vmatmul.mubr.bf16.gmra.mrb[0].mxu0 %v513
    %v1582 = vpop.f32.mrb[0].mxu0
    %v1583 = vadd.f32 %v1510, %v1582
    %v1584 = vpop.f32.mrb[0].mxu0
    %v1585 = vadd.f32 %v1512, %v1584
    %v1586 = vpop.f32.mrb[0].mxu0
    %v1587 = vadd.f32 %v1514, %v1586
    %v1588 = vpop.f32.mrb[0].mxu0
    %v1589 = vadd.f32 %v1516, %v1588
    %1590 = vmatprep.mubr.bf16.mxu0 %v518
    %1591 = vmatmul.mubr.bf16.gmra.mrb[0].mxu0 %v517
    %v1592 = vpop.f32.mrb[0].mxu0
    %v1593 = vadd.f32 %v1520, %v1592
    %v1594 = vpop.f32.mrb[0].mxu0
    %v1595 = vadd.f32 %v1522, %v1594
    %v1596 = vpop.f32.mrb[0].mxu0
    %v1597 = vadd.f32 %v1524, %v1596
    %v1598 = vpop.f32.mrb[0].mxu0
    %v1599 = vadd.f32 %v1526, %v1598
    %1600 = vdwg.mxu0
    %v1601 = vmax.f32 %v1417, 0.0
    %v1602 = vmax.f32 %v1419, 0.0
    %v1603 = vmax.f32 %v1563, 0.0
    %v1604 = vmax.f32 %v1565, 0.0
    %v1605 = vmax.f32 %v1421, 0.0
    %v1606 = vmax.f32 %v1423, 0.0
    %v1607 = vmax.f32 %v1567, 0.0
    %v1608 = vmax.f32 %v1569, 0.0
    %v1609 = vmax.f32 %v1427, 0.0
    %v1610 = vmax.f32 %v1429, 0.0
    %v1611 = vmax.f32 %v1573, 0.0
    %v1612 = vmax.f32 %v1575, 0.0
    %v1613 = vmax.f32 %v1431, 0.0
    %v1614 = vmax.f32 %v1433, 0.0
    %v1615 = vmax.f32 %v1577, 0.0
    %v1616 = vmax.f32 %v1579, 0.0
    %v1617 = vmax.f32 %v1437, 0.0
    %v1618 = vmax.f32 %v1439, 0.0
    %v1619 = vmax.f32 %v1583, 0.0
    %v1620 = vmax.f32 %v1585, 0.0
    %v1621 = vmax.f32 %v1441, 0.0
    %v1622 = vmax.f32 %v1443, 0.0
    %v1623 = vmax.f32 %v1587, 0.0
    %v1624 = vmax.f32 %v1589, 0.0
    %v1625 = vmax.f32 %v1447, 0.0
    %v1626 = vmax.f32 %v1449, 0.0
    %v1627 = vmax.f32 %v1593, 0.0
    %v1628 = vmax.f32 %v1595, 0.0
    %v1629 = vmax.f32 %v1451, 0.0
    %v1630 = vmax.f32 %v1453, 0.0
    %v1631 = vmax.f32 %v1597, 0.0
    %v1632 = vmax.f32 %v1599, 0.0
    %v1633 = vpack.c.bf16 %v1605, %v1601
    %v1634 = vpack.c.bf16 %v1606, %v1602
    %v1635 = vpack.c.bf16 %v1607, %v1603
    %v1636 = vpack.c.bf16 %v1608, %v1604
    %v1637 = vpack.c.bf16 %v1613, %v1609
    %v1638 = vpack.c.bf16 %v1614, %v1610
    %v1639 = vpack.c.bf16 %v1615, %v1611
    %v1640 = vpack.c.bf16 %v1616, %v1612
    %v1641 = vpack.c.bf16 %v1621, %v1617
    %v1642 = vpack.c.bf16 %v1622, %v1618
    %v1643 = vpack.c.bf16 %v1623, %v1619
    %v1644 = vpack.c.bf16 %v1624, %v1620
    %v1645 = vpack.c.bf16 %v1629, %v1625
    %v1646 = vpack.c.bf16 %v1630, %v1626
    %v1647 = vpack.c.bf16 %v1631, %v1627
    %v1648 = vpack.c.bf16 %v1632, %v1628
    %v1649 = vld [vmem:[#allocation8] sm:$0xff]
    %v1650 = vld [vmem:[#allocation8 + $0x8] sm:$0xff]
    %v1651 = vld [vmem:[#allocation8 + $0x10] sm:$0xff]
    %v1652 = vld [vmem:[#allocation8 + $0x18] sm:$0xff]
    %v1653 = vld [vmem:[#allocation8 + $0x20] sm:$0xff]
    %v1654 = vld [vmem:[#allocation8 + $0x28] sm:$0xff]
    %v1655 = vld [vmem:[#allocation8 + $0x30] sm:$0xff]
    %v1656 = vld [vmem:[#allocation8 + $0x38] sm:$0xff]
    %v1657 = vld [vmem:[#allocation8 + $0x40] sm:$0xff]
    %v1658 = vld [vmem:[#allocation8 + $0x48] sm:$0xff]
    %v1659 = vld [vmem:[#allocation8 + $0x50] sm:$0xff]
    %v1660 = vld [vmem:[#allocation8 + $0x58] sm:$0xff]
    %v1661 = vld [vmem:[#allocation8 + $0x60] sm:$0xff]
    %v1662 = vld [vmem:[#allocation8 + $0x68] sm:$0xff]
    %v1663 = vld [vmem:[#allocation8 + $0x70] sm:$0xff]
    %v1664 = vld [vmem:[#allocation8 + $0x78] sm:$0xff]
    %v1665 = vld [vmem:[#allocation8 + $0x80] sm:$0xff]
    %v1666 = vld [vmem:[#allocation8 + $0x88] sm:$0xff]
    %v1667 = vld [vmem:[#allocation8 + $0x90] sm:$0xff]
    %v1668 = vld [vmem:[#allocation8 + $0x98] sm:$0xff]
    %v1669 = vld [vmem:[#allocation8 + $0xa0] sm:$0xff]
    %v1670 = vld [vmem:[#allocation8 + $0xa8] sm:$0xff]
    %v1671 = vld [vmem:[#allocation8 + $0xb0] sm:$0xff]
    %v1672 = vld [vmem:[#allocation8 + $0xb8] sm:$0xff]
    %v1673 = vld [vmem:[#allocation8 + $0xc0] sm:$0xff]
    %v1674 = vld [vmem:[#allocation8 + $0xc8] sm:$0xff]
    %v1675 = vld [vmem:[#allocation8 + $0xd0] sm:$0xff]
    %v1676 = vld [vmem:[#allocation8 + $0xd8] sm:$0xff]
    %v1677 = vld [vmem:[#allocation8 + $0xe0] sm:$0xff]
    %v1678 = vld [vmem:[#allocation8 + $0xe8] sm:$0xff]
    %v1679 = vld [vmem:[#allocation8 + $0xf0] sm:$0xff]
    %v1680 = vld [vmem:[#allocation8 + $0xf8] sm:$0xff]
    %v1681 = vld [vmem:[#allocation8 + $0x100] sm:$0xff]
    %v1682 = vld [vmem:[#allocation8 + $0x108] sm:$0xff]
    %v1683 = vld [vmem:[#allocation8 + $0x110] sm:$0xff]
    %v1684 = vld [vmem:[#allocation8 + $0x118] sm:$0xff]
    %v1685 = vld [vmem:[#allocation8 + $0x120] sm:$0xff]
    %v1686 = vld [vmem:[#allocation8 + $0x128] sm:$0xff]
    %v1687 = vld [vmem:[#allocation8 + $0x130] sm:$0xff]
    %v1688 = vld [vmem:[#allocation8 + $0x138] sm:$0xff]
    %v1689 = vld [vmem:[#allocation8 + $0x140] sm:$0xff]
    %v1690 = vld [vmem:[#allocation8 + $0x148] sm:$0xff]
    %v1691 = vld [vmem:[#allocation8 + $0x150] sm:$0xff]
    %v1692 = vld [vmem:[#allocation8 + $0x158] sm:$0xff]
    %v1693 = vld [vmem:[#allocation8 + $0x160] sm:$0xff]
    %v1694 = vld [vmem:[#allocation8 + $0x168] sm:$0xff]
    %v1695 = vld [vmem:[#allocation8 + $0x170] sm:$0xff]
    %v1696 = vld [vmem:[#allocation8 + $0x178] sm:$0xff]
    %v1697 = vld [vmem:[#allocation8 + $0x180] sm:$0xff]
    %v1698 = vld [vmem:[#allocation8 + $0x188] sm:$0xff]
    %v1699 = vld [vmem:[#allocation8 + $0x190] sm:$0xff]
    %v1700 = vld [vmem:[#allocation8 + $0x198] sm:$0xff]
    %v1701 = vld [vmem:[#allocation8 + $0x1a0] sm:$0xff]
    %v1702 = vld [vmem:[#allocation8 + $0x1a8] sm:$0xff]
    %v1703 = vld [vmem:[#allocation8 + $0x1b0] sm:$0xff]
    %v1704 = vld [vmem:[#allocation8 + $0x1b8] sm:$0xff]
    %v1705 = vld [vmem:[#allocation8 + $0x1c0] sm:$0xff]
    %v1706 = vld [vmem:[#allocation8 + $0x1c8] sm:$0xff]
    %v1707 = vld [vmem:[#allocation8 + $0x1d0] sm:$0xff]
    %v1708 = vld [vmem:[#allocation8 + $0x1d8] sm:$0xff]
    %v1709 = vld [vmem:[#allocation8 + $0x1e0] sm:$0xff]
    %v1710 = vld [vmem:[#allocation8 + $0x1e8] sm:$0xff]
    %v1711 = vld [vmem:[#allocation8 + $0x1f0] sm:$0xff]
    %v1712 = vld [vmem:[#allocation8 + $0x1f8] sm:$0xff]
    %v1713 = vld [vmem:[#allocation8 + $0x200] sm:$0xff]
    %v1714 = vld [vmem:[#allocation8 + $0x208] sm:$0xff]
    %v1715 = vld [vmem:[#allocation8 + $0x210] sm:$0xff]
    %v1716 = vld [vmem:[#allocation8 + $0x218] sm:$0xff]
    %v1717 = vld [vmem:[#allocation8 + $0x220] sm:$0xff]
    %v1718 = vld [vmem:[#allocation8 + $0x228] sm:$0xff]
    %v1719 = vld [vmem:[#allocation8 + $0x230] sm:$0xff]
    %v1720 = vld [vmem:[#allocation8 + $0x238] sm:$0xff]
    %v1721 = vld [vmem:[#allocation8 + $0x240] sm:$0xff]
    %v1722 = vld [vmem:[#allocation8 + $0x248] sm:$0xff]
    %v1723 = vld [vmem:[#allocation8 + $0x250] sm:$0xff]
    %v1724 = vld [vmem:[#allocation8 + $0x258] sm:$0xff]
    %v1725 = vld [vmem:[#allocation8 + $0x260] sm:$0xff]
    %v1726 = vld [vmem:[#allocation8 + $0x268] sm:$0xff]
    %v1727 = vld [vmem:[#allocation8 + $0x270] sm:$0xff]
    %v1728 = vld [vmem:[#allocation8 + $0x278] sm:$0xff]
    %v1729 = vld [vmem:[#allocation8 + $0x280] sm:$0xff]
    %v1730 = vld [vmem:[#allocation8 + $0x288] sm:$0xff]
    %v1731 = vld [vmem:[#allocation8 + $0x290] sm:$0xff]
    %v1732 = vld [vmem:[#allocation8 + $0x298] sm:$0xff]
    %v1733 = vld [vmem:[#allocation8 + $0x2a0] sm:$0xff]
    %v1734 = vld [vmem:[#allocation8 + $0x2a8] sm:$0xff]
    %v1735 = vld [vmem:[#allocation8 + $0x2b0] sm:$0xff]
    %v1736 = vld [vmem:[#allocation8 + $0x2b8] sm:$0xff]
    %v1737 = vld [vmem:[#allocation8 + $0x2c0] sm:$0xff]
    %v1738 = vld [vmem:[#allocation8 + $0x2c8] sm:$0xff]
    %v1739 = vld [vmem:[#allocation8 + $0x2d0] sm:$0xff]
    %v1740 = vld [vmem:[#allocation8 + $0x2d8] sm:$0xff]
    %v1741 = vld [vmem:[#allocation8 + $0x2e0] sm:$0xff]
    %v1742 = vld [vmem:[#allocation8 + $0x2e8] sm:$0xff]
    %v1743 = vld [vmem:[#allocation8 + $0x2f0] sm:$0xff]
    %v1744 = vld [vmem:[#allocation8 + $0x2f8] sm:$0xff]
    %v1745 = vld [vmem:[#allocation8 + $0x300] sm:$0xff]
    %v1746 = vld [vmem:[#allocation8 + $0x308] sm:$0xff]
    %v1747 = vld [vmem:[#allocation8 + $0x310] sm:$0xff]
    %v1748 = vld [vmem:[#allocation8 + $0x318] sm:$0xff]
    %v1749 = vld [vmem:[#allocation8 + $0x320] sm:$0xff]
    %v1750 = vld [vmem:[#allocation8 + $0x328] sm:$0xff]
    %v1751 = vld [vmem:[#allocation8 + $0x330] sm:$0xff]
    %v1752 = vld [vmem:[#allocation8 + $0x338] sm:$0xff]
    %v1753 = vld [vmem:[#allocation8 + $0x340] sm:$0xff]
    %v1754 = vld [vmem:[#allocation8 + $0x348] sm:$0xff]
    %v1755 = vld [vmem:[#allocation8 + $0x350] sm:$0xff]
    %v1756 = vld [vmem:[#allocation8 + $0x358] sm:$0xff]
    %v1757 = vld [vmem:[#allocation8 + $0x360] sm:$0xff]
    %v1758 = vld [vmem:[#allocation8 + $0x368] sm:$0xff]
    %v1759 = vld [vmem:[#allocation8 + $0x370] sm:$0xff]
    %v1760 = vld [vmem:[#allocation8 + $0x378] sm:$0xff]
    %v1761 = vld [vmem:[#allocation8 + $0x380] sm:$0xff]
    %v1762 = vld [vmem:[#allocation8 + $0x388] sm:$0xff]
    %v1763 = vld [vmem:[#allocation8 + $0x390] sm:$0xff]
    %v1764 = vld [vmem:[#allocation8 + $0x398] sm:$0xff]
    %v1765 = vld [vmem:[#allocation8 + $0x3a0] sm:$0xff]
    %v1766 = vld [vmem:[#allocation8 + $0x3a8] sm:$0xff]
    %v1767 = vld [vmem:[#allocation8 + $0x3b0] sm:$0xff]
    %v1768 = vld [vmem:[#allocation8 + $0x3b8] sm:$0xff]
    %v1769 = vld [vmem:[#allocation8 + $0x3c0] sm:$0xff]
    %v1770 = vld [vmem:[#allocation8 + $0x3c8] sm:$0xff]
    %v1771 = vld [vmem:[#allocation8 + $0x3d0] sm:$0xff]
    %v1772 = vld [vmem:[#allocation8 + $0x3d8] sm:$0xff]
    %v1773 = vld [vmem:[#allocation8 + $0x3e0] sm:$0xff]
    %v1774 = vld [vmem:[#allocation8 + $0x3e8] sm:$0xff]
    %v1775 = vld [vmem:[#allocation8 + $0x3f0] sm:$0xff]
    %v1776 = vld [vmem:[#allocation8 + $0x3f8] sm:$0xff]
    %v1777 = vld [vmem:[%s6] sm:$0xf]
    %v1779 = vlaneseq
    %v1780 = vshrl.u32 %v1779, 7
    %v1781 = vsub.s32 0, %v1780
    %v1782 = vrot.slane %v1777, %v1781
    %v1783 = vlaneseq
    %v1784 = vshrl.u32 %v1783, 7
    %v1785 = vsub.s32 1, %v1784
    %v1786 = vrot.slane %v1777, %v1785
    %v1787 = vlaneseq
    %v1788 = vshrl.u32 %v1787, 7
    %v1789 = vsub.s32 2, %v1788
    %v1790 = vrot.slane %v1777, %v1789
    %v1791 = vlaneseq
    %v1792 = vshrl.u32 %v1791, 7
    %v1793 = vsub.s32 3, %v1792
    %v1794 = vrot.slane %v1777, %v1793
    %v1927 = vunpack.c.l.b16 %v1649
    %v1928 = vunpack.c.h.b16 %v1649
    %v1929 = vunpack.c.l.b16 %v1650
    %v1930 = vunpack.c.h.b16 %v1650
    %v1931 = vunpack.c.l.b16 %v1651
    %v1932 = vunpack.c.h.b16 %v1651
    %v1933 = vunpack.c.l.b16 %v1652
    %v1934 = vunpack.c.h.b16 %v1652
    %v1935 = vunpack.c.l.b16 %v1653
    %v1936 = vunpack.c.h.b16 %v1653
    %v1937 = vunpack.c.l.b16 %v1654
    %v1938 = vunpack.c.h.b16 %v1654
    %v1939 = vunpack.c.l.b16 %v1655
    %v1940 = vunpack.c.h.b16 %v1655
    %v1941 = vunpack.c.l.b16 %v1656
    %v1942 = vunpack.c.h.b16 %v1656
    %v1943 = vunpack.c.l.b16 %v1657
    %v1944 = vunpack.c.h.b16 %v1657
    %v1945 = vunpack.c.l.b16 %v1658
    %v1946 = vunpack.c.h.b16 %v1658
    %v1947 = vunpack.c.l.b16 %v1659
    %v1948 = vunpack.c.h.b16 %v1659
    %v1949 = vunpack.c.l.b16 %v1660
    %v1950 = vunpack.c.h.b16 %v1660
    %v1951 = vunpack.c.l.b16 %v1661
    %v1952 = vunpack.c.h.b16 %v1661
    %v1953 = vunpack.c.l.b16 %v1662
    %v1954 = vunpack.c.h.b16 %v1662
    %v1955 = vunpack.c.l.b16 %v1663
    %v1956 = vunpack.c.h.b16 %v1663
    %v1957 = vunpack.c.l.b16 %v1664
    %v1958 = vunpack.c.h.b16 %v1664
    %v1959 = vunpack.c.l.b16 %v1665
    %v1960 = vunpack.c.h.b16 %v1665
    %v1961 = vunpack.c.l.b16 %v1666
    %v1962 = vunpack.c.h.b16 %v1666
    %v1963 = vunpack.c.l.b16 %v1667
    %v1964 = vunpack.c.h.b16 %v1667
    %v1965 = vunpack.c.l.b16 %v1668
    %v1966 = vunpack.c.h.b16 %v1668
    %v1967 = vunpack.c.l.b16 %v1669
    %v1968 = vunpack.c.h.b16 %v1669
    %v1969 = vunpack.c.l.b16 %v1670
    %v1970 = vunpack.c.h.b16 %v1670
    %v1971 = vunpack.c.l.b16 %v1671
    %v1972 = vunpack.c.h.b16 %v1671
    %v1973 = vunpack.c.l.b16 %v1672
    %v1974 = vunpack.c.h.b16 %v1672
    %v1975 = vunpack.c.l.b16 %v1673
    %v1976 = vunpack.c.h.b16 %v1673
    %v1977 = vunpack.c.l.b16 %v1674
    %v1978 = vunpack.c.h.b16 %v1674
    %v1979 = vunpack.c.l.b16 %v1675
    %v1980 = vunpack.c.h.b16 %v1675
    %v1981 = vunpack.c.l.b16 %v1676
    %v1982 = vunpack.c.h.b16 %v1676
    %v1983 = vunpack.c.l.b16 %v1677
    %v1984 = vunpack.c.h.b16 %v1677
    %v1985 = vunpack.c.l.b16 %v1678
    %v1986 = vunpack.c.h.b16 %v1678
    %v1987 = vunpack.c.l.b16 %v1679
    %v1988 = vunpack.c.h.b16 %v1679
    %v1989 = vunpack.c.l.b16 %v1680
    %v1990 = vunpack.c.h.b16 %v1680
    %v1991 = vunpack.c.l.b16 %v1681
    %v1992 = vunpack.c.h.b16 %v1681
    %v1993 = vunpack.c.l.b16 %v1682
    %v1994 = vunpack.c.h.b16 %v1682
    %v1995 = vunpack.c.l.b16 %v1683
    %v1996 = vunpack.c.h.b16 %v1683
    %v1997 = vunpack.c.l.b16 %v1684
    %v1998 = vunpack.c.h.b16 %v1684
    %v1999 = vunpack.c.l.b16 %v1685
    %v2000 = vunpack.c.h.b16 %v1685
    %v2001 = vunpack.c.l.b16 %v1686
    %v2002 = vunpack.c.h.b16 %v1686
    %v2003 = vunpack.c.l.b16 %v1687
    %v2004 = vunpack.c.h.b16 %v1687
    %v2005 = vunpack.c.l.b16 %v1688
    %v2006 = vunpack.c.h.b16 %v1688
    %v2007 = vunpack.c.l.b16 %v1689
    %v2008 = vunpack.c.h.b16 %v1689
    %v2009 = vunpack.c.l.b16 %v1690
    %v2010 = vunpack.c.h.b16 %v1690
    %v2011 = vunpack.c.l.b16 %v1691
    %v2012 = vunpack.c.h.b16 %v1691
    %v2013 = vunpack.c.l.b16 %v1692
    %v2014 = vunpack.c.h.b16 %v1692
    %v2015 = vunpack.c.l.b16 %v1693
    %v2016 = vunpack.c.h.b16 %v1693
    %v2017 = vunpack.c.l.b16 %v1694
    %v2018 = vunpack.c.h.b16 %v1694
    %v2019 = vunpack.c.l.b16 %v1695
    %v2020 = vunpack.c.h.b16 %v1695
    %v2021 = vunpack.c.l.b16 %v1696
    %v2022 = vunpack.c.h.b16 %v1696
    %v2023 = vunpack.c.l.b16 %v1697
    %v2024 = vunpack.c.h.b16 %v1697
    %v2025 = vunpack.c.l.b16 %v1698
    %v2026 = vunpack.c.h.b16 %v1698
    %v2027 = vunpack.c.l.b16 %v1699
    %v2028 = vunpack.c.h.b16 %v1699
    %v2029 = vunpack.c.l.b16 %v1700
    %v2030 = vunpack.c.h.b16 %v1700
    %v2031 = vunpack.c.l.b16 %v1701
    %v2032 = vunpack.c.h.b16 %v1701
    %v2033 = vunpack.c.l.b16 %v1702
    %v2034 = vunpack.c.h.b16 %v1702
    %v2035 = vunpack.c.l.b16 %v1703
    %v2036 = vunpack.c.h.b16 %v1703
    %v2037 = vunpack.c.l.b16 %v1704
    %v2038 = vunpack.c.h.b16 %v1704
    %v2039 = vunpack.c.l.b16 %v1705
    %v2040 = vunpack.c.h.b16 %v1705
    %v2041 = vunpack.c.l.b16 %v1706
    %v2042 = vunpack.c.h.b16 %v1706
    %v2043 = vunpack.c.l.b16 %v1707
    %v2044 = vunpack.c.h.b16 %v1707
    %v2045 = vunpack.c.l.b16 %v1708
    %v2046 = vunpack.c.h.b16 %v1708
    %v2047 = vunpack.c.l.b16 %v1709
    %v2048 = vunpack.c.h.b16 %v1709
    %v2049 = vunpack.c.l.b16 %v1710
    %v2050 = vunpack.c.h.b16 %v1710
    %v2051 = vunpack.c.l.b16 %v1711
    %v2052 = vunpack.c.h.b16 %v1711
    %v2053 = vunpack.c.l.b16 %v1712
    %v2054 = vunpack.c.h.b16 %v1712
    %v2055 = vunpack.c.l.b16 %v1713
    %v2056 = vunpack.c.h.b16 %v1713
    %v2057 = vunpack.c.l.b16 %v1714
    %v2058 = vunpack.c.h.b16 %v1714
    %v2059 = vunpack.c.l.b16 %v1715
    %v2060 = vunpack.c.h.b16 %v1715
    %v2061 = vunpack.c.l.b16 %v1716
    %v2062 = vunpack.c.h.b16 %v1716
    %v2063 = vunpack.c.l.b16 %v1717
    %v2064 = vunpack.c.h.b16 %v1717
    %v2065 = vunpack.c.l.b16 %v1718
    %v2066 = vunpack.c.h.b16 %v1718
    %v2067 = vunpack.c.l.b16 %v1719
    %v2068 = vunpack.c.h.b16 %v1719
    %v2069 = vunpack.c.l.b16 %v1720
    %v2070 = vunpack.c.h.b16 %v1720
    %v2071 = vunpack.c.l.b16 %v1721
    %v2072 = vunpack.c.h.b16 %v1721
    %v2073 = vunpack.c.l.b16 %v1722
    %v2074 = vunpack.c.h.b16 %v1722
    %v2075 = vunpack.c.l.b16 %v1723
    %v2076 = vunpack.c.h.b16 %v1723
    %v2077 = vunpack.c.l.b16 %v1724
    %v2078 = vunpack.c.h.b16 %v1724
    %v2079 = vunpack.c.l.b16 %v1725
    %v2080 = vunpack.c.h.b16 %v1725
    %v2081 = vunpack.c.l.b16 %v1726
    %v2082 = vunpack.c.h.b16 %v1726
    %v2083 = vunpack.c.l.b16 %v1727
    %v2084 = vunpack.c.h.b16 %v1727
    %v2085 = vunpack.c.l.b16 %v1728
    %v2086 = vunpack.c.h.b16 %v1728
    %v2087 = vunpack.c.l.b16 %v1729
    %v2088 = vunpack.c.h.b16 %v1729
    %v2089 = vunpack.c.l.b16 %v1730
    %v2090 = vunpack.c.h.b16 %v1730
    %v2091 = vunpack.c.l.b16 %v1731
    %v2092 = vunpack.c.h.b16 %v1731
    %v2093 = vunpack.c.l.b16 %v1732
    %v2094 = vunpack.c.h.b16 %v1732
    %v2095 = vunpack.c.l.b16 %v1733
    %v2096 = vunpack.c.h.b16 %v1733
    %v2097 = vunpack.c.l.b16 %v1734
    %v2098 = vunpack.c.h.b16 %v1734
    %v2099 = vunpack.c.l.b16 %v1735
    %v2100 = vunpack.c.h.b16 %v1735
    %v2101 = vunpack.c.l.b16 %v1736
    %v2102 = vunpack.c.h.b16 %v1736
    %v2103 = vunpack.c.l.b16 %v1737
    %v2104 = vunpack.c.h.b16 %v1737
    %v2105 = vunpack.c.l.b16 %v1738
    %v2106 = vunpack.c.h.b16 %v1738
    %v2107 = vunpack.c.l.b16 %v1739
    %v2108 = vunpack.c.h.b16 %v1739
    %v2109 = vunpack.c.l.b16 %v1740
    %v2110 = vunpack.c.h.b16 %v1740
    %v2111 = vunpack.c.l.b16 %v1741
    %v2112 = vunpack.c.h.b16 %v1741
    %v2113 = vunpack.c.l.b16 %v1742
    %v2114 = vunpack.c.h.b16 %v1742
    %v2115 = vunpack.c.l.b16 %v1743
    %v2116 = vunpack.c.h.b16 %v1743
    %v2117 = vunpack.c.l.b16 %v1744
    %v2118 = vunpack.c.h.b16 %v1744
    %v2119 = vunpack.c.l.b16 %v1745
    %v2120 = vunpack.c.h.b16 %v1745
    %v2121 = vunpack.c.l.b16 %v1746
    %v2122 = vunpack.c.h.b16 %v1746
    %v2123 = vunpack.c.l.b16 %v1747
    %v2124 = vunpack.c.h.b16 %v1747
    %v2125 = vunpack.c.l.b16 %v1748
    %v2126 = vunpack.c.h.b16 %v1748
    %v2127 = vunpack.c.l.b16 %v1749
    %v2128 = vunpack.c.h.b16 %v1749
    %v2129 = vunpack.c.l.b16 %v1750
    %v2130 = vunpack.c.h.b16 %v1750
    %v2131 = vunpack.c.l.b16 %v1751
    %v2132 = vunpack.c.h.b16 %v1751
    %v2133 = vunpack.c.l.b16 %v1752
    %v2134 = vunpack.c.h.b16 %v1752
    %v2135 = vunpack.c.l.b16 %v1753
    %v2136 = vunpack.c.h.b16 %v1753
    %v2137 = vunpack.c.l.b16 %v1754
    %v2138 = vunpack.c.h.b16 %v1754
    %v2139 = vunpack.c.l.b16 %v1755
    %v2140 = vunpack.c.h.b16 %v1755
    %v2141 = vunpack.c.l.b16 %v1756
    %v2142 = vunpack.c.h.b16 %v1756
    %v2143 = vunpack.c.l.b16 %v1757
    %v2144 = vunpack.c.h.b16 %v1757
    %v2145 = vunpack.c.l.b16 %v1758
    %v2146 = vunpack.c.h.b16 %v1758
    %v2147 = vunpack.c.l.b16 %v1759
    %v2148 = vunpack.c.h.b16 %v1759
    %v2149 = vunpack.c.l.b16 %v1760
    %v2150 = vunpack.c.h.b16 %v1760
    %v2151 = vunpack.c.l.b16 %v1761
    %v2152 = vunpack.c.h.b16 %v1761
    %v2153 = vunpack.c.l.b16 %v1762
    %v2154 = vunpack.c.h.b16 %v1762
    %v2155 = vunpack.c.l.b16 %v1763
    %v2156 = vunpack.c.h.b16 %v1763
    %v2157 = vunpack.c.l.b16 %v1764
    %v2158 = vunpack.c.h.b16 %v1764
    %v2159 = vunpack.c.l.b16 %v1765
    %v2160 = vunpack.c.h.b16 %v1765
    %v2161 = vunpack.c.l.b16 %v1766
    %v2162 = vunpack.c.h.b16 %v1766
    %v2163 = vunpack.c.l.b16 %v1767
    %v2164 = vunpack.c.h.b16 %v1767
    %v2165 = vunpack.c.l.b16 %v1768
    %v2166 = vunpack.c.h.b16 %v1768
    %v2167 = vunpack.c.l.b16 %v1769
    %v2168 = vunpack.c.h.b16 %v1769
    %v2169 = vunpack.c.l.b16 %v1770
    %v2170 = vunpack.c.h.b16 %v1770
    %v2171 = vunpack.c.l.b16 %v1771
    %v2172 = vunpack.c.h.b16 %v1771
    %v2173 = vunpack.c.l.b16 %v1772
    %v2174 = vunpack.c.h.b16 %v1772
    %v2175 = vunpack.c.l.b16 %v1773
    %v2176 = vunpack.c.h.b16 %v1773
    %v2177 = vunpack.c.l.b16 %v1774
    %v2178 = vunpack.c.h.b16 %v1774
    %v2179 = vunpack.c.l.b16 %v1775
    %v2180 = vunpack.c.h.b16 %v1775
    %v2181 = vunpack.c.l.b16 %v1776
    %v2182 = vunpack.c.h.b16 %v1776
    %v2183 = vpack.c.b16 %v1931, %v1927
    %v2184 = vpack.c.b16 %v1932, %v1928
    %v2185 = vpack.c.b16 %v1933, %v1929
    %v2186 = vpack.c.b16 %v1934, %v1930
    %v2187 = vpack.c.b16 %v1939, %v1935
    %v2188 = vpack.c.b16 %v1940, %v1936
    %v2189 = vpack.c.b16 %v1941, %v1937
    %v2190 = vpack.c.b16 %v1942, %v1938
    %v2191 = vpack.c.b16 %v1947, %v1943
    %v2192 = vpack.c.b16 %v1948, %v1944
    %v2193 = vpack.c.b16 %v1949, %v1945
    %v2194 = vpack.c.b16 %v1950, %v1946
    %v2195 = vpack.c.b16 %v1955, %v1951
    %v2196 = vpack.c.b16 %v1956, %v1952
    %v2197 = vpack.c.b16 %v1957, %v1953
    %v2198 = vpack.c.b16 %v1958, %v1954
    %v2199 = vpack.c.b16 %v1963, %v1959
    %v2200 = vpack.c.b16 %v1964, %v1960
    %v2201 = vpack.c.b16 %v1965, %v1961
    %v2202 = vpack.c.b16 %v1966, %v1962
    %v2203 = vpack.c.b16 %v1971, %v1967
    %v2204 = vpack.c.b16 %v1972, %v1968
    %v2205 = vpack.c.b16 %v1973, %v1969
    %v2206 = vpack.c.b16 %v1974, %v1970
    %v2207 = vpack.c.b16 %v1979, %v1975
    %v2208 = vpack.c.b16 %v1980, %v1976
    %v2209 = vpack.c.b16 %v1981, %v1977
    %v2210 = vpack.c.b16 %v1982, %v1978
    %v2211 = vpack.c.b16 %v1987, %v1983
    %v2212 = vpack.c.b16 %v1988, %v1984
    %v2213 = vpack.c.b16 %v1989, %v1985
    %v2214 = vpack.c.b16 %v1990, %v1986
    %v2215 = vpack.c.b16 %v1995, %v1991
    %v2216 = vpack.c.b16 %v1996, %v1992
    %v2217 = vpack.c.b16 %v1997, %v1993
    %v2218 = vpack.c.b16 %v1998, %v1994
    %v2219 = vpack.c.b16 %v2003, %v1999
    %v2220 = vpack.c.b16 %v2004, %v2000
    %v2221 = vpack.c.b16 %v2005, %v2001
    %v2222 = vpack.c.b16 %v2006, %v2002
    %v2223 = vpack.c.b16 %v2011, %v2007
    %v2224 = vpack.c.b16 %v2012, %v2008
    %v2225 = vpack.c.b16 %v2013, %v2009
    %v2226 = vpack.c.b16 %v2014, %v2010
    %v2227 = vpack.c.b16 %v2019, %v2015
    %v2228 = vpack.c.b16 %v2020, %v2016
    %v2229 = vpack.c.b16 %v2021, %v2017
    %v2230 = vpack.c.b16 %v2022, %v2018
    %v2231 = vpack.c.b16 %v2027, %v2023
    %v2232 = vpack.c.b16 %v2028, %v2024
    %v2233 = vpack.c.b16 %v2029, %v2025
    %v2234 = vpack.c.b16 %v2030, %v2026
    %v2235 = vpack.c.b16 %v2035, %v2031
    %v2236 = vpack.c.b16 %v2036, %v2032
    %v2237 = vpack.c.b16 %v2037, %v2033
    %v2238 = vpack.c.b16 %v2038, %v2034
    %v2239 = vpack.c.b16 %v2043, %v2039
    %v2240 = vpack.c.b16 %v2044, %v2040
    %v2241 = vpack.c.b16 %v2045, %v2041
    %v2242 = vpack.c.b16 %v2046, %v2042
    %v2243 = vpack.c.b16 %v2051, %v2047
    %v2244 = vpack.c.b16 %v2052, %v2048
    %v2245 = vpack.c.b16 %v2053, %v2049
    %v2246 = vpack.c.b16 %v2054, %v2050
    %v2247 = vpack.c.b16 %v2059, %v2055
    %v2248 = vpack.c.b16 %v2060, %v2056
    %v2249 = vpack.c.b16 %v2061, %v2057
    %v2250 = vpack.c.b16 %v2062, %v2058
    %v2251 = vpack.c.b16 %v2067, %v2063
    %v2252 = vpack.c.b16 %v2068, %v2064
    %v2253 = vpack.c.b16 %v2069, %v2065
    %v2254 = vpack.c.b16 %v2070, %v2066
    %v2255 = vpack.c.b16 %v2075, %v2071
    %v2256 = vpack.c.b16 %v2076, %v2072
    %v2257 = vpack.c.b16 %v2077, %v2073
    %v2258 = vpack.c.b16 %v2078, %v2074
    %v2259 = vpack.c.b16 %v2083, %v2079
    %v2260 = vpack.c.b16 %v2084, %v2080
    %v2261 = vpack.c.b16 %v2085, %v2081
    %v2262 = vpack.c.b16 %v2086, %v2082
    %v2263 = vpack.c.b16 %v2091, %v2087
    %v2264 = vpack.c.b16 %v2092, %v2088
    %v2265 = vpack.c.b16 %v2093, %v2089
    %v2266 = vpack.c.b16 %v2094, %v2090
    %v2267 = vpack.c.b16 %v2099, %v2095
    %v2268 = vpack.c.b16 %v2100, %v2096
    %v2269 = vpack.c.b16 %v2101, %v2097
    %v2270 = vpack.c.b16 %v2102, %v2098
    %v2271 = vpack.c.b16 %v2107, %v2103
    %v2272 = vpack.c.b16 %v2108, %v2104
    %v2273 = vpack.c.b16 %v2109, %v2105
    %v2274 = vpack.c.b16 %v2110, %v2106
    %v2275 = vpack.c.b16 %v2115, %v2111
    %v2276 = vpack.c.b16 %v2116, %v2112
    %v2277 = vpack.c.b16 %v2117, %v2113
    %v2278 = vpack.c.b16 %v2118, %v2114
    %v2279 = vpack.c.b16 %v2123, %v2119
    %v2280 = vpack.c.b16 %v2124, %v2120
    %v2281 = vpack.c.b16 %v2125, %v2121
    %v2282 = vpack.c.b16 %v2126, %v2122
    %v2283 = vpack.c.b16 %v2131, %v2127
    %v2284 = vpack.c.b16 %v2132, %v2128
    %v2285 = vpack.c.b16 %v2133, %v2129
    %v2286 = vpack.c.b16 %v2134, %v2130
    %v2287 = vpack.c.b16 %v2139, %v2135
    %v2288 = vpack.c.b16 %v2140, %v2136
    %v2289 = vpack.c.b16 %v2141, %v2137
    %v2290 = vpack.c.b16 %v2142, %v2138
    %v2291 = vpack.c.b16 %v2147, %v2143
    %v2292 = vpack.c.b16 %v2148, %v2144
    %v2293 = vpack.c.b16 %v2149, %v2145
    %v2294 = vpack.c.b16 %v2150, %v2146
    %v2295 = vpack.c.b16 %v2155, %v2151
    %v2296 = vpack.c.b16 %v2156, %v2152
    %v2297 = vpack.c.b16 %v2157, %v2153
    %v2298 = vpack.c.b16 %v2158, %v2154
    %v2299 = vpack.c.b16 %v2163, %v2159
    %v2300 = vpack.c.b16 %v2164, %v2160
    %v2301 = vpack.c.b16 %v2165, %v2161
    %v2302 = vpack.c.b16 %v2166, %v2162
    %v2303 = vpack.c.b16 %v2171, %v2167
    %v2304 = vpack.c.b16 %v2172, %v2168
    %v2305 = vpack.c.b16 %v2173, %v2169
    %v2306 = vpack.c.b16 %v2174, %v2170
    %v2307 = vpack.c.b16 %v2179, %v2175
    %v2308 = vpack.c.b16 %v2180, %v2176
    %v2309 = vpack.c.b16 %v2181, %v2177
    %v2310 = vpack.c.b16 %v2182, %v2178
    %2439 = vmatprep.subr.bf16.mxu0 %v2184
    %2440 = vmatpush1.bf16.msra.mxu0 %v2183
    %2441 = vmatprep.subr.bf16.mxu0 %v2188
    %2442 = vmatpush1.bf16.msra.mxu0 %v2187
    %2443 = vmatprep.subr.bf16.mxu0 %v2192
    %2444 = vmatpush1.bf16.msra.mxu0 %v2191
    %2445 = vmatprep.subr.bf16.mxu0 %v2196
    %2446 = vmatpush1.bf16.msra.mxu0 %v2195
    %2447 = vmatprep.subr.bf16.mxu0 %v2200
    %2448 = vmatpush1.bf16.msra.mxu0 %v2199
    %2449 = vmatprep.subr.bf16.mxu0 %v2204
    %2450 = vmatpush1.bf16.msra.mxu0 %v2203
    %2451 = vmatprep.subr.bf16.mxu0 %v2208
    %2452 = vmatpush1.bf16.msra.mxu0 %v2207
    %2453 = vmatprep.subr.bf16.mxu0 %v2212
    %2454 = vmatpush1.bf16.msra.mxu0 %v2211
    %2455 = vmatprep.subr.bf16.mxu0 %v2216
    %2456 = vmatpush1.bf16.msra.mxu0 %v2215
    %2457 = vmatprep.subr.bf16.mxu0 %v2220
    %2458 = vmatpush1.bf16.msra.mxu0 %v2219
    %2459 = vmatprep.subr.bf16.mxu0 %v2224
    %2460 = vmatpush1.bf16.msra.mxu0 %v2223
    %2461 = vmatprep.subr.bf16.mxu0 %v2228
    %2462 = vmatpush1.bf16.msra.mxu0 %v2227
    %2463 = vmatprep.subr.bf16.mxu0 %v2232
    %2464 = vmatpush1.bf16.msra.mxu0 %v2231
    %2465 = vmatprep.subr.bf16.mxu0 %v2236
    %2466 = vmatpush1.bf16.msra.mxu0 %v2235
    %2467 = vmatprep.subr.bf16.mxu0 %v2240
    %2468 = vmatpush1.bf16.msra.mxu0 %v2239
    %2469 = vmatprep.subr.bf16.mxu0 %v2244
    %2470 = vmatpush1.bf16.msra.mxu0 %v2243
    %2471 = vmatprep.mubr.bf16.mxu0 %v1634
    %2472 = vmatmul.mubr.bf16.gmra.mrb[0].mxu0 %v1633
    %v2473 = vpop.f32.mrb[0].mxu0
    %v2474 = vadd.f32 %v1782, %v2473
    %v2475 = vpop.f32.mrb[0].mxu0
    %v2476 = vadd.f32 %v1786, %v2475
    %v2477 = vpop.f32.mrb[0].mxu0
    %v2478 = vadd.f32 %v1782, %v2477
    %v2479 = vpop.f32.mrb[0].mxu0
    %v2480 = vadd.f32 %v1786, %v2479
    %2481 = vmatprep.mubr.bf16.mxu0 %v1638
    %2482 = vmatmul.mubr.bf16.gmra.mrb[0].mxu0 %v1637
    %v2483 = vpop.f32.mrb[0].mxu0
    %v2484 = vadd.f32 %v1782, %v2483
    %v2485 = vpop.f32.mrb[0].mxu0
    %v2486 = vadd.f32 %v1786, %v2485
    %v2487 = vpop.f32.mrb[0].mxu0
    %v2488 = vadd.f32 %v1782, %v2487
    %v2489 = vpop.f32.mrb[0].mxu0
    %v2490 = vadd.f32 %v1786, %v2489
    %2491 = vmatprep.mubr.bf16.mxu0 %v1642
    %2492 = vmatmul.mubr.bf16.gmra.mrb[0].mxu0 %v1641
    %v2493 = vpop.f32.mrb[0].mxu0
    %v2494 = vadd.f32 %v1782, %v2493
    %v2495 = vpop.f32.mrb[0].mxu0
    %v2496 = vadd.f32 %v1786, %v2495
    %v2497 = vpop.f32.mrb[0].mxu0
    %v2498 = vadd.f32 %v1782, %v2497
    %v2499 = vpop.f32.mrb[0].mxu0
    %v2500 = vadd.f32 %v1786, %v2499
    %2501 = vmatprep.mubr.bf16.mxu0 %v1646
    %2502 = vmatmul.mubr.bf16.gmra.mrb[0].mxu0 %v1645
    %v2503 = vpop.f32.mrb[0].mxu0
    %v2504 = vadd.f32 %v1782, %v2503
    %v2505 = vpop.f32.mrb[0].mxu0
    %v2506 = vadd.f32 %v1786, %v2505
    %v2507 = vpop.f32.mrb[0].mxu0
    %v2508 = vadd.f32 %v1782, %v2507
    %v2509 = vpop.f32.mrb[0].mxu0
    %v2510 = vadd.f32 %v1786, %v2509
    %2511 = vdwg.mxu0
    %2512 = vmatprep.subr.bf16.mxu0 %v2248
    %2513 = vmatpush1.bf16.msra.mxu0 %v2247
    %2514 = vmatprep.subr.bf16.mxu0 %v2252
    %2515 = vmatpush1.bf16.msra.mxu0 %v2251
    %2516 = vmatprep.subr.bf16.mxu0 %v2256
    %2517 = vmatpush1.bf16.msra.mxu0 %v2255
    %2518 = vmatprep.subr.bf16.mxu0 %v2260
    %2519 = vmatpush1.bf16.msra.mxu0 %v2259
    %2520 = vmatprep.subr.bf16.mxu0 %v2264
    %2521 = vmatpush1.bf16.msra.mxu0 %v2263
    %2522 = vmatprep.subr.bf16.mxu0 %v2268
    %2523 = vmatpush1.bf16.msra.mxu0 %v2267
    %2524 = vmatprep.subr.bf16.mxu0 %v2272
    %2525 = vmatpush1.bf16.msra.mxu0 %v2271
    %2526 = vmatprep.subr.bf16.mxu0 %v2276
    %2527 = vmatpush1.bf16.msra.mxu0 %v2275
    %2528 = vmatprep.subr.bf16.mxu0 %v2280
    %2529 = vmatpush1.bf16.msra.mxu0 %v2279
    %2530 = vmatprep.subr.bf16.mxu0 %v2284
    %2531 = vmatpush1.bf16.msra.mxu0 %v2283
    %2532 = vmatprep.subr.bf16.mxu0 %v2288
    %2533 = vmatpush1.bf16.msra.mxu0 %v2287
    %2534 = vmatprep.subr.bf16.mxu0 %v2292
    %2535 = vmatpush1.bf16.msra.mxu0 %v2291
    %2536 = vmatprep.subr.bf16.mxu0 %v2296
    %2537 = vmatpush1.bf16.msra.mxu0 %v2295
    %2538 = vmatprep.subr.bf16.mxu0 %v2300
    %2539 = vmatpush1.bf16.msra.mxu0 %v2299
    %2540 = vmatprep.subr.bf16.mxu0 %v2304
    %2541 = vmatpush1.bf16.msra.mxu0 %v2303
    %2542 = vmatprep.subr.bf16.mxu0 %v2308
    %2543 = vmatpush1.bf16.msra.mxu0 %v2307
    %2544 = vmatprep.mubr.bf16.mxu0 %v1636
    %2545 = vmatmul.mubr.bf16.gmra.mrb[0].mxu0 %v1635
    %v2546 = vpop.f32.mrb[0].mxu0
    %v2547 = vadd.f32 %v2474, %v2546
    %v2548 = vpop.f32.mrb[0].mxu0
    %v2549 = vadd.f32 %v2476, %v2548
    %v2550 = vpop.f32.mrb[0].mxu0
    %v2551 = vadd.f32 %v2478, %v2550
    %v2552 = vpop.f32.mrb[0].mxu0
    %v2553 = vadd.f32 %v2480, %v2552
    %2554 = vmatprep.mubr.bf16.mxu0 %v1640
    %2555 = vmatmul.mubr.bf16.gmra.mrb[0].mxu0 %v1639
    %v2556 = vpop.f32.mrb[0].mxu0
    %v2557 = vadd.f32 %v2484, %v2556
    %v2558 = vpop.f32.mrb[0].mxu0
    %v2559 = vadd.f32 %v2486, %v2558
    %v2560 = vpop.f32.mrb[0].mxu0
    %v2561 = vadd.f32 %v2488, %v2560
    %v2562 = vpop.f32.mrb[0].mxu0
    %v2563 = vadd.f32 %v2490, %v2562
    %2564 = vmatprep.mubr.bf16.mxu0 %v1644
    %2565 = vmatmul.mubr.bf16.gmra.mrb[0].mxu0 %v1643
    %v2566 = vpop.f32.mrb[0].mxu0
    %v2567 = vadd.f32 %v2494, %v2566
    %v2568 = vpop.f32.mrb[0].mxu0
    %v2569 = vadd.f32 %v2496, %v2568
    %v2570 = vpop.f32.mrb[0].mxu0
    %v2571 = vadd.f32 %v2498, %v2570
    %v2572 = vpop.f32.mrb[0].mxu0
    %v2573 = vadd.f32 %v2500, %v2572
    %2574 = vmatprep.mubr.bf16.mxu0 %v1648
    %2575 = vmatmul.mubr.bf16.gmra.mrb[0].mxu0 %v1647
    %v2576 = vpop.f32.mrb[0].mxu0
    %v2577 = vadd.f32 %v2504, %v2576
    %v2578 = vpop.f32.mrb[0].mxu0
    %v2579 = vadd.f32 %v2506, %v2578
    %v2580 = vpop.f32.mrb[0].mxu0
    %v2581 = vadd.f32 %v2508, %v2580
    %v2582 = vpop.f32.mrb[0].mxu0
    %v2583 = vadd.f32 %v2510, %v2582
    %2584 = vdwg.mxu0
    %2585 = vmatprep.subr.bf16.mxu0 %v2186
    %2586 = vmatpush1.bf16.msra.mxu0 %v2185
    %2587 = vmatprep.subr.bf16.mxu0 %v2190
    %2588 = vmatpush1.bf16.msra.mxu0 %v2189
    %2589 = vmatprep.subr.bf16.mxu0 %v2194
    %2590 = vmatpush1.bf16.msra.mxu0 %v2193
    %2591 = vmatprep.subr.bf16.mxu0 %v2198
    %2592 = vmatpush1.bf16.msra.mxu0 %v2197
    %2593 = vmatprep.subr.bf16.mxu0 %v2202
    %2594 = vmatpush1.bf16.msra.mxu0 %v2201
    %2595 = vmatprep.subr.bf16.mxu0 %v2206
    %2596 = vmatpush1.bf16.msra.mxu0 %v2205
    %2597 = vmatprep.subr.bf16.mxu0 %v2210
    %2598 = vmatpush1.bf16.msra.mxu0 %v2209
    %2599 = vmatprep.subr.bf16.mxu0 %v2214
    %2600 = vmatpush1.bf16.msra.mxu0 %v2213
    %2601 = vmatprep.subr.bf16.mxu0 %v2218
    %2602 = vmatpush1.bf16.msra.mxu0 %v2217
    %2603 = vmatprep.subr.bf16.mxu0 %v2222
    %2604 = vmatpush1.bf16.msra.mxu0 %v2221
    %2605 = vmatprep.subr.bf16.mxu0 %v2226
    %2606 = vmatpush1.bf16.msra.mxu0 %v2225
    %2607 = vmatprep.subr.bf16.mxu0 %v2230
    %2608 = vmatpush1.bf16.msra.mxu0 %v2229
    %2609 = vmatprep.subr.bf16.mxu0 %v2234
    %2610 = vmatpush1.bf16.msra.mxu0 %v2233
    %2611 = vmatprep.subr.bf16.mxu0 %v2238
    %2612 = vmatpush1.bf16.msra.mxu0 %v2237
    %2613 = vmatprep.subr.bf16.mxu0 %v2242
    %2614 = vmatpush1.bf16.msra.mxu0 %v2241
    %2615 = vmatprep.subr.bf16.mxu0 %v2246
    %2616 = vmatpush1.bf16.msra.mxu0 %v2245
    %2617 = vmatprep.mubr.bf16.mxu0 %v1634
    %2618 = vmatmul.mubr.bf16.gmra.mrb[0].mxu0 %v1633
    %v2619 = vpop.f32.mrb[0].mxu0
    %v2620 = vadd.f32 %v1790, %v2619
    %v2621 = vpop.f32.mrb[0].mxu0
    %v2622 = vadd.f32 %v1794, %v2621
    %v2623 = vpop.f32.mrb[0].mxu0
    %v2624 = vadd.f32 %v1790, %v2623
    %v2625 = vpop.f32.mrb[0].mxu0
    %v2626 = vadd.f32 %v1794, %v2625
    %2627 = vmatprep.mubr.bf16.mxu0 %v1638
    %2628 = vmatmul.mubr.bf16.gmra.mrb[0].mxu0 %v1637
    %v2629 = vpop.f32.mrb[0].mxu0
    %v2630 = vadd.f32 %v1790, %v2629
    %v2631 = vpop.f32.mrb[0].mxu0
    %v2632 = vadd.f32 %v1794, %v2631
    %v2633 = vpop.f32.mrb[0].mxu0
    %v2634 = vadd.f32 %v1790, %v2633
    %v2635 = vpop.f32.mrb[0].mxu0
    %v2636 = vadd.f32 %v1794, %v2635
    %2637 = vmatprep.mubr.bf16.mxu0 %v1642
    %2638 = vmatmul.mubr.bf16.gmra.mrb[0].mxu0 %v1641
    %v2639 = vpop.f32.mrb[0].mxu0
    %v2640 = vadd.f32 %v1790, %v2639
    %v2641 = vpop.f32.mrb[0].mxu0
    %v2642 = vadd.f32 %v1794, %v2641
    %v2643 = vpop.f32.mrb[0].mxu0
    %v2644 = vadd.f32 %v1790, %v2643
    %v2645 = vpop.f32.mrb[0].mxu0
    %v2646 = vadd.f32 %v1794, %v2645
    %2647 = vmatprep.mubr.bf16.mxu0 %v1646
    %2648 = vmatmul.mubr.bf16.gmra.mrb[0].mxu0 %v1645
    %v2649 = vpop.f32.mrb[0].mxu0
    %v2650 = vadd.f32 %v1790, %v2649
    %v2651 = vpop.f32.mrb[0].mxu0
    %v2652 = vadd.f32 %v1794, %v2651
    %v2653 = vpop.f32.mrb[0].mxu0
    %v2654 = vadd.f32 %v1790, %v2653
    %v2655 = vpop.f32.mrb[0].mxu0
    %v2656 = vadd.f32 %v1794, %v2655
    %2657 = vdwg.mxu0
    %2658 = vmatprep.subr.bf16.mxu0 %v2250
    %2659 = vmatpush1.bf16.msra.mxu0 %v2249
    %2660 = vmatprep.subr.bf16.mxu0 %v2254
    %2661 = vmatpush1.bf16.msra.mxu0 %v2253
    %2662 = vmatprep.subr.bf16.mxu0 %v2258
    %2663 = vmatpush1.bf16.msra.mxu0 %v2257
    %2664 = vmatprep.subr.bf16.mxu0 %v2262
    %2665 = vmatpush1.bf16.msra.mxu0 %v2261
    %2666 = vmatprep.subr.bf16.mxu0 %v2266
    %2667 = vmatpush1.bf16.msra.mxu0 %v2265
    %2668 = vmatprep.subr.bf16.mxu0 %v2270
    %2669 = vmatpush1.bf16.msra.mxu0 %v2269
    %2670 = vmatprep.subr.bf16.mxu0 %v2274
    %2671 = vmatpush1.bf16.msra.mxu0 %v2273
    %2672 = vmatprep.subr.bf16.mxu0 %v2278
    %2673 = vmatpush1.bf16.msra.mxu0 %v2277
    %2674 = vmatprep.subr.bf16.mxu0 %v2282
    %2675 = vmatpush1.bf16.msra.mxu0 %v2281
    %2676 = vmatprep.subr.bf16.mxu0 %v2286
    %2677 = vmatpush1.bf16.msra.mxu0 %v2285
    %2678 = vmatprep.subr.bf16.mxu0 %v2290
    %2679 = vmatpush1.bf16.msra.mxu0 %v2289
    %2680 = vmatprep.subr.bf16.mxu0 %v2294
    %2681 = vmatpush1.bf16.msra.mxu0 %v2293
    %2682 = vmatprep.subr.bf16.mxu0 %v2298
    %2683 = vmatpush1.bf16.msra.mxu0 %v2297
    %2684 = vmatprep.subr.bf16.mxu0 %v2302
    %2685 = vmatpush1.bf16.msra.mxu0 %v2301
    %2686 = vmatprep.subr.bf16.mxu0 %v2306
    %2687 = vmatpush1.bf16.msra.mxu0 %v2305
    %2688 = vmatprep.subr.bf16.mxu0 %v2310
    %2689 = vmatpush1.bf16.msra.mxu0 %v2309
    %2690 = vmatprep.mubr.bf16.mxu0 %v1636
    %2691 = vmatmul.mubr.bf16.gmra.mrb[0].mxu0 %v1635
    %v2692 = vpop.f32.mrb[0].mxu0
    %v2693 = vadd.f32 %v2620, %v2692
    %v2694 = vpop.f32.mrb[0].mxu0
    %v2695 = vadd.f32 %v2622, %v2694
    %v2696 = vpop.f32.mrb[0].mxu0
    %v2697 = vadd.f32 %v2624, %v2696
    %v2698 = vpop.f32.mrb[0].mxu0
    %v2699 = vadd.f32 %v2626, %v2698
    %2700 = vmatprep.mubr.bf16.mxu0 %v1640
    %2701 = vmatmul.mubr.bf16.gmra.mrb[0].mxu0 %v1639
    %v2702 = vpop.f32.mrb[0].mxu0
    %v2703 = vadd.f32 %v2630, %v2702
    %v2704 = vpop.f32.mrb[0].mxu0
    %v2705 = vadd.f32 %v2632, %v2704
    %v2706 = vpop.f32.mrb[0].mxu0
    %v2707 = vadd.f32 %v2634, %v2706
    %v2708 = vpop.f32.mrb[0].mxu0
    %v2709 = vadd.f32 %v2636, %v2708
    %2710 = vmatprep.mubr.bf16.mxu0 %v1644
    %2711 = vmatmul.mubr.bf16.gmra.mrb[0].mxu0 %v1643
    %v2712 = vpop.f32.mrb[0].mxu0
    %v2713 = vadd.f32 %v2640, %v2712
    %v2714 = vpop.f32.mrb[0].mxu0
    %v2715 = vadd.f32 %v2642, %v2714
    %v2716 = vpop.f32.mrb[0].mxu0
    %v2717 = vadd.f32 %v2644, %v2716
    %v2718 = vpop.f32.mrb[0].mxu0
    %v2719 = vadd.f32 %v2646, %v2718
    %2720 = vmatprep.mubr.bf16.mxu0 %v1648
    %2721 = vmatmul.mubr.bf16.gmra.mrb[0].mxu0 %v1647
    %v2722 = vpop.f32.mrb[0].mxu0
    %v2723 = vadd.f32 %v2650, %v2722
    %v2724 = vpop.f32.mrb[0].mxu0
    %v2725 = vadd.f32 %v2652, %v2724
    %v2726 = vpop.f32.mrb[0].mxu0
    %v2727 = vadd.f32 %v2654, %v2726
    %v2728 = vpop.f32.mrb[0].mxu0
    %v2729 = vadd.f32 %v2656, %v2728
    %2730 = vdwg.mxu0
    %v2731 = vmax.f32 %v2547, 0.0
    %v2732 = vmax.f32 %v2549, 0.0
    %v2733 = vmax.f32 %v2693, 0.0
    %v2734 = vmax.f32 %v2695, 0.0
    %v2735 = vmax.f32 %v2551, 0.0
    %v2736 = vmax.f32 %v2553, 0.0
    %v2737 = vmax.f32 %v2697, 0.0
    %v2738 = vmax.f32 %v2699, 0.0
    %v2739 = vmax.f32 %v2557, 0.0
    %v2740 = vmax.f32 %v2559, 0.0
    %v2741 = vmax.f32 %v2703, 0.0
    %v2742 = vmax.f32 %v2705, 0.0
    %v2743 = vmax.f32 %v2561, 0.0
    %v2744 = vmax.f32 %v2563, 0.0
    %v2745 = vmax.f32 %v2707, 0.0
    %v2746 = vmax.f32 %v2709, 0.0
    %v2747 = vmax.f32 %v2567, 0.0
    %v2748 = vmax.f32 %v2569, 0.0
    %v2749 = vmax.f32 %v2713, 0.0
    %v2750 = vmax.f32 %v2715, 0.0
    %v2751 = vmax.f32 %v2571, 0.0
    %v2752 = vmax.f32 %v2573, 0.0
    %v2753 = vmax.f32 %v2717, 0.0
    %v2754 = vmax.f32 %v2719, 0.0
    %v2755 = vmax.f32 %v2577, 0.0
    %v2756 = vmax.f32 %v2579, 0.0
    %v2757 = vmax.f32 %v2723, 0.0
    %v2758 = vmax.f32 %v2725, 0.0
    %v2759 = vmax.f32 %v2581, 0.0
    %v2760 = vmax.f32 %v2583, 0.0
    %v2761 = vmax.f32 %v2727, 0.0
    %v2762 = vmax.f32 %v2729, 0.0
    %v2763 = vpack.c.bf16 %v2735, %v2731
    %v2764 = vpack.c.bf16 %v2736, %v2732
    %v2765 = vpack.c.bf16 %v2737, %v2733
    %v2766 = vpack.c.bf16 %v2738, %v2734
    %v2767 = vpack.c.bf16 %v2743, %v2739
    %v2768 = vpack.c.bf16 %v2744, %v2740
    %v2769 = vpack.c.bf16 %v2745, %v2741
    %v2770 = vpack.c.bf16 %v2746, %v2742
    %v2771 = vpack.c.bf16 %v2751, %v2747
    %v2772 = vpack.c.bf16 %v2752, %v2748
    %v2773 = vpack.c.bf16 %v2753, %v2749
    %v2774 = vpack.c.bf16 %v2754, %v2750
    %v2775 = vpack.c.bf16 %v2759, %v2755
    %v2776 = vpack.c.bf16 %v2760, %v2756
    %v2777 = vpack.c.bf16 %v2761, %v2757
    %v2778 = vpack.c.bf16 %v2762, %v2758
    %v2779 = vld [vmem:[#allocation10] sm:$0xff]
    %v2780 = vld [vmem:[#allocation10 + $0x8] sm:$0xff]
    %v2781 = vld [vmem:[#allocation10 + $0x10] sm:$0xff]
    %v2782 = vld [vmem:[#allocation10 + $0x18] sm:$0xff]
    %v2783 = vld [vmem:[#allocation10 + $0x20] sm:$0xff]
    %v2784 = vld [vmem:[#allocation10 + $0x28] sm:$0xff]
    %v2785 = vld [vmem:[#allocation10 + $0x30] sm:$0xff]
    %v2786 = vld [vmem:[#allocation10 + $0x38] sm:$0xff]
    %v2787 = vld [vmem:[#allocation10 + $0x40] sm:$0xff]
    %v2788 = vld [vmem:[#allocation10 + $0x48] sm:$0xff]
    %v2789 = vld [vmem:[#allocation10 + $0x50] sm:$0xff]
    %v2790 = vld [vmem:[#allocation10 + $0x58] sm:$0xff]
    %v2791 = vld [vmem:[#allocation10 + $0x60] sm:$0xff]
    %v2792 = vld [vmem:[#allocation10 + $0x68] sm:$0xff]
    %v2793 = vld [vmem:[#allocation10 + $0x70] sm:$0xff]
    %v2794 = vld [vmem:[#allocation10 + $0x78] sm:$0xff]
    %v2795 = vld [vmem:[#allocation10 + $0x80] sm:$0xff]
    %v2796 = vld [vmem:[#allocation10 + $0x88] sm:$0xff]
    %v2797 = vld [vmem:[#allocation10 + $0x90] sm:$0xff]
    %v2798 = vld [vmem:[#allocation10 + $0x98] sm:$0xff]
    %v2799 = vld [vmem:[#allocation10 + $0xa0] sm:$0xff]
    %v2800 = vld [vmem:[#allocation10 + $0xa8] sm:$0xff]
    %v2801 = vld [vmem:[#allocation10 + $0xb0] sm:$0xff]
    %v2802 = vld [vmem:[#allocation10 + $0xb8] sm:$0xff]
    %v2803 = vld [vmem:[#allocation10 + $0xc0] sm:$0xff]
    %v2804 = vld [vmem:[#allocation10 + $0xc8] sm:$0xff]
    %v2805 = vld [vmem:[#allocation10 + $0xd0] sm:$0xff]
    %v2806 = vld [vmem:[#allocation10 + $0xd8] sm:$0xff]
    %v2807 = vld [vmem:[#allocation10 + $0xe0] sm:$0xff]
    %v2808 = vld [vmem:[#allocation10 + $0xe8] sm:$0xff]
    %v2809 = vld [vmem:[#allocation10 + $0xf0] sm:$0xff]
    %v2810 = vld [vmem:[#allocation10 + $0xf8] sm:$0xff]
    %v2811 = vld [vmem:[#allocation10 + $0x100] sm:$0xff]
    %v2812 = vld [vmem:[#allocation10 + $0x108] sm:$0xff]
    %v2813 = vld [vmem:[#allocation10 + $0x110] sm:$0xff]
    %v2814 = vld [vmem:[#allocation10 + $0x118] sm:$0xff]
    %v2815 = vld [vmem:[#allocation10 + $0x120] sm:$0xff]
    %v2816 = vld [vmem:[#allocation10 + $0x128] sm:$0xff]
    %v2817 = vld [vmem:[#allocation10 + $0x130] sm:$0xff]
    %v2818 = vld [vmem:[#allocation10 + $0x138] sm:$0xff]
    %v2819 = vld [vmem:[#allocation10 + $0x140] sm:$0xff]
    %v2820 = vld [vmem:[#allocation10 + $0x148] sm:$0xff]
    %v2821 = vld [vmem:[#allocation10 + $0x150] sm:$0xff]
    %v2822 = vld [vmem:[#allocation10 + $0x158] sm:$0xff]
    %v2823 = vld [vmem:[#allocation10 + $0x160] sm:$0xff]
    %v2824 = vld [vmem:[#allocation10 + $0x168] sm:$0xff]
    %v2825 = vld [vmem:[#allocation10 + $0x170] sm:$0xff]
    %v2826 = vld [vmem:[#allocation10 + $0x178] sm:$0xff]
    %v2827 = vld [vmem:[#allocation10 + $0x180] sm:$0xff]
    %v2828 = vld [vmem:[#allocation10 + $0x188] sm:$0xff]
    %v2829 = vld [vmem:[#allocation10 + $0x190] sm:$0xff]
    %v2830 = vld [vmem:[#allocation10 + $0x198] sm:$0xff]
    %v2831 = vld [vmem:[#allocation10 + $0x1a0] sm:$0xff]
    %v2832 = vld [vmem:[#allocation10 + $0x1a8] sm:$0xff]
    %v2833 = vld [vmem:[#allocation10 + $0x1b0] sm:$0xff]
    %v2834 = vld [vmem:[#allocation10 + $0x1b8] sm:$0xff]
    %v2835 = vld [vmem:[#allocation10 + $0x1c0] sm:$0xff]
    %v2836 = vld [vmem:[#allocation10 + $0x1c8] sm:$0xff]
    %v2837 = vld [vmem:[#allocation10 + $0x1d0] sm:$0xff]
    %v2838 = vld [vmem:[#allocation10 + $0x1d8] sm:$0xff]
    %v2839 = vld [vmem:[#allocation10 + $0x1e0] sm:$0xff]
    %v2840 = vld [vmem:[#allocation10 + $0x1e8] sm:$0xff]
    %v2841 = vld [vmem:[#allocation10 + $0x1f0] sm:$0xff]
    %v2842 = vld [vmem:[#allocation10 + $0x1f8] sm:$0xff]
    %v2843 = vld [vmem:[#allocation10 + $0x200] sm:$0xff]
    %v2844 = vld [vmem:[#allocation10 + $0x208] sm:$0xff]
    %v2845 = vld [vmem:[#allocation10 + $0x210] sm:$0xff]
    %v2846 = vld [vmem:[#allocation10 + $0x218] sm:$0xff]
    %v2847 = vld [vmem:[#allocation10 + $0x220] sm:$0xff]
    %v2848 = vld [vmem:[#allocation10 + $0x228] sm:$0xff]
    %v2849 = vld [vmem:[#allocation10 + $0x230] sm:$0xff]
    %v2850 = vld [vmem:[#allocation10 + $0x238] sm:$0xff]
    %v2851 = vld [vmem:[#allocation10 + $0x240] sm:$0xff]
    %v2852 = vld [vmem:[#allocation10 + $0x248] sm:$0xff]
    %v2853 = vld [vmem:[#allocation10 + $0x250] sm:$0xff]
    %v2854 = vld [vmem:[#allocation10 + $0x258] sm:$0xff]
    %v2855 = vld [vmem:[#allocation10 + $0x260] sm:$0xff]
    %v2856 = vld [vmem:[#allocation10 + $0x268] sm:$0xff]
    %v2857 = vld [vmem:[#allocation10 + $0x270] sm:$0xff]
    %v2858 = vld [vmem:[#allocation10 + $0x278] sm:$0xff]
    %v2859 = vld [vmem:[#allocation10 + $0x280] sm:$0xff]
    %v2860 = vld [vmem:[#allocation10 + $0x288] sm:$0xff]
    %v2861 = vld [vmem:[#allocation10 + $0x290] sm:$0xff]
    %v2862 = vld [vmem:[#allocation10 + $0x298] sm:$0xff]
    %v2863 = vld [vmem:[#allocation10 + $0x2a0] sm:$0xff]
    %v2864 = vld [vmem:[#allocation10 + $0x2a8] sm:$0xff]
    %v2865 = vld [vmem:[#allocation10 + $0x2b0] sm:$0xff]
    %v2866 = vld [vmem:[#allocation10 + $0x2b8] sm:$0xff]
    %v2867 = vld [vmem:[#allocation10 + $0x2c0] sm:$0xff]
    %v2868 = vld [vmem:[#allocation10 + $0x2c8] sm:$0xff]
    %v2869 = vld [vmem:[#allocation10 + $0x2d0] sm:$0xff]
    %v2870 = vld [vmem:[#allocation10 + $0x2d8] sm:$0xff]
    %v2871 = vld [vmem:[#allocation10 + $0x2e0] sm:$0xff]
    %v2872 = vld [vmem:[#allocation10 + $0x2e8] sm:$0xff]
    %v2873 = vld [vmem:[#allocation10 + $0x2f0] sm:$0xff]
    %v2874 = vld [vmem:[#allocation10 + $0x2f8] sm:$0xff]
    %v2875 = vld [vmem:[#allocation10 + $0x300] sm:$0xff]
    %v2876 = vld [vmem:[#allocation10 + $0x308] sm:$0xff]
    %v2877 = vld [vmem:[#allocation10 + $0x310] sm:$0xff]
    %v2878 = vld [vmem:[#allocation10 + $0x318] sm:$0xff]
    %v2879 = vld [vmem:[#allocation10 + $0x320] sm:$0xff]
    %v2880 = vld [vmem:[#allocation10 + $0x328] sm:$0xff]
    %v2881 = vld [vmem:[#allocation10 + $0x330] sm:$0xff]
    %v2882 = vld [vmem:[#allocation10 + $0x338] sm:$0xff]
    %v2883 = vld [vmem:[#allocation10 + $0x340] sm:$0xff]
    %v2884 = vld [vmem:[#allocation10 + $0x348] sm:$0xff]
    %v2885 = vld [vmem:[#allocation10 + $0x350] sm:$0xff]
    %v2886 = vld [vmem:[#allocation10 + $0x358] sm:$0xff]
    %v2887 = vld [vmem:[#allocation10 + $0x360] sm:$0xff]
    %v2888 = vld [vmem:[#allocation10 + $0x368] sm:$0xff]
    %v2889 = vld [vmem:[#allocation10 + $0x370] sm:$0xff]
    %v2890 = vld [vmem:[#allocation10 + $0x378] sm:$0xff]
    %v2891 = vld [vmem:[#allocation10 + $0x380] sm:$0xff]
    %v2892 = vld [vmem:[#allocation10 + $0x388] sm:$0xff]
    %v2893 = vld [vmem:[#allocation10 + $0x390] sm:$0xff]
    %v2894 = vld [vmem:[#allocation10 + $0x398] sm:$0xff]
    %v2895 = vld [vmem:[#allocation10 + $0x3a0] sm:$0xff]
    %v2896 = vld [vmem:[#allocation10 + $0x3a8] sm:$0xff]
    %v2897 = vld [vmem:[#allocation10 + $0x3b0] sm:$0xff]
    %v2898 = vld [vmem:[#allocation10 + $0x3b8] sm:$0xff]
    %v2899 = vld [vmem:[#allocation10 + $0x3c0] sm:$0xff]
    %v2900 = vld [vmem:[#allocation10 + $0x3c8] sm:$0xff]
    %v2901 = vld [vmem:[#allocation10 + $0x3d0] sm:$0xff]
    %v2902 = vld [vmem:[#allocation10 + $0x3d8] sm:$0xff]
    %v2903 = vld [vmem:[#allocation10 + $0x3e0] sm:$0xff]
    %v2904 = vld [vmem:[#allocation10 + $0x3e8] sm:$0xff]
    %v2905 = vld [vmem:[#allocation10 + $0x3f0] sm:$0xff]
    %v2906 = vld [vmem:[#allocation10 + $0x3f8] sm:$0xff]
    %v2907 = vld [vmem:[%s8] sm:$0xf]
    %v2909 = vlaneseq
    %v2910 = vshrl.u32 %v2909, 7
    %v2911 = vsub.s32 0, %v2910
    %v2912 = vrot.slane %v2907, %v2911
    %v2913 = vlaneseq
    %v2914 = vshrl.u32 %v2913, 7
    %v2915 = vsub.s32 1, %v2914
    %v2916 = vrot.slane %v2907, %v2915
    %v2917 = vlaneseq
    %v2918 = vshrl.u32 %v2917, 7
    %v2919 = vsub.s32 2, %v2918
    %v2920 = vrot.slane %v2907, %v2919
    %v2921 = vlaneseq
    %v2922 = vshrl.u32 %v2921, 7
    %v2923 = vsub.s32 3, %v2922
    %v2924 = vrot.slane %v2907, %v2923
    %v3057 = vunpack.c.l.b16 %v2779
    %v3058 = vunpack.c.h.b16 %v2779
    %v3059 = vunpack.c.l.b16 %v2780
    %v3060 = vunpack.c.h.b16 %v2780
    %v3061 = vunpack.c.l.b16 %v2781
    %v3062 = vunpack.c.h.b16 %v2781
    %v3063 = vunpack.c.l.b16 %v2782
    %v3064 = vunpack.c.h.b16 %v2782
    %v3065 = vunpack.c.l.b16 %v2783
    %v3066 = vunpack.c.h.b16 %v2783
    %v3067 = vunpack.c.l.b16 %v2784
    %v3068 = vunpack.c.h.b16 %v2784
    %v3069 = vunpack.c.l.b16 %v2785
    %v3070 = vunpack.c.h.b16 %v2785
    %v3071 = vunpack.c.l.b16 %v2786
    %v3072 = vunpack.c.h.b16 %v2786
    %v3073 = vunpack.c.l.b16 %v2787
    %v3074 = vunpack.c.h.b16 %v2787
    %v3075 = vunpack.c.l.b16 %v2788
    %v3076 = vunpack.c.h.b16 %v2788
    %v3077 = vunpack.c.l.b16 %v2789
    %v3078 = vunpack.c.h.b16 %v2789
    %v3079 = vunpack.c.l.b16 %v2790
    %v3080 = vunpack.c.h.b16 %v2790
    %v3081 = vunpack.c.l.b16 %v2791
    %v3082 = vunpack.c.h.b16 %v2791
    %v3083 = vunpack.c.l.b16 %v2792
    %v3084 = vunpack.c.h.b16 %v2792
    %v3085 = vunpack.c.l.b16 %v2793
    %v3086 = vunpack.c.h.b16 %v2793
    %v3087 = vunpack.c.l.b16 %v2794
    %v3088 = vunpack.c.h.b16 %v2794
    %v3089 = vunpack.c.l.b16 %v2795
    %v3090 = vunpack.c.h.b16 %v2795
    %v3091 = vunpack.c.l.b16 %v2796
    %v3092 = vunpack.c.h.b16 %v2796
    %v3093 = vunpack.c.l.b16 %v2797
    %v3094 = vunpack.c.h.b16 %v2797
    %v3095 = vunpack.c.l.b16 %v2798
    %v3096 = vunpack.c.h.b16 %v2798
    %v3097 = vunpack.c.l.b16 %v2799
    %v3098 = vunpack.c.h.b16 %v2799
    %v3099 = vunpack.c.l.b16 %v2800
    %v3100 = vunpack.c.h.b16 %v2800
    %v3101 = vunpack.c.l.b16 %v2801
    %v3102 = vunpack.c.h.b16 %v2801
    %v3103 = vunpack.c.l.b16 %v2802
    %v3104 = vunpack.c.h.b16 %v2802
    %v3105 = vunpack.c.l.b16 %v2803
    %v3106 = vunpack.c.h.b16 %v2803
    %v3107 = vunpack.c.l.b16 %v2804
    %v3108 = vunpack.c.h.b16 %v2804
    %v3109 = vunpack.c.l.b16 %v2805
    %v3110 = vunpack.c.h.b16 %v2805
    %v3111 = vunpack.c.l.b16 %v2806
    %v3112 = vunpack.c.h.b16 %v2806
    %v3113 = vunpack.c.l.b16 %v2807
    %v3114 = vunpack.c.h.b16 %v2807
    %v3115 = vunpack.c.l.b16 %v2808
    %v3116 = vunpack.c.h.b16 %v2808
    %v3117 = vunpack.c.l.b16 %v2809
    %v3118 = vunpack.c.h.b16 %v2809
    %v3119 = vunpack.c.l.b16 %v2810
    %v3120 = vunpack.c.h.b16 %v2810
    %v3121 = vunpack.c.l.b16 %v2811
    %v3122 = vunpack.c.h.b16 %v2811
    %v3123 = vunpack.c.l.b16 %v2812
    %v3124 = vunpack.c.h.b16 %v2812
    %v3125 = vunpack.c.l.b16 %v2813
    %v3126 = vunpack.c.h.b16 %v2813
    %v3127 = vunpack.c.l.b16 %v2814
    %v3128 = vunpack.c.h.b16 %v2814
    %v3129 = vunpack.c.l.b16 %v2815
    %v3130 = vunpack.c.h.b16 %v2815
    %v3131 = vunpack.c.l.b16 %v2816
    %v3132 = vunpack.c.h.b16 %v2816
    %v3133 = vunpack.c.l.b16 %v2817
    %v3134 = vunpack.c.h.b16 %v2817
    %v3135 = vunpack.c.l.b16 %v2818
    %v3136 = vunpack.c.h.b16 %v2818
    %v3137 = vunpack.c.l.b16 %v2819
    %v3138 = vunpack.c.h.b16 %v2819
    %v3139 = vunpack.c.l.b16 %v2820
    %v3140 = vunpack.c.h.b16 %v2820
    %v3141 = vunpack.c.l.b16 %v2821
    %v3142 = vunpack.c.h.b16 %v2821
    %v3143 = vunpack.c.l.b16 %v2822
    %v3144 = vunpack.c.h.b16 %v2822
    %v3145 = vunpack.c.l.b16 %v2823
    %v3146 = vunpack.c.h.b16 %v2823
    %v3147 = vunpack.c.l.b16 %v2824
    %v3148 = vunpack.c.h.b16 %v2824
    %v3149 = vunpack.c.l.b16 %v2825
    %v3150 = vunpack.c.h.b16 %v2825
    %v3151 = vunpack.c.l.b16 %v2826
    %v3152 = vunpack.c.h.b16 %v2826
    %v3153 = vunpack.c.l.b16 %v2827
    %v3154 = vunpack.c.h.b16 %v2827
    %v3155 = vunpack.c.l.b16 %v2828
    %v3156 = vunpack.c.h.b16 %v2828
    %v3157 = vunpack.c.l.b16 %v2829
    %v3158 = vunpack.c.h.b16 %v2829
    %v3159 = vunpack.c.l.b16 %v2830
    %v3160 = vunpack.c.h.b16 %v2830
    %v3161 = vunpack.c.l.b16 %v2831
    %v3162 = vunpack.c.h.b16 %v2831
    %v3163 = vunpack.c.l.b16 %v2832
    %v3164 = vunpack.c.h.b16 %v2832
    %v3165 = vunpack.c.l.b16 %v2833
    %v3166 = vunpack.c.h.b16 %v2833
    %v3167 = vunpack.c.l.b16 %v2834
    %v3168 = vunpack.c.h.b16 %v2834
    %v3169 = vunpack.c.l.b16 %v2835
    %v3170 = vunpack.c.h.b16 %v2835
    %v3171 = vunpack.c.l.b16 %v2836
    %v3172 = vunpack.c.h.b16 %v2836
    %v3173 = vunpack.c.l.b16 %v2837
    %v3174 = vunpack.c.h.b16 %v2837
    %v3175 = vunpack.c.l.b16 %v2838
    %v3176 = vunpack.c.h.b16 %v2838
    %v3177 = vunpack.c.l.b16 %v2839
    %v3178 = vunpack.c.h.b16 %v2839
    %v3179 = vunpack.c.l.b16 %v2840
    %v3180 = vunpack.c.h.b16 %v2840
    %v3181 = vunpack.c.l.b16 %v2841
    %v3182 = vunpack.c.h.b16 %v2841
    %v3183 = vunpack.c.l.b16 %v2842
    %v3184 = vunpack.c.h.b16 %v2842
    %v3185 = vunpack.c.l.b16 %v2843
    %v3186 = vunpack.c.h.b16 %v2843
    %v3187 = vunpack.c.l.b16 %v2844
    %v3188 = vunpack.c.h.b16 %v2844
    %v3189 = vunpack.c.l.b16 %v2845
    %v3190 = vunpack.c.h.b16 %v2845
    %v3191 = vunpack.c.l.b16 %v2846
    %v3192 = vunpack.c.h.b16 %v2846
    %v3193 = vunpack.c.l.b16 %v2847
    %v3194 = vunpack.c.h.b16 %v2847
    %v3195 = vunpack.c.l.b16 %v2848
    %v3196 = vunpack.c.h.b16 %v2848
    %v3197 = vunpack.c.l.b16 %v2849
    %v3198 = vunpack.c.h.b16 %v2849
    %v3199 = vunpack.c.l.b16 %v2850
    %v3200 = vunpack.c.h.b16 %v2850
    %v3201 = vunpack.c.l.b16 %v2851
    %v3202 = vunpack.c.h.b16 %v2851
    %v3203 = vunpack.c.l.b16 %v2852
    %v3204 = vunpack.c.h.b16 %v2852
    %v3205 = vunpack.c.l.b16 %v2853
    %v3206 = vunpack.c.h.b16 %v2853
    %v3207 = vunpack.c.l.b16 %v2854
    %v3208 = vunpack.c.h.b16 %v2854
    %v3209 = vunpack.c.l.b16 %v2855
    %v3210 = vunpack.c.h.b16 %v2855
    %v3211 = vunpack.c.l.b16 %v2856
    %v3212 = vunpack.c.h.b16 %v2856
    %v3213 = vunpack.c.l.b16 %v2857
    %v3214 = vunpack.c.h.b16 %v2857
    %v3215 = vunpack.c.l.b16 %v2858
    %v3216 = vunpack.c.h.b16 %v2858
    %v3217 = vunpack.c.l.b16 %v2859
    %v3218 = vunpack.c.h.b16 %v2859
    %v3219 = vunpack.c.l.b16 %v2860
    %v3220 = vunpack.c.h.b16 %v2860
    %v3221 = vunpack.c.l.b16 %v2861
    %v3222 = vunpack.c.h.b16 %v2861
    %v3223 = vunpack.c.l.b16 %v2862
    %v3224 = vunpack.c.h.b16 %v2862
    %v3225 = vunpack.c.l.b16 %v2863
    %v3226 = vunpack.c.h.b16 %v2863
    %v3227 = vunpack.c.l.b16 %v2864
    %v3228 = vunpack.c.h.b16 %v2864
    %v3229 = vunpack.c.l.b16 %v2865
    %v3230 = vunpack.c.h.b16 %v2865
    %v3231 = vunpack.c.l.b16 %v2866
    %v3232 = vunpack.c.h.b16 %v2866
    %v3233 = vunpack.c.l.b16 %v2867
    %v3234 = vunpack.c.h.b16 %v2867
    %v3235 = vunpack.c.l.b16 %v2868
    %v3236 = vunpack.c.h.b16 %v2868
    %v3237 = vunpack.c.l.b16 %v2869
    %v3238 = vunpack.c.h.b16 %v2869
    %v3239 = vunpack.c.l.b16 %v2870
    %v3240 = vunpack.c.h.b16 %v2870
    %v3241 = vunpack.c.l.b16 %v2871
    %v3242 = vunpack.c.h.b16 %v2871
    %v3243 = vunpack.c.l.b16 %v2872
    %v3244 = vunpack.c.h.b16 %v2872
    %v3245 = vunpack.c.l.b16 %v2873
    %v3246 = vunpack.c.h.b16 %v2873
    %v3247 = vunpack.c.l.b16 %v2874
    %v3248 = vunpack.c.h.b16 %v2874
    %v3249 = vunpack.c.l.b16 %v2875
    %v3250 = vunpack.c.h.b16 %v2875
    %v3251 = vunpack.c.l.b16 %v2876
    %v3252 = vunpack.c.h.b16 %v2876
    %v3253 = vunpack.c.l.b16 %v2877
    %v3254 = vunpack.c.h.b16 %v2877
    %v3255 = vunpack.c.l.b16 %v2878
    %v3256 = vunpack.c.h.b16 %v2878
    %v3257 = vunpack.c.l.b16 %v2879
    %v3258 = vunpack.c.h.b16 %v2879
    %v3259 = vunpack.c.l.b16 %v2880
    %v3260 = vunpack.c.h.b16 %v2880
    %v3261 = vunpack.c.l.b16 %v2881
    %v3262 = vunpack.c.h.b16 %v2881
    %v3263 = vunpack.c.l.b16 %v2882
    %v3264 = vunpack.c.h.b16 %v2882
    %v3265 = vunpack.c.l.b16 %v2883
    %v3266 = vunpack.c.h.b16 %v2883
    %v3267 = vunpack.c.l.b16 %v2884
    %v3268 = vunpack.c.h.b16 %v2884
    %v3269 = vunpack.c.l.b16 %v2885
    %v3270 = vunpack.c.h.b16 %v2885
    %v3271 = vunpack.c.l.b16 %v2886
    %v3272 = vunpack.c.h.b16 %v2886
    %v3273 = vunpack.c.l.b16 %v2887
    %v3274 = vunpack.c.h.b16 %v2887
    %v3275 = vunpack.c.l.b16 %v2888
    %v3276 = vunpack.c.h.b16 %v2888
    %v3277 = vunpack.c.l.b16 %v2889
    %v3278 = vunpack.c.h.b16 %v2889
    %v3279 = vunpack.c.l.b16 %v2890
    %v3280 = vunpack.c.h.b16 %v2890
    %v3281 = vunpack.c.l.b16 %v2891
    %v3282 = vunpack.c.h.b16 %v2891
    %v3283 = vunpack.c.l.b16 %v2892
    %v3284 = vunpack.c.h.b16 %v2892
    %v3285 = vunpack.c.l.b16 %v2893
    %v3286 = vunpack.c.h.b16 %v2893
    %v3287 = vunpack.c.l.b16 %v2894
    %v3288 = vunpack.c.h.b16 %v2894
    %v3289 = vunpack.c.l.b16 %v2895
    %v3290 = vunpack.c.h.b16 %v2895
    %v3291 = vunpack.c.l.b16 %v2896
    %v3292 = vunpack.c.h.b16 %v2896
    %v3293 = vunpack.c.l.b16 %v2897
    %v3294 = vunpack.c.h.b16 %v2897
    %v3295 = vunpack.c.l.b16 %v2898
    %v3296 = vunpack.c.h.b16 %v2898
    %v3297 = vunpack.c.l.b16 %v2899
    %v3298 = vunpack.c.h.b16 %v2899
    %v3299 = vunpack.c.l.b16 %v2900
    %v3300 = vunpack.c.h.b16 %v2900
    %v3301 = vunpack.c.l.b16 %v2901
    %v3302 = vunpack.c.h.b16 %v2901
    %v3303 = vunpack.c.l.b16 %v2902
    %v3304 = vunpack.c.h.b16 %v2902
    %v3305 = vunpack.c.l.b16 %v2903
    %v3306 = vunpack.c.h.b16 %v2903
    %v3307 = vunpack.c.l.b16 %v2904
    %v3308 = vunpack.c.h.b16 %v2904
    %v3309 = vunpack.c.l.b16 %v2905
    %v3310 = vunpack.c.h.b16 %v2905
    %v3311 = vunpack.c.l.b16 %v2906
    %v3312 = vunpack.c.h.b16 %v2906
    %v3313 = vpack.c.b16 %v3061, %v3057
    %v3314 = vpack.c.b16 %v3062, %v3058
    %v3315 = vpack.c.b16 %v3063, %v3059
    %v3316 = vpack.c.b16 %v3064, %v3060
    %v3317 = vpack.c.b16 %v3069, %v3065
    %v3318 = vpack.c.b16 %v3070, %v3066
    %v3319 = vpack.c.b16 %v3071, %v3067
    %v3320 = vpack.c.b16 %v3072, %v3068
    %v3321 = vpack.c.b16 %v3077, %v3073
    %v3322 = vpack.c.b16 %v3078, %v3074
    %v3323 = vpack.c.b16 %v3079, %v3075
    %v3324 = vpack.c.b16 %v3080, %v3076
    %v3325 = vpack.c.b16 %v3085, %v3081
    %v3326 = vpack.c.b16 %v3086, %v3082
    %v3327 = vpack.c.b16 %v3087, %v3083
    %v3328 = vpack.c.b16 %v3088, %v3084
    %v3329 = vpack.c.b16 %v3093, %v3089
    %v3330 = vpack.c.b16 %v3094, %v3090
    %v3331 = vpack.c.b16 %v3095, %v3091
    %v3332 = vpack.c.b16 %v3096, %v3092
    %v3333 = vpack.c.b16 %v3101, %v3097
    %v3334 = vpack.c.b16 %v3102, %v3098
    %v3335 = vpack.c.b16 %v3103, %v3099
    %v3336 = vpack.c.b16 %v3104, %v3100
    %v3337 = vpack.c.b16 %v3109, %v3105
    %v3338 = vpack.c.b16 %v3110, %v3106
    %v3339 = vpack.c.b16 %v3111, %v3107
    %v3340 = vpack.c.b16 %v3112, %v3108
    %v3341 = vpack.c.b16 %v3117, %v3113
    %v3342 = vpack.c.b16 %v3118, %v3114
    %v3343 = vpack.c.b16 %v3119, %v3115
    %v3344 = vpack.c.b16 %v3120, %v3116
    %v3345 = vpack.c.b16 %v3125, %v3121
    %v3346 = vpack.c.b16 %v3126, %v3122
    %v3347 = vpack.c.b16 %v3127, %v3123
    %v3348 = vpack.c.b16 %v3128, %v3124
    %v3349 = vpack.c.b16 %v3133, %v3129
    %v3350 = vpack.c.b16 %v3134, %v3130
    %v3351 = vpack.c.b16 %v3135, %v3131
    %v3352 = vpack.c.b16 %v3136, %v3132
    %v3353 = vpack.c.b16 %v3141, %v3137
    %v3354 = vpack.c.b16 %v3142, %v3138
    %v3355 = vpack.c.b16 %v3143, %v3139
    %v3356 = vpack.c.b16 %v3144, %v3140
    %v3357 = vpack.c.b16 %v3149, %v3145
    %v3358 = vpack.c.b16 %v3150, %v3146
    %v3359 = vpack.c.b16 %v3151, %v3147
    %v3360 = vpack.c.b16 %v3152, %v3148
    %v3361 = vpack.c.b16 %v3157, %v3153
    %v3362 = vpack.c.b16 %v3158, %v3154
    %v3363 = vpack.c.b16 %v3159, %v3155
    %v3364 = vpack.c.b16 %v3160, %v3156
    %v3365 = vpack.c.b16 %v3165, %v3161
    %v3366 = vpack.c.b16 %v3166, %v3162
    %v3367 = vpack.c.b16 %v3167, %v3163
    %v3368 = vpack.c.b16 %v3168, %v3164
    %v3369 = vpack.c.b16 %v3173, %v3169
    %v3370 = vpack.c.b16 %v3174, %v3170
    %v3371 = vpack.c.b16 %v3175, %v3171
    %v3372 = vpack.c.b16 %v3176, %v3172
    %v3373 = vpack.c.b16 %v3181, %v3177
    %v3374 = vpack.c.b16 %v3182, %v3178
    %v3375 = vpack.c.b16 %v3183, %v3179
    %v3376 = vpack.c.b16 %v3184, %v3180
    %v3377 = vpack.c.b16 %v3189, %v3185
    %v3378 = vpack.c.b16 %v3190, %v3186
    %v3379 = vpack.c.b16 %v3191, %v3187
    %v3380 = vpack.c.b16 %v3192, %v3188
    %v3381 = vpack.c.b16 %v3197, %v3193
    %v3382 = vpack.c.b16 %v3198, %v3194
    %v3383 = vpack.c.b16 %v3199, %v3195
    %v3384 = vpack.c.b16 %v3200, %v3196
    %v3385 = vpack.c.b16 %v3205, %v3201
    %v3386 = vpack.c.b16 %v3206, %v3202
    %v3387 = vpack.c.b16 %v3207, %v3203
    %v3388 = vpack.c.b16 %v3208, %v3204
    %v3389 = vpack.c.b16 %v3213, %v3209
    %v3390 = vpack.c.b16 %v3214, %v3210
    %v3391 = vpack.c.b16 %v3215, %v3211
    %v3392 = vpack.c.b16 %v3216, %v3212
    %v3393 = vpack.c.b16 %v3221, %v3217
    %v3394 = vpack.c.b16 %v3222, %v3218
    %v3395 = vpack.c.b16 %v3223, %v3219
    %v3396 = vpack.c.b16 %v3224, %v3220
    %v3397 = vpack.c.b16 %v3229, %v3225
    %v3398 = vpack.c.b16 %v3230, %v3226
    %v3399 = vpack.c.b16 %v3231, %v3227
    %v3400 = vpack.c.b16 %v3232, %v3228
    %v3401 = vpack.c.b16 %v3237, %v3233
    %v3402 = vpack.c.b16 %v3238, %v3234
    %v3403 = vpack.c.b16 %v3239, %v3235
    %v3404 = vpack.c.b16 %v3240, %v3236
    %v3405 = vpack.c.b16 %v3245, %v3241
    %v3406 = vpack.c.b16 %v3246, %v3242
    %v3407 = vpack.c.b16 %v3247, %v3243
    %v3408 = vpack.c.b16 %v3248, %v3244
    %v3409 = vpack.c.b16 %v3253, %v3249
    %v3410 = vpack.c.b16 %v3254, %v3250
    %v3411 = vpack.c.b16 %v3255, %v3251
    %v3412 = vpack.c.b16 %v3256, %v3252
    %v3413 = vpack.c.b16 %v3261, %v3257
    %v3414 = vpack.c.b16 %v3262, %v3258
    %v3415 = vpack.c.b16 %v3263, %v3259
    %v3416 = vpack.c.b16 %v3264, %v3260
    %v3417 = vpack.c.b16 %v3269, %v3265
    %v3418 = vpack.c.b16 %v3270, %v3266
    %v3419 = vpack.c.b16 %v3271, %v3267
    %v3420 = vpack.c.b16 %v3272, %v3268
    %v3421 = vpack.c.b16 %v3277, %v3273
    %v3422 = vpack.c.b16 %v3278, %v3274
    %v3423 = vpack.c.b16 %v3279, %v3275
    %v3424 = vpack.c.b16 %v3280, %v3276
    %v3425 = vpack.c.b16 %v3285, %v3281
    %v3426 = vpack.c.b16 %v3286, %v3282
    %v3427 = vpack.c.b16 %v3287, %v3283
    %v3428 = vpack.c.b16 %v3288, %v3284
    %v3429 = vpack.c.b16 %v3293, %v3289
    %v3430 = vpack.c.b16 %v3294, %v3290
    %v3431 = vpack.c.b16 %v3295, %v3291
    %v3432 = vpack.c.b16 %v3296, %v3292
    %v3433 = vpack.c.b16 %v3301, %v3297
    %v3434 = vpack.c.b16 %v3302, %v3298
    %v3435 = vpack.c.b16 %v3303, %v3299
    %v3436 = vpack.c.b16 %v3304, %v3300
    %v3437 = vpack.c.b16 %v3309, %v3305
    %v3438 = vpack.c.b16 %v3310, %v3306
    %v3439 = vpack.c.b16 %v3311, %v3307
    %v3440 = vpack.c.b16 %v3312, %v3308
    %3569 = vmatprep.subr.bf16.mxu0 %v3314
    %3570 = vmatpush1.bf16.msra.mxu0 %v3313
    %3571 = vmatprep.subr.bf16.mxu0 %v3318
    %3572 = vmatpush1.bf16.msra.mxu0 %v3317
    %3573 = vmatprep.subr.bf16.mxu0 %v3322
    %3574 = vmatpush1.bf16.msra.mxu0 %v3321
    %3575 = vmatprep.subr.bf16.mxu0 %v3326
    %3576 = vmatpush1.bf16.msra.mxu0 %v3325
    %3577 = vmatprep.subr.bf16.mxu0 %v3330
    %3578 = vmatpush1.bf16.msra.mxu0 %v3329
    %3579 = vmatprep.subr.bf16.mxu0 %v3334
    %3580 = vmatpush1.bf16.msra.mxu0 %v3333
    %3581 = vmatprep.subr.bf16.mxu0 %v3338
    %3582 = vmatpush1.bf16.msra.mxu0 %v3337
    %3583 = vmatprep.subr.bf16.mxu0 %v3342
    %3584 = vmatpush1.bf16.msra.mxu0 %v3341
    %3585 = vmatprep.subr.bf16.mxu0 %v3346
    %3586 = vmatpush1.bf16.msra.mxu0 %v3345
    %3587 = vmatprep.subr.bf16.mxu0 %v3350
    %3588 = vmatpush1.bf16.msra.mxu0 %v3349
    %3589 = vmatprep.subr.bf16.mxu0 %v3354
    %3590 = vmatpush1.bf16.msra.mxu0 %v3353
    %3591 = vmatprep.subr.bf16.mxu0 %v3358
    %3592 = vmatpush1.bf16.msra.mxu0 %v3357
    %3593 = vmatprep.subr.bf16.mxu0 %v3362
    %3594 = vmatpush1.bf16.msra.mxu0 %v3361
    %3595 = vmatprep.subr.bf16.mxu0 %v3366
    %3596 = vmatpush1.bf16.msra.mxu0 %v3365
    %3597 = vmatprep.subr.bf16.mxu0 %v3370
    %3598 = vmatpush1.bf16.msra.mxu0 %v3369
    %3599 = vmatprep.subr.bf16.mxu0 %v3374
    %3600 = vmatpush1.bf16.msra.mxu0 %v3373
    %3601 = vmatprep.mubr.bf16.mxu0 %v2764
    %3602 = vmatmul.mubr.bf16.gmra.mrb[0].mxu0 %v2763
    %v3603 = vpop.f32.mrb[0].mxu0
    %v3604 = vadd.f32 %v2912, %v3603
    %v3605 = vpop.f32.mrb[0].mxu0
    %v3606 = vadd.f32 %v2916, %v3605
    %v3607 = vpop.f32.mrb[0].mxu0
    %v3608 = vadd.f32 %v2912, %v3607
    %v3609 = vpop.f32.mrb[0].mxu0
    %v3610 = vadd.f32 %v2916, %v3609
    %3611 = vmatprep.mubr.bf16.mxu0 %v2768
    %3612 = vmatmul.mubr.bf16.gmra.mrb[0].mxu0 %v2767
    %v3613 = vpop.f32.mrb[0].mxu0
    %v3614 = vadd.f32 %v2912, %v3613
    %v3615 = vpop.f32.mrb[0].mxu0
    %v3616 = vadd.f32 %v2916, %v3615
    %v3617 = vpop.f32.mrb[0].mxu0
    %v3618 = vadd.f32 %v2912, %v3617
    %v3619 = vpop.f32.mrb[0].mxu0
    %v3620 = vadd.f32 %v2916, %v3619
    %3621 = vmatprep.mubr.bf16.mxu0 %v2772
    %3622 = vmatmul.mubr.bf16.gmra.mrb[0].mxu0 %v2771
    %v3623 = vpop.f32.mrb[0].mxu0
    %v3624 = vadd.f32 %v2912, %v3623
    %v3625 = vpop.f32.mrb[0].mxu0
    %v3626 = vadd.f32 %v2916, %v3625
    %v3627 = vpop.f32.mrb[0].mxu0
    %v3628 = vadd.f32 %v2912, %v3627
    %v3629 = vpop.f32.mrb[0].mxu0
    %v3630 = vadd.f32 %v2916, %v3629
    %3631 = vmatprep.mubr.bf16.mxu0 %v2776
    %3632 = vmatmul.mubr.bf16.gmra.mrb[0].mxu0 %v2775
    %v3633 = vpop.f32.mrb[0].mxu0
    %v3634 = vadd.f32 %v2912, %v3633
    %v3635 = vpop.f32.mrb[0].mxu0
    %v3636 = vadd.f32 %v2916, %v3635
    %v3637 = vpop.f32.mrb[0].mxu0
    %v3638 = vadd.f32 %v2912, %v3637
    %v3639 = vpop.f32.mrb[0].mxu0
    %v3640 = vadd.f32 %v2916, %v3639
    %3641 = vdwg.mxu0
    %3642 = vmatprep.subr.bf16.mxu0 %v3378
    %3643 = vmatpush1.bf16.msra.mxu0 %v3377
    %3644 = vmatprep.subr.bf16.mxu0 %v3382
    %3645 = vmatpush1.bf16.msra.mxu0 %v3381
    %3646 = vmatprep.subr.bf16.mxu0 %v3386
    %3647 = vmatpush1.bf16.msra.mxu0 %v3385
    %3648 = vmatprep.subr.bf16.mxu0 %v3390
    %3649 = vmatpush1.bf16.msra.mxu0 %v3389
    %3650 = vmatprep.subr.bf16.mxu0 %v3394
    %3651 = vmatpush1.bf16.msra.mxu0 %v3393
    %3652 = vmatprep.subr.bf16.mxu0 %v3398
    %3653 = vmatpush1.bf16.msra.mxu0 %v3397
    %3654 = vmatprep.subr.bf16.mxu0 %v3402
    %3655 = vmatpush1.bf16.msra.mxu0 %v3401
    %3656 = vmatprep.subr.bf16.mxu0 %v3406
    %3657 = vmatpush1.bf16.msra.mxu0 %v3405
    %3658 = vmatprep.subr.bf16.mxu0 %v3410
    %3659 = vmatpush1.bf16.msra.mxu0 %v3409
    %3660 = vmatprep.subr.bf16.mxu0 %v3414
    %3661 = vmatpush1.bf16.msra.mxu0 %v3413
    %3662 = vmatprep.subr.bf16.mxu0 %v3418
    %3663 = vmatpush1.bf16.msra.mxu0 %v3417
    %3664 = vmatprep.subr.bf16.mxu0 %v3422
    %3665 = vmatpush1.bf16.msra.mxu0 %v3421
    %3666 = vmatprep.subr.bf16.mxu0 %v3426
    %3667 = vmatpush1.bf16.msra.mxu0 %v3425
    %3668 = vmatprep.subr.bf16.mxu0 %v3430
    %3669 = vmatpush1.bf16.msra.mxu0 %v3429
    %3670 = vmatprep.subr.bf16.mxu0 %v3434
    %3671 = vmatpush1.bf16.msra.mxu0 %v3433
    %3672 = vmatprep.subr.bf16.mxu0 %v3438
    %3673 = vmatpush1.bf16.msra.mxu0 %v3437
    %3674 = vmatprep.mubr.bf16.mxu0 %v2766
    %3675 = vmatmul.mubr.bf16.gmra.mrb[0].mxu0 %v2765
    %v3676 = vpop.f32.mrb[0].mxu0
    %v3677 = vadd.f32 %v3604, %v3676
    %v3678 = vpop.f32.mrb[0].mxu0
    %v3679 = vadd.f32 %v3606, %v3678
    %v3680 = vpop.f32.mrb[0].mxu0
    %v3681 = vadd.f32 %v3608, %v3680
    %v3682 = vpop.f32.mrb[0].mxu0
    %v3683 = vadd.f32 %v3610, %v3682
    %3684 = vmatprep.mubr.bf16.mxu0 %v2770
    %3685 = vmatmul.mubr.bf16.gmra.mrb[0].mxu0 %v2769
    %v3686 = vpop.f32.mrb[0].mxu0
    %v3687 = vadd.f32 %v3614, %v3686
    %v3688 = vpop.f32.mrb[0].mxu0
    %v3689 = vadd.f32 %v3616, %v3688
    %v3690 = vpop.f32.mrb[0].mxu0
    %v3691 = vadd.f32 %v3618, %v3690
    %v3692 = vpop.f32.mrb[0].mxu0
    %v3693 = vadd.f32 %v3620, %v3692
    %3694 = vmatprep.mubr.bf16.mxu0 %v2774
    %3695 = vmatmul.mubr.bf16.gmra.mrb[0].mxu0 %v2773
    %v3696 = vpop.f32.mrb[0].mxu0
    %v3697 = vadd.f32 %v3624, %v3696
    %v3698 = vpop.f32.mrb[0].mxu0
    %v3699 = vadd.f32 %v3626, %v3698
    %v3700 = vpop.f32.mrb[0].mxu0
    %v3701 = vadd.f32 %v3628, %v3700
    %v3702 = vpop.f32.mrb[0].mxu0
    %v3703 = vadd.f32 %v3630, %v3702
    %3704 = vmatprep.mubr.bf16.mxu0 %v2778
    %3705 = vmatmul.mubr.bf16.gmra.mrb[0].mxu0 %v2777
    %v3706 = vpop.f32.mrb[0].mxu0
    %v3707 = vadd.f32 %v3634, %v3706
    %v3708 = vpop.f32.mrb[0].mxu0
    %v3709 = vadd.f32 %v3636, %v3708
    %v3710 = vpop.f32.mrb[0].mxu0
    %v3711 = vadd.f32 %v3638, %v3710
    %v3712 = vpop.f32.mrb[0].mxu0
    %v3713 = vadd.f32 %v3640, %v3712
    %3714 = vdwg.mxu0
    %3715 = vmatprep.subr.bf16.mxu0 %v3316
    %3716 = vmatpush1.bf16.msra.mxu0 %v3315
    %3717 = vmatprep.subr.bf16.mxu0 %v3320
    %3718 = vmatpush1.bf16.msra.mxu0 %v3319
    %3719 = vmatprep.subr.bf16.mxu0 %v3324
    %3720 = vmatpush1.bf16.msra.mxu0 %v3323
    %3721 = vmatprep.subr.bf16.mxu0 %v3328
    %3722 = vmatpush1.bf16.msra.mxu0 %v3327
    %3723 = vmatprep.subr.bf16.mxu0 %v3332
    %3724 = vmatpush1.bf16.msra.mxu0 %v3331
    %3725 = vmatprep.subr.bf16.mxu0 %v3336
    %3726 = vmatpush1.bf16.msra.mxu0 %v3335
    %3727 = vmatprep.subr.bf16.mxu0 %v3340
    %3728 = vmatpush1.bf16.msra.mxu0 %v3339
    %3729 = vmatprep.subr.bf16.mxu0 %v3344
    %3730 = vmatpush1.bf16.msra.mxu0 %v3343
    %3731 = vmatprep.subr.bf16.mxu0 %v3348
    %3732 = vmatpush1.bf16.msra.mxu0 %v3347
    %3733 = vmatprep.subr.bf16.mxu0 %v3352
    %3734 = vmatpush1.bf16.msra.mxu0 %v3351
    %3735 = vmatprep.subr.bf16.mxu0 %v3356
    %3736 = vmatpush1.bf16.msra.mxu0 %v3355
    %3737 = vmatprep.subr.bf16.mxu0 %v3360
    %3738 = vmatpush1.bf16.msra.mxu0 %v3359
    %3739 = vmatprep.subr.bf16.mxu0 %v3364
    %3740 = vmatpush1.bf16.msra.mxu0 %v3363
    %3741 = vmatprep.subr.bf16.mxu0 %v3368
    %3742 = vmatpush1.bf16.msra.mxu0 %v3367
    %3743 = vmatprep.subr.bf16.mxu0 %v3372
    %3744 = vmatpush1.bf16.msra.mxu0 %v3371
    %3745 = vmatprep.subr.bf16.mxu0 %v3376
    %3746 = vmatpush1.bf16.msra.mxu0 %v3375
    %3747 = vmatprep.mubr.bf16.mxu0 %v2764
    %3748 = vmatmul.mubr.bf16.gmra.mrb[0].mxu0 %v2763
    %v3749 = vpop.f32.mrb[0].mxu0
    %v3750 = vadd.f32 %v2920, %v3749
    %v3751 = vpop.f32.mrb[0].mxu0
    %v3752 = vadd.f32 %v2924, %v3751
    %v3753 = vpop.f32.mrb[0].mxu0
    %v3754 = vadd.f32 %v2920, %v3753
    %v3755 = vpop.f32.mrb[0].mxu0
    %v3756 = vadd.f32 %v2924, %v3755
    %3757 = vmatprep.mubr.bf16.mxu0 %v2768
    %3758 = vmatmul.mubr.bf16.gmra.mrb[0].mxu0 %v2767
    %v3759 = vpop.f32.mrb[0].mxu0
    %v3760 = vadd.f32 %v2920, %v3759
    %v3761 = vpop.f32.mrb[0].mxu0
    %v3762 = vadd.f32 %v2924, %v3761
    %v3763 = vpop.f32.mrb[0].mxu0
    %v3764 = vadd.f32 %v2920, %v3763
    %v3765 = vpop.f32.mrb[0].mxu0
    %v3766 = vadd.f32 %v2924, %v3765
    %3767 = vmatprep.mubr.bf16.mxu0 %v2772
    %3768 = vmatmul.mubr.bf16.gmra.mrb[0].mxu0 %v2771
    %v3769 = vpop.f32.mrb[0].mxu0
    %v3770 = vadd.f32 %v2920, %v3769
    %v3771 = vpop.f32.mrb[0].mxu0
    %v3772 = vadd.f32 %v2924, %v3771
    %v3773 = vpop.f32.mrb[0].mxu0
    %v3774 = vadd.f32 %v2920, %v3773
    %v3775 = vpop.f32.mrb[0].mxu0
    %v3776 = vadd.f32 %v2924, %v3775
    %3777 = vmatprep.mubr.bf16.mxu0 %v2776
    %3778 = vmatmul.mubr.bf16.gmra.mrb[0].mxu0 %v2775
    %v3779 = vpop.f32.mrb[0].mxu0
    %v3780 = vadd.f32 %v2920, %v3779
    %v3781 = vpop.f32.mrb[0].mxu0
    %v3782 = vadd.f32 %v2924, %v3781
    %v3783 = vpop.f32.mrb[0].mxu0
    %v3784 = vadd.f32 %v2920, %v3783
    %v3785 = vpop.f32.mrb[0].mxu0
    %v3786 = vadd.f32 %v2924, %v3785
    %3787 = vdwg.mxu0
    %3788 = vmatprep.subr.bf16.mxu0 %v3380
    %3789 = vmatpush1.bf16.msra.mxu0 %v3379
    %3790 = vmatprep.subr.bf16.mxu0 %v3384
    %3791 = vmatpush1.bf16.msra.mxu0 %v3383
    %3792 = vmatprep.subr.bf16.mxu0 %v3388
    %3793 = vmatpush1.bf16.msra.mxu0 %v3387
    %3794 = vmatprep.subr.bf16.mxu0 %v3392
    %3795 = vmatpush1.bf16.msra.mxu0 %v3391
    %3796 = vmatprep.subr.bf16.mxu0 %v3396
    %3797 = vmatpush1.bf16.msra.mxu0 %v3395
    %3798 = vmatprep.subr.bf16.mxu0 %v3400
    %3799 = vmatpush1.bf16.msra.mxu0 %v3399
    %3800 = vmatprep.subr.bf16.mxu0 %v3404
    %3801 = vmatpush1.bf16.msra.mxu0 %v3403
    %3802 = vmatprep.subr.bf16.mxu0 %v3408
    %3803 = vmatpush1.bf16.msra.mxu0 %v3407
    %3804 = vmatprep.subr.bf16.mxu0 %v3412
    %3805 = vmatpush1.bf16.msra.mxu0 %v3411
    %3806 = vmatprep.subr.bf16.mxu0 %v3416
    %3807 = vmatpush1.bf16.msra.mxu0 %v3415
    %3808 = vmatprep.subr.bf16.mxu0 %v3420
    %3809 = vmatpush1.bf16.msra.mxu0 %v3419
    %3810 = vmatprep.subr.bf16.mxu0 %v3424
    %3811 = vmatpush1.bf16.msra.mxu0 %v3423
    %3812 = vmatprep.subr.bf16.mxu0 %v3428
    %3813 = vmatpush1.bf16.msra.mxu0 %v3427
    %3814 = vmatprep.subr.bf16.mxu0 %v3432
    %3815 = vmatpush1.bf16.msra.mxu0 %v3431
    %3816 = vmatprep.subr.bf16.mxu0 %v3436
    %3817 = vmatpush1.bf16.msra.mxu0 %v3435
    %3818 = vmatprep.subr.bf16.mxu0 %v3440
    %3819 = vmatpush1.bf16.msra.mxu0 %v3439
    %3820 = vmatprep.mubr.bf16.mxu0 %v2766
    %3821 = vmatmul.mubr.bf16.gmra.mrb[0].mxu0 %v2765
    %v3822 = vpop.f32.mrb[0].mxu0
    %v3823 = vadd.f32 %v3750, %v3822
    %v3824 = vpop.f32.mrb[0].mxu0
    %v3825 = vadd.f32 %v3752, %v3824
    %v3826 = vpop.f32.mrb[0].mxu0
    %v3827 = vadd.f32 %v3754, %v3826
    %v3828 = vpop.f32.mrb[0].mxu0
    %v3829 = vadd.f32 %v3756, %v3828
    %3830 = vmatprep.mubr.bf16.mxu0 %v2770
    %3831 = vmatmul.mubr.bf16.gmra.mrb[0].mxu0 %v2769
    %v3832 = vpop.f32.mrb[0].mxu0
    %v3833 = vadd.f32 %v3760, %v3832
    %v3834 = vpop.f32.mrb[0].mxu0
    %v3835 = vadd.f32 %v3762, %v3834
    %v3836 = vpop.f32.mrb[0].mxu0
    %v3837 = vadd.f32 %v3764, %v3836
    %v3838 = vpop.f32.mrb[0].mxu0
    %v3839 = vadd.f32 %v3766, %v3838
    %3840 = vmatprep.mubr.bf16.mxu0 %v2774
    %3841 = vmatmul.mubr.bf16.gmra.mrb[0].mxu0 %v2773
    %v3842 = vpop.f32.mrb[0].mxu0
    %v3843 = vadd.f32 %v3770, %v3842
    %v3844 = vpop.f32.mrb[0].mxu0
    %v3845 = vadd.f32 %v3772, %v3844
    %v3846 = vpop.f32.mrb[0].mxu0
    %v3847 = vadd.f32 %v3774, %v3846
    %v3848 = vpop.f32.mrb[0].mxu0
    %v3849 = vadd.f32 %v3776, %v3848
    %3850 = vmatprep.mubr.bf16.mxu0 %v2778
    %3851 = vmatmul.mubr.bf16.gmra.mrb[0].mxu0 %v2777
    %v3852 = vpop.f32.mrb[0].mxu0
    %v3853 = vadd.f32 %v3780, %v3852
    %v3854 = vpop.f32.mrb[0].mxu0
    %v3855 = vadd.f32 %v3782, %v3854
    %v3856 = vpop.f32.mrb[0].mxu0
    %v3857 = vadd.f32 %v3784, %v3856
    %v3858 = vpop.f32.mrb[0].mxu0
    %v3859 = vadd.f32 %v3786, %v3858
    %3860 = vdwg.mxu0
    %v3861 = vmax.f32 %v3677, 0.0
    %v3862 = vmax.f32 %v3679, 0.0
    %v3863 = vmax.f32 %v3823, 0.0
    %v3864 = vmax.f32 %v3825, 0.0
    %v3865 = vmax.f32 %v3681, 0.0
    %v3866 = vmax.f32 %v3683, 0.0
    %v3867 = vmax.f32 %v3827, 0.0
    %v3868 = vmax.f32 %v3829, 0.0
    %v3869 = vmax.f32 %v3687, 0.0
    %v3870 = vmax.f32 %v3689, 0.0
    %v3871 = vmax.f32 %v3833, 0.0
    %v3872 = vmax.f32 %v3835, 0.0
    %v3873 = vmax.f32 %v3691, 0.0
    %v3874 = vmax.f32 %v3693, 0.0
    %v3875 = vmax.f32 %v3837, 0.0
    %v3876 = vmax.f32 %v3839, 0.0
    %v3877 = vmax.f32 %v3697, 0.0
    %v3878 = vmax.f32 %v3699, 0.0
    %v3879 = vmax.f32 %v3843, 0.0
    %v3880 = vmax.f32 %v3845, 0.0
    %v3881 = vmax.f32 %v3701, 0.0
    %v3882 = vmax.f32 %v3703, 0.0
    %v3883 = vmax.f32 %v3847, 0.0
    %v3884 = vmax.f32 %v3849, 0.0
    %v3885 = vmax.f32 %v3707, 0.0
    %v3886 = vmax.f32 %v3709, 0.0
    %v3887 = vmax.f32 %v3853, 0.0
    %v3888 = vmax.f32 %v3855, 0.0
    %v3889 = vmax.f32 %v3711, 0.0
    %v3890 = vmax.f32 %v3713, 0.0
    %v3891 = vmax.f32 %v3857, 0.0
    %v3892 = vmax.f32 %v3859, 0.0
    %v3893 = vpack.c.bf16 %v3865, %v3861
    %v3894 = vpack.c.bf16 %v3866, %v3862
    %v3895 = vpack.c.bf16 %v3867, %v3863
    %v3896 = vpack.c.bf16 %v3868, %v3864
    %v3897 = vpack.c.bf16 %v3873, %v3869
    %v3898 = vpack.c.bf16 %v3874, %v3870
    %v3899 = vpack.c.bf16 %v3875, %v3871
    %v3900 = vpack.c.bf16 %v3876, %v3872
    %v3901 = vpack.c.bf16 %v3881, %v3877
    %v3902 = vpack.c.bf16 %v3882, %v3878
    %v3903 = vpack.c.bf16 %v3883, %v3879
    %v3904 = vpack.c.bf16 %v3884, %v3880
    %v3905 = vpack.c.bf16 %v3889, %v3885
    %v3906 = vpack.c.bf16 %v3890, %v3886
    %v3907 = vpack.c.bf16 %v3891, %v3887
    %v3908 = vpack.c.bf16 %v3892, %v3888
    %v3909 = vld [vmem:[#allocation11] sm:$0xf]
    %v3910 = vld [vmem:[#allocation11 + $0x4] sm:$0xf]
    %v3911 = vld [vmem:[#allocation11 + $0x8] sm:$0xf]
    %v3912 = vld [vmem:[#allocation11 + $0xc] sm:$0xf]
    %v3913 = vld [vmem:[#allocation11 + $0x10] sm:$0xf]
    %v3914 = vld [vmem:[#allocation11 + $0x14] sm:$0xf]
    %v3915 = vld [vmem:[#allocation11 + $0x18] sm:$0xf]
    %v3916 = vld [vmem:[#allocation11 + $0x1c] sm:$0xf]
    %v3917 = vld [vmem:[#allocation11 + $0x20] sm:$0xf]
    %v3918 = vld [vmem:[#allocation11 + $0x24] sm:$0xf]
    %v3919 = vld [vmem:[#allocation11 + $0x28] sm:$0xf]
    %v3920 = vld [vmem:[#allocation11 + $0x2c] sm:$0xf]
    %v3921 = vld [vmem:[#allocation11 + $0x30] sm:$0xf]
    %v3922 = vld [vmem:[#allocation11 + $0x34] sm:$0xf]
    %v3923 = vld [vmem:[#allocation11 + $0x38] sm:$0xf]
    %v3924 = vld [vmem:[#allocation11 + $0x3c] sm:$0xf]
    %v3925 = vld [vmem:[#allocation11 + $0x40] sm:$0xf]
    %v3926 = vld [vmem:[#allocation11 + $0x44] sm:$0xf]
    %v3927 = vld [vmem:[#allocation11 + $0x48] sm:$0xf]
    %v3928 = vld [vmem:[#allocation11 + $0x4c] sm:$0xf]
    %v3929 = vld [vmem:[#allocation11 + $0x50] sm:$0xf]
    %v3930 = vld [vmem:[#allocation11 + $0x54] sm:$0xf]
    %v3931 = vld [vmem:[#allocation11 + $0x58] sm:$0xf]
    %v3932 = vld [vmem:[#allocation11 + $0x5c] sm:$0xf]
    %v3933 = vld [vmem:[#allocation11 + $0x60] sm:$0xf]
    %v3934 = vld [vmem:[#allocation11 + $0x64] sm:$0xf]
    %v3935 = vld [vmem:[#allocation11 + $0x68] sm:$0xf]
    %v3936 = vld [vmem:[#allocation11 + $0x6c] sm:$0xf]
    %v3937 = vld [vmem:[#allocation11 + $0x70] sm:$0xf]
    %v3938 = vld [vmem:[#allocation11 + $0x74] sm:$0xf]
    %v3939 = vld [vmem:[#allocation11 + $0x78] sm:$0xf]
    %v3940 = vld [vmem:[#allocation11 + $0x7c] sm:$0xf]
    %v3941 = vld [vmem:[#allocation11 + $0x80] sm:$0xf]
    %v3942 = vld [vmem:[#allocation11 + $0x84] sm:$0xf]
    %v3943 = vld [vmem:[#allocation11 + $0x88] sm:$0xf]
    %v3944 = vld [vmem:[#allocation11 + $0x8c] sm:$0xf]
    %v3945 = vld [vmem:[#allocation11 + $0x90] sm:$0xf]
    %v3946 = vld [vmem:[#allocation11 + $0x94] sm:$0xf]
    %v3947 = vld [vmem:[#allocation11 + $0x98] sm:$0xf]
    %v3948 = vld [vmem:[#allocation11 + $0x9c] sm:$0xf]
    %v3949 = vld [vmem:[#allocation11 + $0xa0] sm:$0xf]
    %v3950 = vld [vmem:[#allocation11 + $0xa4] sm:$0xf]
    %v3951 = vld [vmem:[#allocation11 + $0xa8] sm:$0xf]
    %v3952 = vld [vmem:[#allocation11 + $0xac] sm:$0xf]
    %v3953 = vld [vmem:[#allocation11 + $0xb0] sm:$0xf]
    %v3954 = vld [vmem:[#allocation11 + $0xb4] sm:$0xf]
    %v3955 = vld [vmem:[#allocation11 + $0xb8] sm:$0xf]
    %v3956 = vld [vmem:[#allocation11 + $0xbc] sm:$0xf]
    %v3957 = vld [vmem:[#allocation11 + $0xc0] sm:$0xf]
    %v3958 = vld [vmem:[#allocation11 + $0xc4] sm:$0xf]
    %v3959 = vld [vmem:[#allocation11 + $0xc8] sm:$0xf]
    %v3960 = vld [vmem:[#allocation11 + $0xcc] sm:$0xf]
    %v3961 = vld [vmem:[#allocation11 + $0xd0] sm:$0xf]
    %v3962 = vld [vmem:[#allocation11 + $0xd4] sm:$0xf]
    %v3963 = vld [vmem:[#allocation11 + $0xd8] sm:$0xf]
    %v3964 = vld [vmem:[#allocation11 + $0xdc] sm:$0xf]
    %v3965 = vld [vmem:[#allocation11 + $0xe0] sm:$0xf]
    %v3966 = vld [vmem:[#allocation11 + $0xe4] sm:$0xf]
    %v3967 = vld [vmem:[#allocation11 + $0xe8] sm:$0xf]
    %v3968 = vld [vmem:[#allocation11 + $0xec] sm:$0xf]
    %v3969 = vld [vmem:[#allocation11 + $0xf0] sm:$0xf]
    %v3970 = vld [vmem:[#allocation11 + $0xf4] sm:$0xf]
    %v3971 = vld [vmem:[#allocation11 + $0xf8] sm:$0xf]
    %v3972 = vld [vmem:[#allocation11 + $0xfc] sm:$0xf]
    %v3973 = vld [vmem:[%s10] sm:$0x1]
    %v3975 = vlaneseq
    %v3976 = vshrl.u32 %v3975, 7
    %v3977 = vsub.s32 0, %v3976
    %v3978 = vrot.slane %v3973, %v3977
    %v4044 = vunpack.c.l.b16 %v3909
    %v4045 = vunpack.c.l.b16 %v3910
    %v4046 = vunpack.c.l.b16 %v3911
    %v4047 = vunpack.c.l.b16 %v3912
    %v4048 = vunpack.c.l.b16 %v3913
    %v4049 = vunpack.c.l.b16 %v3914
    %v4050 = vunpack.c.l.b16 %v3915
    %v4051 = vunpack.c.l.b16 %v3916
    %v4052 = vunpack.c.l.b16 %v3917
    %v4053 = vunpack.c.l.b16 %v3918
    %v4054 = vunpack.c.l.b16 %v3919
    %v4055 = vunpack.c.l.b16 %v3920
    %v4056 = vunpack.c.l.b16 %v3921
    %v4057 = vunpack.c.l.b16 %v3922
    %v4058 = vunpack.c.l.b16 %v3923
    %v4059 = vunpack.c.l.b16 %v3924
    %v4060 = vunpack.c.l.b16 %v3925
    %v4061 = vunpack.c.l.b16 %v3926
    %v4062 = vunpack.c.l.b16 %v3927
    %v4063 = vunpack.c.l.b16 %v3928
    %v4064 = vunpack.c.l.b16 %v3929
    %v4065 = vunpack.c.l.b16 %v3930
    %v4066 = vunpack.c.l.b16 %v3931
    %v4067 = vunpack.c.l.b16 %v3932
    %v4068 = vunpack.c.l.b16 %v3933
    %v4069 = vunpack.c.l.b16 %v3934
    %v4070 = vunpack.c.l.b16 %v3935
    %v4071 = vunpack.c.l.b16 %v3936
    %v4072 = vunpack.c.l.b16 %v3937
    %v4073 = vunpack.c.l.b16 %v3938
    %v4074 = vunpack.c.l.b16 %v3939
    %v4075 = vunpack.c.l.b16 %v3940
    %v4076 = vunpack.c.l.b16 %v3941
    %v4077 = vunpack.c.l.b16 %v3942
    %v4078 = vunpack.c.l.b16 %v3943
    %v4079 = vunpack.c.l.b16 %v3944
    %v4080 = vunpack.c.l.b16 %v3945
    %v4081 = vunpack.c.l.b16 %v3946
    %v4082 = vunpack.c.l.b16 %v3947
    %v4083 = vunpack.c.l.b16 %v3948
    %v4084 = vunpack.c.l.b16 %v3949
    %v4085 = vunpack.c.l.b16 %v3950
    %v4086 = vunpack.c.l.b16 %v3951
    %v4087 = vunpack.c.l.b16 %v3952
    %v4088 = vunpack.c.l.b16 %v3953
    %v4089 = vunpack.c.l.b16 %v3954
    %v4090 = vunpack.c.l.b16 %v3955
    %v4091 = vunpack.c.l.b16 %v3956
    %v4092 = vunpack.c.l.b16 %v3957
    %v4093 = vunpack.c.l.b16 %v3958
    %v4094 = vunpack.c.l.b16 %v3959
    %v4095 = vunpack.c.l.b16 %v3960
    %v4096 = vunpack.c.l.b16 %v3961
    %v4097 = vunpack.c.l.b16 %v3962
    %v4098 = vunpack.c.l.b16 %v3963
    %v4099 = vunpack.c.l.b16 %v3964
    %v4100 = vunpack.c.l.b16 %v3965
    %v4101 = vunpack.c.l.b16 %v3966
    %v4102 = vunpack.c.l.b16 %v3967
    %v4103 = vunpack.c.l.b16 %v3968
    %v4104 = vunpack.c.l.b16 %v3969
    %v4105 = vunpack.c.l.b16 %v3970
    %v4106 = vunpack.c.l.b16 %v3971
    %v4107 = vunpack.c.l.b16 %v3972
    %v4108 = vpack.c.b16 %v4045, %v4044
    %v4109 = vpack.c.b16 %v4047, %v4046
    %v4110 = vpack.c.b16 %v4049, %v4048
    %v4111 = vpack.c.b16 %v4051, %v4050
    %v4112 = vpack.c.b16 %v4053, %v4052
    %v4113 = vpack.c.b16 %v4055, %v4054
    %v4114 = vpack.c.b16 %v4057, %v4056
    %v4115 = vpack.c.b16 %v4059, %v4058
    %v4116 = vpack.c.b16 %v4061, %v4060
    %v4117 = vpack.c.b16 %v4063, %v4062
    %v4118 = vpack.c.b16 %v4065, %v4064
    %v4119 = vpack.c.b16 %v4067, %v4066
    %v4120 = vpack.c.b16 %v4069, %v4068
    %v4121 = vpack.c.b16 %v4071, %v4070
    %v4122 = vpack.c.b16 %v4073, %v4072
    %v4123 = vpack.c.b16 %v4075, %v4074
    %v4124 = vpack.c.b16 %v4077, %v4076
    %v4125 = vpack.c.b16 %v4079, %v4078
    %v4126 = vpack.c.b16 %v4081, %v4080
    %v4127 = vpack.c.b16 %v4083, %v4082
    %v4128 = vpack.c.b16 %v4085, %v4084
    %v4129 = vpack.c.b16 %v4087, %v4086
    %v4130 = vpack.c.b16 %v4089, %v4088
    %v4131 = vpack.c.b16 %v4091, %v4090
    %v4132 = vpack.c.b16 %v4093, %v4092
    %v4133 = vpack.c.b16 %v4095, %v4094
    %v4134 = vpack.c.b16 %v4097, %v4096
    %v4135 = vpack.c.b16 %v4099, %v4098
    %v4136 = vpack.c.b16 %v4101, %v4100
    %v4137 = vpack.c.b16 %v4103, %v4102
    %v4138 = vpack.c.b16 %v4105, %v4104
    %v4139 = vpack.c.b16 %v4107, %v4106
    %4172 = vmatprep.subr.bf16.mxu0 0
    %4173 = vmatpush1.bf16.msra.mxu0 %v4108
    %4174 = vmatprep.subr.bf16.mxu0 0
    %4175 = vmatpush1.bf16.msra.mxu0 %v4109
    %4176 = vmatprep.subr.bf16.mxu0 0
    %4177 = vmatpush1.bf16.msra.mxu0 %v4110
    %4178 = vmatprep.subr.bf16.mxu0 0
    %4179 = vmatpush1.bf16.msra.mxu0 %v4111
    %4180 = vmatprep.subr.bf16.mxu0 0
    %4181 = vmatpush1.bf16.msra.mxu0 %v4112
    %4182 = vmatprep.subr.bf16.mxu0 0
    %4183 = vmatpush1.bf16.msra.mxu0 %v4113
    %4184 = vmatprep.subr.bf16.mxu0 0
    %4185 = vmatpush1.bf16.msra.mxu0 %v4114
    %4186 = vmatprep.subr.bf16.mxu0 0
    %4187 = vmatpush1.bf16.msra.mxu0 %v4115
    %4188 = vmatprep.subr.bf16.mxu0 0
    %4189 = vmatpush1.bf16.msra.mxu0 %v4116
    %4190 = vmatprep.subr.bf16.mxu0 0
    %4191 = vmatpush1.bf16.msra.mxu0 %v4117
    %4192 = vmatprep.subr.bf16.mxu0 0
    %4193 = vmatpush1.bf16.msra.mxu0 %v4118
    %4194 = vmatprep.subr.bf16.mxu0 0
    %4195 = vmatpush1.bf16.msra.mxu0 %v4119
    %4196 = vmatprep.subr.bf16.mxu0 0
    %4197 = vmatpush1.bf16.msra.mxu0 %v4120
    %4198 = vmatprep.subr.bf16.mxu0 0
    %4199 = vmatpush1.bf16.msra.mxu0 %v4121
    %4200 = vmatprep.subr.bf16.mxu0 0
    %4201 = vmatpush1.bf16.msra.mxu0 %v4122
    %4202 = vmatprep.subr.bf16.mxu0 0
    %4203 = vmatpush1.bf16.msra.mxu0 %v4123
    %4204 = vmatprep.mubr.bf16.mxu0 %v3894
    %4205 = vmatmul.mubr.bf16.gmra.mrb[0].mxu0 %v3893
    %v4206 = vpop.f32.mrb[0].mxu0
    %v4207 = vadd.f32 %v3978, %v4206
    %v4208 = vpop.f32.mrb[0].mxu0
    %v4209 = vpop.f32.mrb[0].mxu0
    %v4210 = vadd.f32 %v3978, %v4209
    %v4211 = vpop.f32.mrb[0].mxu0
    %4212 = vmatprep.mubr.bf16.mxu0 %v3898
    %4213 = vmatmul.mubr.bf16.gmra.mrb[0].mxu0 %v3897
    %v4214 = vpop.f32.mrb[0].mxu0
    %v4215 = vadd.f32 %v3978, %v4214
    %v4216 = vpop.f32.mrb[0].mxu0
    %v4217 = vpop.f32.mrb[0].mxu0
    %v4218 = vadd.f32 %v3978, %v4217
    %v4219 = vpop.f32.mrb[0].mxu0
    %4220 = vmatprep.mubr.bf16.mxu0 %v3902
    %4221 = vmatmul.mubr.bf16.gmra.mrb[0].mxu0 %v3901
    %v4222 = vpop.f32.mrb[0].mxu0
    %v4223 = vadd.f32 %v3978, %v4222
    %v4224 = vpop.f32.mrb[0].mxu0
    %v4225 = vpop.f32.mrb[0].mxu0
    %v4226 = vadd.f32 %v3978, %v4225
    %v4227 = vpop.f32.mrb[0].mxu0
    %4228 = vmatprep.mubr.bf16.mxu0 %v3906
    %4229 = vmatmul.mubr.bf16.gmra.mrb[0].mxu0 %v3905
    %v4230 = vpop.f32.mrb[0].mxu0
    %v4231 = vadd.f32 %v3978, %v4230
    %v4232 = vpop.f32.mrb[0].mxu0
    %v4233 = vpop.f32.mrb[0].mxu0
    %v4234 = vadd.f32 %v3978, %v4233
    %v4235 = vpop.f32.mrb[0].mxu0
    %4236 = vdwg.mxu0
    %4237 = vmatprep.subr.bf16.mxu0 0
    %4238 = vmatpush1.bf16.msra.mxu0 %v4124
    %4239 = vmatprep.subr.bf16.mxu0 0
    %4240 = vmatpush1.bf16.msra.mxu0 %v4125
    %4241 = vmatprep.subr.bf16.mxu0 0
    %4242 = vmatpush1.bf16.msra.mxu0 %v4126
    %4243 = vmatprep.subr.bf16.mxu0 0
    %4244 = vmatpush1.bf16.msra.mxu0 %v4127
    %4245 = vmatprep.subr.bf16.mxu0 0
    %4246 = vmatpush1.bf16.msra.mxu0 %v4128
    %4247 = vmatprep.subr.bf16.mxu0 0
    %4248 = vmatpush1.bf16.msra.mxu0 %v4129
    %4249 = vmatprep.subr.bf16.mxu0 0
    %4250 = vmatpush1.bf16.msra.mxu0 %v4130
    %4251 = vmatprep.subr.bf16.mxu0 0
    %4252 = vmatpush1.bf16.msra.mxu0 %v4131
    %4253 = vmatprep.subr.bf16.mxu0 0
    %4254 = vmatpush1.bf16.msra.mxu0 %v4132
    %4255 = vmatprep.subr.bf16.mxu0 0
    %4256 = vmatpush1.bf16.msra.mxu0 %v4133
    %4257 = vmatprep.subr.bf16.mxu0 0
    %4258 = vmatpush1.bf16.msra.mxu0 %v4134
    %4259 = vmatprep.subr.bf16.mxu0 0
    %4260 = vmatpush1.bf16.msra.mxu0 %v4135
    %4261 = vmatprep.subr.bf16.mxu0 0
    %4262 = vmatpush1.bf16.msra.mxu0 %v4136
    %4263 = vmatprep.subr.bf16.mxu0 0
    %4264 = vmatpush1.bf16.msra.mxu0 %v4137
    %4265 = vmatprep.subr.bf16.mxu0 0
    %4266 = vmatpush1.bf16.msra.mxu0 %v4138
    %4267 = vmatprep.subr.bf16.mxu0 0
    %4268 = vmatpush1.bf16.msra.mxu0 %v4139
    %4269 = vmatprep.mubr.bf16.mxu0 %v3896
    %4270 = vmatmul.mubr.bf16.gmra.mrb[0].mxu0 %v3895
    %v4271 = vpop.f32.mrb[0].mxu0
    %v4272 = vadd.f32 %v4207, %v4271
    %v4273 = vpop.f32.mrb[0].mxu0
    %v4274 = vpop.f32.mrb[0].mxu0
    %v4275 = vadd.f32 %v4210, %v4274
    %v4276 = vpop.f32.mrb[0].mxu0
    %4277 = vmatprep.mubr.bf16.mxu0 %v3900
    %4278 = vmatmul.mubr.bf16.gmra.mrb[0].mxu0 %v3899
    %v4279 = vpop.f32.mrb[0].mxu0
    %v4280 = vadd.f32 %v4215, %v4279
    %v4281 = vpop.f32.mrb[0].mxu0
    %v4282 = vpop.f32.mrb[0].mxu0
    %v4283 = vadd.f32 %v4218, %v4282
    %v4284 = vpop.f32.mrb[0].mxu0
    %4285 = vmatprep.mubr.bf16.mxu0 %v3904
    %4286 = vmatmul.mubr.bf16.gmra.mrb[0].mxu0 %v3903
    %v4287 = vpop.f32.mrb[0].mxu0
    %v4288 = vadd.f32 %v4223, %v4287
    %v4289 = vpop.f32.mrb[0].mxu0
    %v4290 = vpop.f32.mrb[0].mxu0
    %v4291 = vadd.f32 %v4226, %v4290
    %v4292 = vpop.f32.mrb[0].mxu0
    %4293 = vmatprep.mubr.bf16.mxu0 %v3908
    %4294 = vmatmul.mubr.bf16.gmra.mrb[0].mxu0 %v3907
    %v4295 = vpop.f32.mrb[0].mxu0
    %v4296 = vadd.f32 %v4231, %v4295
    %v4297 = vpop.f32.mrb[0].mxu0
    %v4298 = vpop.f32.mrb[0].mxu0
    %v4299 = vadd.f32 %v4234, %v4298
    %v4300 = vpop.f32.mrb[0].mxu0
    %4301 = vdwg.mxu0
    %v4302 = vpack.c.bf16 %v4275, %v4272
    %v4303 = vpack.c.bf16 %v4283, %v4280
    %v4304 = vpack.c.bf16 %v4291, %v4288
    %v4305 = vpack.c.bf16 %v4299, %v4296
    %v4310 = vunpack.c.l.b16 %v4302
    %v4311 = vunpack.c.h.b16 %v4302
    %v4312 = vunpack.c.l.b16 %v4303
    %v4313 = vunpack.c.h.b16 %v4303
    %v4314 = vunpack.c.l.b16 %v4304
    %v4315 = vunpack.c.h.b16 %v4304
    %v4316 = vunpack.c.l.b16 %v4305
    %v4317 = vunpack.c.h.b16 %v4305
    %v4318 = vpack.c.b16 %v4310, %v4310
    %v4319 = vpack.c.b16 %v4311, %v4311
    %v4320 = vpack.c.b16 %v4312, %v4312
    %v4321 = vpack.c.b16 %v4313, %v4313
    %v4322 = vpack.c.b16 %v4314, %v4314
    %v4323 = vpack.c.b16 %v4315, %v4315
    %v4324 = vpack.c.b16 %v4316, %v4316
    %v4325 = vpack.c.b16 %v4317, %v4317
    %4334 = vst [vmem:[#allocation13] sm:$0xf] %v4318
    %4335 = vst [vmem:[#allocation13 + $0x4] sm:$0xf] %v4319
    %4336 = vst [vmem:[#allocation13 + $0x8] sm:$0xf] %v4320
    %4337 = vst [vmem:[#allocation13 + $0xc] sm:$0xf] %v4321
    %4338 = vst [vmem:[#allocation13 + $0x10] sm:$0xf] %v4322
    %4339 = vst [vmem:[#allocation13 + $0x14] sm:$0xf] %v4323
    %4340 = vst [vmem:[#allocation13 + $0x18] sm:$0xf] %v4324
    %4341 = vst [vmem:[#allocation13 + $0x1c] sm:$0xf] %v4325
    // Predicated region
    $region70: #{tpu_custom_call.1} parent=1 // pred_check
      _
    $region71: #{tpu_custom_call.1} parent=1 // pred_check_branch
      %4343 = sbr.rel (0) target = $region73
    $region72: #{tpu_custom_call.1} parent=1 // pred_region
      %s4345 = ssub.s32 512, 512
      %4346 = vsyncadd [#allocation4], %s4345
      %s4347 = sshll.u32 [#allocation13], 4
      %s4348 = int_to_ptr.vmem [resolvable:$true] %s4347
      %4353 = dma.vmem_to_hbm [thread:$0]  %s4348, 512, %s11, [#allocation4], 64, 64, 4
    $region73: #{tpu_custom_call.1} parent=1 // pred_fallthru
      _
    // Predicated region
    $region74: #{tpu_custom_call.1} parent=1 // pred_check
      _
    $region75: #{tpu_custom_call.1} parent=1 // pred_check_branch
      %4355 = sbr.rel (0) target = $region77
    $region76: #{tpu_custom_call.1} parent=1 // pred_region
      %4356 = dma.done [#allocation4], 512
    $region77: #{tpu_custom_call.1} parent=1 // pred_fallthru
      _
    %4357 = vsyncpa [#allocation3], 1
    %4358 = vsyncpa [#allocation6], 1
    %4359 = vsyncpa [#allocation9], 1
    %4360 = vsyncpa [#allocation12], 1
    %4361 = vsyncpa [#allocation4], 1

</llo_original>
